<compile_context>
chip_gen: v5e
topology: v5e:2x2
jax: 0.10.0
libtpu: 0.0.40
codegen_flags: <defaults>
</compile_context>

<pallas_src>
import functools

import jax
import jax.numpy as jnp
from jax import lax
from jax.experimental import pallas as pl
from jax.experimental.pallas import tpu as pltpu


def _basic_block_kernel(x_ref, w1_ref, s1_ref, b1_ref, w2_ref, s2_ref, b2_ref,
                        o_ref, xpad_ref, mid_ref, *, H, W, C):
    # x_ref   : (1, H, W, C)       one batch element (NHWC), f32
    # w1/w2   : (3, 3, C, C)       conv weights as (kh, kw, cin, cout), bf16
    # s*/b*   : (1, C)             folded BatchNorm scale / bias, f32
    # o_ref   : (1, H, W, C)       output, f32
    # xpad_ref: (H+2, W+2, C)      VMEM scratch: zero-padded input
    # mid_ref : (H+2, W+2, C)      VMEM scratch: zero-padded conv1->bn1->relu
    f32 = jnp.float32
    bf16 = jnp.bfloat16

    # ---- (re)zero only the 1-pixel border of both padded scratches.  The
    # interiors are fully overwritten below, and doing this every step keeps
    # the kernel correct when the batch grid axis is sharded across cores. ----
    zrow = jnp.zeros((1, W + 2, C), f32)
    zcol = jnp.zeros((H + 2, 1, C), f32)
    for buf in (xpad_ref, mid_ref):
        buf[0:1, :, :] = zrow
        buf[H + 1:H + 2, :, :] = zrow
        buf[:, 0:1, :] = zcol
        buf[:, W + 1:W + 2, :] = zcol

    # ---- stage the input into the padded scratch (in-kernel zero padding) ----
    xpad_ref[1:H + 1, 1:W + 1, :] = x_ref[0]

    def conv3x3(src_ref, w_ref):
        # 9 whole-image matmuls: (H*W, C) @ (C, C), bf16 in / f32 accumulate.
        acc = jnp.zeros((H * W, C), f32)
        for kh in range(3):
            for kw in range(3):
                patch = src_ref[kh:kh + H, kw:kw + W, :].reshape(H * W, C)
                acc = acc + jnp.dot(patch.astype(bf16), w_ref[kh, kw],
                                    preferred_element_type=f32)
        return acc

    # ---- conv1 -> bn1 -> relu ----
    h1 = conv3x3(xpad_ref, w1_ref)
    h1 = jnp.maximum(h1 * s1_ref[...] + b1_ref[...], 0.0)
    mid_ref[1:H + 1, 1:W + 1, :] = h1.reshape(H, W, C)

    # ---- conv2 -> bn2 -> +residual -> relu ----
    h2 = conv3x3(mid_ref, w2_ref)
    h2 = h2 * s2_ref[...] + b2_ref[...]
    h2 = h2 + x_ref[0].reshape(H * W, C)
    o_ref[0, :, :, :] = jnp.maximum(h2, 0.0).reshape(H, W, C)


def basic_block_forward(x_nchw, params, eps=1e-5):
    """Fused BasicBlock forward. x_nchw: (N, C, H, W) float32, stride=1."""
    # TODO(synk): stride>1 / downsample branch of BasicBlock is not implemented
    #             (default constructor args: stride=1, downsample=None).
    # TODO(synk): BatchNorm is applied in inference mode (running stats folded
    #             into scale/bias); training-mode batch statistics are not
    #             computed in-kernel.
    # TODO(synk): for real ResNet shapes, re-derive block sizes / set
    #             vmem_limit_bytes against v7x's 64 MiB VMEM.
    x = jnp.transpose(x_nchw, (0, 2, 3, 1)).astype(jnp.float32)    # NHWC
    N, H, W, C = x.shape

    # PyTorch conv weight (cout, cin, kh, kw) -> (kh, kw, cin, cout), bf16 for MXU.
    w1 = jnp.transpose(params["conv1_w"], (2, 3, 1, 0)).astype(jnp.bfloat16)
    w2 = jnp.transpose(params["conv2_w"], (2, 3, 1, 0)).astype(jnp.bfloat16)

    s1 = (params["bn1_gamma"] / jnp.sqrt(params["bn1_var"] + eps)).reshape(1, C)
    b1 = (params["bn1_beta"] - params["bn1_mean"] * s1[0]).reshape(1, C)
    s2 = (params["bn2_gamma"] / jnp.sqrt(params["bn2_var"] + eps)).reshape(1, C)
    b2 = (params["bn2_beta"] - params["bn2_mean"] * s2[0]).reshape(1, C)

    kernel = functools.partial(_basic_block_kernel, H=H, W=W, C=C)

    flops = 2 * (2 * N * H * W * C * C * 9)              # 2 convs, 2 flops/MAC
    bytes_accessed = (2 * N * H * W * C * 4              # x in + out (f32)
                      + 2 * 9 * C * C * 2                # bf16 weights
                      + 4 * C * 4)                       # folded BN params

    out_nhwc = pl.pallas_call(
        kernel,
        out_shape=jax.ShapeDtypeStruct((N, H, W, C), jnp.float32),
        grid_spec=pltpu.PrefetchScalarGridSpec(
            num_scalar_prefetch=0,
            grid=(N,),
            in_specs=[
                pl.BlockSpec((1, H, W, C), lambda n: (n, 0, 0, 0)),
                pl.BlockSpec((3, 3, C, C), lambda n: (0, 0, 0, 0)),
                pl.BlockSpec((1, C), lambda n: (0, 0)),
                pl.BlockSpec((1, C), lambda n: (0, 0)),
                pl.BlockSpec((3, 3, C, C), lambda n: (0, 0, 0, 0)),
                pl.BlockSpec((1, C), lambda n: (0, 0)),
                pl.BlockSpec((1, C), lambda n: (0, 0)),
            ],
            out_specs=pl.BlockSpec((1, H, W, C), lambda n: (n, 0, 0, 0)),
            scratch_shapes=[pltpu.VMEM((H + 2, W + 2, C), jnp.float32),
                            pltpu.VMEM((H + 2, W + 2, C), jnp.float32)],
        ),
        compiler_params=pltpu.CompilerParams(
            dimension_semantics=("parallel",)),
        cost_estimate=pl.CostEstimate(flops=flops, transcendentals=0,
                                      bytes_accessed=bytes_accessed),
    )(x, w1, s1, b1, w2, s2, b2)

    return jnp.transpose(out_nhwc, (0, 3, 1, 2))                   # back to NCHW


def _reference_forward(x_nchw, params, eps=1e-5):
    """Pure-JAX f32 reference (inference-mode BN), NCHW throughout."""
    def bn(o, g, b, m, v):
        g = g[None, :, None, None]; b = b[None, :, None, None]
        m = m[None, :, None, None]; v = v[None, :, None, None]
        return (o - m) / jnp.sqrt(v + eps) * g + b

    dn = ("NCHW", "OIHW", "NCHW")
    out = lax.conv_general_dilated(x_nchw, params["conv1_w"], (1, 1), "SAME",
                                   dimension_numbers=dn)
    out = jnp.maximum(bn(out, params["bn1_gamma"], params["bn1_beta"],
                         params["bn1_mean"], params["bn1_var"]), 0.0)
    out = lax.conv_general_dilated(out, params["conv2_w"], (1, 1), "SAME",
                                   dimension_numbers=dn)
    out = bn(out, params["bn2_gamma"], params["bn2_beta"],
             params["bn2_mean"], params["bn2_var"])
    out = out + x_nchw
    return jnp.maximum(out, 0.0)


if __name__ == "__main__":
    key = jax.random.PRNGKey(0)
    N, C, H, W = 2, 8, 16, 16          # in_channels == hid_channels (identity shortcut)
    ks = jax.random.split(key, 11)

    params = {
        "conv1_w": 0.1 * jax.random.normal(ks[0], (C, C, 3, 3), jnp.float32),
        "conv2_w": 0.1 * jax.random.normal(ks[1], (C, C, 3, 3), jnp.float32),
        "bn1_gamma": 1.0 + 0.1 * jax.random.normal(ks[2], (C,), jnp.float32),
        "bn1_beta":        0.1 * jax.random.normal(ks[3], (C,), jnp.float32),
        "bn1_mean":        0.1 * jax.random.normal(ks[4], (C,), jnp.float32),
        "bn1_var": jax.random.uniform(ks[5], (C,), jnp.float32, 0.5, 1.5),
        "bn2_gamma": 1.0 + 0.1 * jax.random.normal(ks[6], (C,), jnp.float32),
        "bn2_beta":        0.1 * jax.random.normal(ks[7], (C,), jnp.float32),
        "bn2_mean":        0.1 * jax.random.normal(ks[8], (C,), jnp.float32),
        "bn2_var": jax.random.uniform(ks[9], (C,), jnp.float32, 0.5, 1.5),
    }
    x = jax.random.normal(ks[10], (N, C, H, W), jnp.float32)

    out = basic_block_forward(x, params)
    out = jax.block_until_ready(out)

    ref = jax.block_until_ready(_reference_forward(x, params))
    assert out.shape == (N, C, H, W)
    # bf16 MXU inputs -> tolerance loosened vs. the pure-f32 reference.
    assert jnp.allclose(out, ref, rtol=5e-2, atol=5e-2), (
        f"max abs err {jnp.max(jnp.abs(out - ref))}")

    print("KERNEL_OK")
</pallas_src>

<mosaic_0001>
module attributes {stable_mosaic.version = 11 : i64} {
  func.func @_basic_block_kernel(%arg0: i32, %arg1: memref<1x16x16x8xf32, #tpu.memory_space<vmem>>, %arg2: memref<3x3x8x8xbf16, #tpu.memory_space<vmem>>, %arg3: memref<1x8xf32, #tpu.memory_space<vmem>>, %arg4: memref<1x8xf32, #tpu.memory_space<vmem>>, %arg5: memref<3x3x8x8xbf16, #tpu.memory_space<vmem>>, %arg6: memref<1x8xf32, #tpu.memory_space<vmem>>, %arg7: memref<1x8xf32, #tpu.memory_space<vmem>>, %arg8: memref<1x16x16x8xf32, #tpu.memory_space<vmem>>, %arg9: memref<18x18x8xf32, #tpu.memory_space<vmem>>, %arg10: memref<18x18x8xf32, #tpu.memory_space<vmem>>) attributes {dimension_semantics = [#tpu.dimension_semantics<parallel>], iteration_bounds = array<i64: 2>, scalar_prefetch = 0 : i64, scratch_operands = 2 : i64, tpu.core_type = #tpu.core_type<tc>, window_params = [{transform_indices = @transform_0, window_bounds = array<i64: 1, 16, 16, 8>}, {pipeline_mode = #tpu.pipeline_mode<synchronous>, transform_indices = @transform_1, window_bounds = array<i64: 3, 3, 8, 8>}, {pipeline_mode = #tpu.pipeline_mode<synchronous>, transform_indices = @transform_2, window_bounds = array<i64: 1, 8>}, {pipeline_mode = #tpu.pipeline_mode<synchronous>, transform_indices = @transform_3, window_bounds = array<i64: 1, 8>}, {pipeline_mode = #tpu.pipeline_mode<synchronous>, transform_indices = @transform_4, window_bounds = array<i64: 3, 3, 8, 8>}, {pipeline_mode = #tpu.pipeline_mode<synchronous>, transform_indices = @transform_5, window_bounds = array<i64: 1, 8>}, {pipeline_mode = #tpu.pipeline_mode<synchronous>, transform_indices = @transform_6, window_bounds = array<i64: 1, 8>}, {transform_indices = @transform_7, window_bounds = array<i64: 1, 16, 16, 8>}]} {
    %cst = arith.constant 0.000000e+00 : f32
    %0 = vector.broadcast %cst : f32 to vector<1x18x8xf32>
    %cst_0 = arith.constant 0.000000e+00 : f32
    %1 = vector.broadcast %cst_0 : f32 to vector<18x1x8xf32>
    %c0 = arith.constant 0 : index
    %c0_1 = arith.constant 0 : index
    %c0_2 = arith.constant 0 : index
    %2 = vector.load %arg9[%c0, %c0_1, %c0_2] : memref<18x18x8xf32, #tpu.memory_space<vmem>>, vector<1x18x8xf32>
    tpu.vector_store %arg9[%c0, %c0_1, %c0_2], %0 {strides = array<i32>} : memref<18x18x8xf32, #tpu.memory_space<vmem>>, vector<1x18x8xf32>,
    %c17 = arith.constant 17 : index
    %c0_3 = arith.constant 0 : index
    %c0_4 = arith.constant 0 : index
    %3 = vector.load %arg9[%c17, %c0_3, %c0_4] : memref<18x18x8xf32, #tpu.memory_space<vmem>>, vector<1x18x8xf32>
    tpu.vector_store %arg9[%c17, %c0_3, %c0_4], %0 {strides = array<i32>} : memref<18x18x8xf32, #tpu.memory_space<vmem>>, vector<1x18x8xf32>,
    %c0_5 = arith.constant 0 : index
    %c0_6 = arith.constant 0 : index
    %c0_7 = arith.constant 0 : index
    %4 = vector.load %arg9[%c0_5, %c0_6, %c0_7] : memref<18x18x8xf32, #tpu.memory_space<vmem>>, vector<18x1x8xf32>
    tpu.vector_store %arg9[%c0_5, %c0_6, %c0_7], %1 {strides = array<i32>} : memref<18x18x8xf32, #tpu.memory_space<vmem>>, vector<18x1x8xf32>,
    %c0_8 = arith.constant 0 : index
    %c17_9 = arith.constant 17 : index
    %c0_10 = arith.constant 0 : index
    %5 = vector.load %arg9[%c0_8, %c17_9, %c0_10] : memref<18x18x8xf32, #tpu.memory_space<vmem>>, vector<18x1x8xf32>
    tpu.vector_store %arg9[%c0_8, %c17_9, %c0_10], %1 {strides = array<i32>} : memref<18x18x8xf32, #tpu.memory_space<vmem>>, vector<18x1x8xf32>,
    %c0_11 = arith.constant 0 : index
    %c0_12 = arith.constant 0 : index
    %c0_13 = arith.constant 0 : index
    %6 = vector.load %arg10[%c0_11, %c0_12, %c0_13] : memref<18x18x8xf32, #tpu.memory_space<vmem>>, vector<1x18x8xf32>
    tpu.vector_store %arg10[%c0_11, %c0_12, %c0_13], %0 {strides = array<i32>} : memref<18x18x8xf32, #tpu.memory_space<vmem>>, vector<1x18x8xf32>,
    %c17_14 = arith.constant 17 : index
    %c0_15 = arith.constant 0 : index
    %c0_16 = arith.constant 0 : index
    %7 = vector.load %arg10[%c17_14, %c0_15, %c0_16] : memref<18x18x8xf32, #tpu.memory_space<vmem>>, vector<1x18x8xf32>
    tpu.vector_store %arg10[%c17_14, %c0_15, %c0_16], %0 {strides = array<i32>} : memref<18x18x8xf32, #tpu.memory_space<vmem>>, vector<1x18x8xf32>,
    %c0_17 = arith.constant 0 : index
    %c0_18 = arith.constant 0 : index
    %c0_19 = arith.constant 0 : index
    %8 = vector.load %arg10[%c0_17, %c0_18, %c0_19] : memref<18x18x8xf32, #tpu.memory_space<vmem>>, vector<18x1x8xf32>
    tpu.vector_store %arg10[%c0_17, %c0_18, %c0_19], %1 {strides = array<i32>} : memref<18x18x8xf32, #tpu.memory_space<vmem>>, vector<18x1x8xf32>,
    %c0_20 = arith.constant 0 : index
    %c17_21 = arith.constant 17 : index
    %c0_22 = arith.constant 0 : index
    %9 = vector.load %arg10[%c0_20, %c17_21, %c0_22] : memref<18x18x8xf32, #tpu.memory_space<vmem>>, vector<18x1x8xf32>
    tpu.vector_store %arg10[%c0_20, %c17_21, %c0_22], %1 {strides = array<i32>} : memref<18x18x8xf32, #tpu.memory_space<vmem>>, vector<18x1x8xf32>,
    %c0_23 = arith.constant 0 : index
    %c0_24 = arith.constant 0 : index
    %c0_25 = arith.constant 0 : index
    %c0_26 = arith.constant 0 : index
    %10 = vector.load %arg1[%c0_23, %c0_24, %c0_25, %c0_26] : memref<1x16x16x8xf32, #tpu.memory_space<vmem>>, vector<1x16x16x8xf32>
    %11 = vector.shape_cast %10 : vector<1x16x16x8xf32> to vector<16x16x8xf32>
    %c1 = arith.constant 1 : index
    %c1_27 = arith.constant 1 : index
    %c0_28 = arith.constant 0 : index
    %12 = vector.load %arg9[%c1, %c1_27, %c0_28] : memref<18x18x8xf32, #tpu.memory_space<vmem>>, vector<16x16x8xf32>
    tpu.vector_store %arg9[%c1, %c1_27, %c0_28], %11 {strides = array<i32>} : memref<18x18x8xf32, #tpu.memory_space<vmem>>, vector<16x16x8xf32>,
    %cst_29 = arith.constant 0.000000e+00 : f32
    %13 = vector.broadcast %cst_29 : f32 to vector<256x8xf32>
    %c0_30 = arith.constant 0 : index
    %c0_31 = arith.constant 0 : index
    %c0_32 = arith.constant 0 : index
    %14 = vector.load %arg9[%c0_30, %c0_31, %c0_32] : memref<18x18x8xf32, #tpu.memory_space<vmem>>, vector<16x16x8xf32>
    %15 = vector.shape_cast %14 : vector<16x16x8xf32> to vector<256x8xf32>
    %16 = arith.truncf %15 : vector<256x8xf32> to vector<256x8xbf16>
    %c0_33 = arith.constant 0 : index
    %c0_34 = arith.constant 0 : index
    %c0_35 = arith.constant 0 : index
    %c0_36 = arith.constant 0 : index
    %17 = vector.load %arg2[%c0_33, %c0_34, %c0_35, %c0_36] : memref<3x3x8x8xbf16, #tpu.memory_space<vmem>>, vector<1x1x8x8xbf16>
    %18 = vector.shape_cast %17 : vector<1x1x8x8xbf16> to vector<8x8xbf16>
    %cst_37 = arith.constant dense<0.000000e+00> : vector<256x8xf32>
    %19 = tpu.matmul %16, %18, %cst_37 {dimension_numbers = #tpu.dot_dimension_numbers<[1], [0], [0], [1], [0, 0, 1, 1], [], []>} : vector<256x8xbf16>, vector<8x8xbf16>, vector<256x8xf32> -> vector<256x8xf32>
    %20 = arith.addf %13, %19 : vector<256x8xf32>
    %c0_38 = arith.constant 0 : index
    %c1_39 = arith.constant 1 : index
    %c0_40 = arith.constant 0 : index
    %21 = vector.load %arg9[%c0_38, %c1_39, %c0_40] : memref<18x18x8xf32, #tpu.memory_space<vmem>>, vector<16x16x8xf32>
    %22 = vector.shape_cast %21 : vector<16x16x8xf32> to vector<256x8xf32>
    %23 = arith.truncf %22 : vector<256x8xf32> to vector<256x8xbf16>
    %c0_41 = arith.constant 0 : index
    %c1_42 = arith.constant 1 : index
    %c0_43 = arith.constant 0 : index
    %c0_44 = arith.constant 0 : index
    %24 = vector.load %arg2[%c0_41, %c1_42, %c0_43, %c0_44] : memref<3x3x8x8xbf16, #tpu.memory_space<vmem>>, vector<1x1x8x8xbf16>
    %25 = vector.shape_cast %24 : vector<1x1x8x8xbf16> to vector<8x8xbf16>
    %cst_45 = arith.constant dense<0.000000e+00> : vector<256x8xf32>
    %26 = tpu.matmul %23, %25, %cst_45 {dimension_numbers = #tpu.dot_dimension_numbers<[1], [0], [0], [1], [0, 0, 1, 1], [], []>} : vector<256x8xbf16>, vector<8x8xbf16>, vector<256x8xf32> -> vector<256x8xf32>
    %27 = arith.addf %20, %26 : vector<256x8xf32>
    %c0_46 = arith.constant 0 : index
    %c2 = arith.constant 2 : index
    %c0_47 = arith.constant 0 : index
    %28 = vector.load %arg9[%c0_46, %c2, %c0_47] : memref<18x18x8xf32, #tpu.memory_space<vmem>>, vector<16x16x8xf32>
    %29 = vector.shape_cast %28 : vector<16x16x8xf32> to vector<256x8xf32>
    %30 = arith.truncf %29 : vector<256x8xf32> to vector<256x8xbf16>
    %c0_48 = arith.constant 0 : index
    %c2_49 = arith.constant 2 : index
    %c0_50 = arith.constant 0 : index
    %c0_51 = arith.constant 0 : index
    %31 = vector.load %arg2[%c0_48, %c2_49, %c0_50, %c0_51] : memref<3x3x8x8xbf16, #tpu.memory_space<vmem>>, vector<1x1x8x8xbf16>
    %32 = vector.shape_cast %31 : vector<1x1x8x8xbf16> to vector<8x8xbf16>
    %cst_52 = arith.constant dense<0.000000e+00> : vector<256x8xf32>
    %33 = tpu.matmul %30, %32, %cst_52 {dimension_numbers = #tpu.dot_dimension_numbers<[1], [0], [0], [1], [0, 0, 1, 1], [], []>} : vector<256x8xbf16>, vector<8x8xbf16>, vector<256x8xf32> -> vector<256x8xf32>
    %34 = arith.addf %27, %33 : vector<256x8xf32>
    %c1_53 = arith.constant 1 : index
    %c0_54 = arith.constant 0 : index
    %c0_55 = arith.constant 0 : index
    %35 = vector.load %arg9[%c1_53, %c0_54, %c0_55] : memref<18x18x8xf32, #tpu.memory_space<vmem>>, vector<16x16x8xf32>
    %36 = vector.shape_cast %35 : vector<16x16x8xf32> to vector<256x8xf32>
    %37 = arith.truncf %36 : vector<256x8xf32> to vector<256x8xbf16>
    %c1_56 = arith.constant 1 : index
    %c0_57 = arith.constant 0 : index
    %c0_58 = arith.constant 0 : index
    %c0_59 = arith.constant 0 : index
    %38 = vector.load %arg2[%c1_56, %c0_57, %c0_58, %c0_59] : memref<3x3x8x8xbf16, #tpu.memory_space<vmem>>, vector<1x1x8x8xbf16>
    %39 = vector.shape_cast %38 : vector<1x1x8x8xbf16> to vector<8x8xbf16>
    %cst_60 = arith.constant dense<0.000000e+00> : vector<256x8xf32>
    %40 = tpu.matmul %37, %39, %cst_60 {dimension_numbers = #tpu.dot_dimension_numbers<[1], [0], [0], [1], [0, 0, 1, 1], [], []>} : vector<256x8xbf16>, vector<8x8xbf16>, vector<256x8xf32> -> vector<256x8xf32>
    %41 = arith.addf %34, %40 : vector<256x8xf32>
    %c1_61 = arith.constant 1 : index
    %c1_62 = arith.constant 1 : index
    %c0_63 = arith.constant 0 : index
    %42 = vector.load %arg9[%c1_61, %c1_62, %c0_63] : memref<18x18x8xf32, #tpu.memory_space<vmem>>, vector<16x16x8xf32>
    %43 = vector.shape_cast %42 : vector<16x16x8xf32> to vector<256x8xf32>
    %44 = arith.truncf %43 : vector<256x8xf32> to vector<256x8xbf16>
    %c1_64 = arith.constant 1 : index
    %c1_65 = arith.constant 1 : index
    %c0_66 = arith.constant 0 : index
    %c0_67 = arith.constant 0 : index
    %45 = vector.load %arg2[%c1_64, %c1_65, %c0_66, %c0_67] : memref<3x3x8x8xbf16, #tpu.memory_space<vmem>>, vector<1x1x8x8xbf16>
    %46 = vector.shape_cast %45 : vector<1x1x8x8xbf16> to vector<8x8xbf16>
    %cst_68 = arith.constant dense<0.000000e+00> : vector<256x8xf32>
    %47 = tpu.matmul %44, %46, %cst_68 {dimension_numbers = #tpu.dot_dimension_numbers<[1], [0], [0], [1], [0, 0, 1, 1], [], []>} : vector<256x8xbf16>, vector<8x8xbf16>, vector<256x8xf32> -> vector<256x8xf32>
    %48 = arith.addf %41, %47 : vector<256x8xf32>
    %c1_69 = arith.constant 1 : index
    %c2_70 = arith.constant 2 : index
    %c0_71 = arith.constant 0 : index
    %49 = vector.load %arg9[%c1_69, %c2_70, %c0_71] : memref<18x18x8xf32, #tpu.memory_space<vmem>>, vector<16x16x8xf32>
    %50 = vector.shape_cast %49 : vector<16x16x8xf32> to vector<256x8xf32>
    %51 = arith.truncf %50 : vector<256x8xf32> to vector<256x8xbf16>
    %c1_72 = arith.constant 1 : index
    %c2_73 = arith.constant 2 : index
    %c0_74 = arith.constant 0 : index
    %c0_75 = arith.constant 0 : index
    %52 = vector.load %arg2[%c1_72, %c2_73, %c0_74, %c0_75] : memref<3x3x8x8xbf16, #tpu.memory_space<vmem>>, vector<1x1x8x8xbf16>
    %53 = vector.shape_cast %52 : vector<1x1x8x8xbf16> to vector<8x8xbf16>
    %cst_76 = arith.constant dense<0.000000e+00> : vector<256x8xf32>
    %54 = tpu.matmul %51, %53, %cst_76 {dimension_numbers = #tpu.dot_dimension_numbers<[1], [0], [0], [1], [0, 0, 1, 1], [], []>} : vector<256x8xbf16>, vector<8x8xbf16>, vector<256x8xf32> -> vector<256x8xf32>
    %55 = arith.addf %48, %54 : vector<256x8xf32>
    %c2_77 = arith.constant 2 : index
    %c0_78 = arith.constant 0 : index
    %c0_79 = arith.constant 0 : index
    %56 = vector.load %arg9[%c2_77, %c0_78, %c0_79] : memref<18x18x8xf32, #tpu.memory_space<vmem>>, vector<16x16x8xf32>
    %57 = vector.shape_cast %56 : vector<16x16x8xf32> to vector<256x8xf32>
    %58 = arith.truncf %57 : vector<256x8xf32> to vector<256x8xbf16>
    %c2_80 = arith.constant 2 : index
    %c0_81 = arith.constant 0 : index
    %c0_82 = arith.constant 0 : index
    %c0_83 = arith.constant 0 : index
    %59 = vector.load %arg2[%c2_80, %c0_81, %c0_82, %c0_83] : memref<3x3x8x8xbf16, #tpu.memory_space<vmem>>, vector<1x1x8x8xbf16>
    %60 = vector.shape_cast %59 : vector<1x1x8x8xbf16> to vector<8x8xbf16>
    %cst_84 = arith.constant dense<0.000000e+00> : vector<256x8xf32>
    %61 = tpu.matmul %58, %60, %cst_84 {dimension_numbers = #tpu.dot_dimension_numbers<[1], [0], [0], [1], [0, 0, 1, 1], [], []>} : vector<256x8xbf16>, vector<8x8xbf16>, vector<256x8xf32> -> vector<256x8xf32>
    %62 = arith.addf %55, %61 : vector<256x8xf32>
    %c2_85 = arith.constant 2 : index
    %c1_86 = arith.constant 1 : index
    %c0_87 = arith.constant 0 : index
    %63 = vector.load %arg9[%c2_85, %c1_86, %c0_87] : memref<18x18x8xf32, #tpu.memory_space<vmem>>, vector<16x16x8xf32>
    %64 = vector.shape_cast %63 : vector<16x16x8xf32> to vector<256x8xf32>
    %65 = arith.truncf %64 : vector<256x8xf32> to vector<256x8xbf16>
    %c2_88 = arith.constant 2 : index
    %c1_89 = arith.constant 1 : index
    %c0_90 = arith.constant 0 : index
    %c0_91 = arith.constant 0 : index
    %66 = vector.load %arg2[%c2_88, %c1_89, %c0_90, %c0_91] : memref<3x3x8x8xbf16, #tpu.memory_space<vmem>>, vector<1x1x8x8xbf16>
    %67 = vector.shape_cast %66 : vector<1x1x8x8xbf16> to vector<8x8xbf16>
    %cst_92 = arith.constant dense<0.000000e+00> : vector<256x8xf32>
    %68 = tpu.matmul %65, %67, %cst_92 {dimension_numbers = #tpu.dot_dimension_numbers<[1], [0], [0], [1], [0, 0, 1, 1], [], []>} : vector<256x8xbf16>, vector<8x8xbf16>, vector<256x8xf32> -> vector<256x8xf32>
    %69 = arith.addf %62, %68 : vector<256x8xf32>
    %c2_93 = arith.constant 2 : index
    %c2_94 = arith.constant 2 : index
    %c0_95 = arith.constant 0 : index
    %70 = vector.load %arg9[%c2_93, %c2_94, %c0_95] : memref<18x18x8xf32, #tpu.memory_space<vmem>>, vector<16x16x8xf32>
    %71 = vector.shape_cast %70 : vector<16x16x8xf32> to vector<256x8xf32>
    %72 = arith.truncf %71 : vector<256x8xf32> to vector<256x8xbf16>
    %c2_96 = arith.constant 2 : index
    %c2_97 = arith.constant 2 : index
    %c0_98 = arith.constant 0 : index
    %c0_99 = arith.constant 0 : index
    %73 = vector.load %arg2[%c2_96, %c2_97, %c0_98, %c0_99] : memref<3x3x8x8xbf16, #tpu.memory_space<vmem>>, vector<1x1x8x8xbf16>
    %74 = vector.shape_cast %73 : vector<1x1x8x8xbf16> to vector<8x8xbf16>
    %cst_100 = arith.constant dense<0.000000e+00> : vector<256x8xf32>
    %75 = tpu.matmul %72, %74, %cst_100 {dimension_numbers = #tpu.dot_dimension_numbers<[1], [0], [0], [1], [0, 0, 1, 1], [], []>} : vector<256x8xbf16>, vector<8x8xbf16>, vector<256x8xf32> -> vector<256x8xf32>
    %76 = arith.addf %69, %75 : vector<256x8xf32>
    %c0_101 = arith.constant 0 : index
    %c0_102 = arith.constant 0 : index
    %77 = vector.load %arg3[%c0_101, %c0_102] : memref<1x8xf32, #tpu.memory_space<vmem>>, vector<1x8xf32>
    %78 = vector.broadcast %77 : vector<1x8xf32> to vector<256x8xf32>
    %79 = arith.mulf %76, %78 : vector<256x8xf32>
    %c0_103 = arith.constant 0 : index
    %c0_104 = arith.constant 0 : index
    %80 = vector.load %arg4[%c0_103, %c0_104] : memref<1x8xf32, #tpu.memory_space<vmem>>, vector<1x8xf32>
    %81 = vector.broadcast %80 : vector<1x8xf32> to vector<256x8xf32>
    %82 = arith.addf %79, %81 : vector<256x8xf32>
    %cst_105 = arith.constant 0.000000e+00 : f32
    %83 = vector.broadcast %cst_105 : f32 to vector<256x8xf32>
    %84 = arith.maximumf %82, %83 : vector<256x8xf32>
    %85 = vector.shape_cast %84 : vector<256x8xf32> to vector<16x16x8xf32>
    %c1_106 = arith.constant 1 : index
    %c1_107 = arith.constant 1 : index
    %c0_108 = arith.constant 0 : index
    %86 = vector.load %arg10[%c1_106, %c1_107, %c0_108] : memref<18x18x8xf32, #tpu.memory_space<vmem>>, vector<16x16x8xf32>
    tpu.vector_store %arg10[%c1_106, %c1_107, %c0_108], %85 {strides = array<i32>} : memref<18x18x8xf32, #tpu.memory_space<vmem>>, vector<16x16x8xf32>,
    %cst_109 = arith.constant 0.000000e+00 : f32
    %87 = vector.broadcast %cst_109 : f32 to vector<256x8xf32>
    %c0_110 = arith.constant 0 : index
    %c0_111 = arith.constant 0 : index
    %c0_112 = arith.constant 0 : index
    %88 = vector.load %arg10[%c0_110, %c0_111, %c0_112] : memref<18x18x8xf32, #tpu.memory_space<vmem>>, vector<16x16x8xf32>
    %89 = vector.shape_cast %88 : vector<16x16x8xf32> to vector<256x8xf32>
    %90 = arith.truncf %89 : vector<256x8xf32> to vector<256x8xbf16>
    %c0_113 = arith.constant 0 : index
    %c0_114 = arith.constant 0 : index
    %c0_115 = arith.constant 0 : index
    %c0_116 = arith.constant 0 : index
    %91 = vector.load %arg5[%c0_113, %c0_114, %c0_115, %c0_116] : memref<3x3x8x8xbf16, #tpu.memory_space<vmem>>, vector<1x1x8x8xbf16>
    %92 = vector.shape_cast %91 : vector<1x1x8x8xbf16> to vector<8x8xbf16>
    %cst_117 = arith.constant dense<0.000000e+00> : vector<256x8xf32>
    %93 = tpu.matmul %90, %92, %cst_117 {dimension_numbers = #tpu.dot_dimension_numbers<[1], [0], [0], [1], [0, 0, 1, 1], [], []>} : vector<256x8xbf16>, vector<8x8xbf16>, vector<256x8xf32> -> vector<256x8xf32>
    %94 = arith.addf %87, %93 : vector<256x8xf32>
    %c0_118 = arith.constant 0 : index
    %c1_119 = arith.constant 1 : index
    %c0_120 = arith.constant 0 : index
    %95 = vector.load %arg10[%c0_118, %c1_119, %c0_120] : memref<18x18x8xf32, #tpu.memory_space<vmem>>, vector<16x16x8xf32>
    %96 = vector.shape_cast %95 : vector<16x16x8xf32> to vector<256x8xf32>
    %97 = arith.truncf %96 : vector<256x8xf32> to vector<256x8xbf16>
    %c0_121 = arith.constant 0 : index
    %c1_122 = arith.constant 1 : index
    %c0_123 = arith.constant 0 : index
    %c0_124 = arith.constant 0 : index
    %98 = vector.load %arg5[%c0_121, %c1_122, %c0_123, %c0_124] : memref<3x3x8x8xbf16, #tpu.memory_space<vmem>>, vector<1x1x8x8xbf16>
    %99 = vector.shape_cast %98 : vector<1x1x8x8xbf16> to vector<8x8xbf16>
    %cst_125 = arith.constant dense<0.000000e+00> : vector<256x8xf32>
    %100 = tpu.matmul %97, %99, %cst_125 {dimension_numbers = #tpu.dot_dimension_numbers<[1], [0], [0], [1], [0, 0, 1, 1], [], []>} : vector<256x8xbf16>, vector<8x8xbf16>, vector<256x8xf32> -> vector<256x8xf32>
    %101 = arith.addf %94, %100 : vector<256x8xf32>
    %c0_126 = arith.constant 0 : index
    %c2_127 = arith.constant 2 : index
    %c0_128 = arith.constant 0 : index
    %102 = vector.load %arg10[%c0_126, %c2_127, %c0_128] : memref<18x18x8xf32, #tpu.memory_space<vmem>>, vector<16x16x8xf32>
    %103 = vector.shape_cast %102 : vector<16x16x8xf32> to vector<256x8xf32>
    %104 = arith.truncf %103 : vector<256x8xf32> to vector<256x8xbf16>
    %c0_129 = arith.constant 0 : index
    %c2_130 = arith.constant 2 : index
    %c0_131 = arith.constant 0 : index
    %c0_132 = arith.constant 0 : index
    %105 = vector.load %arg5[%c0_129, %c2_130, %c0_131, %c0_132] : memref<3x3x8x8xbf16, #tpu.memory_space<vmem>>, vector<1x1x8x8xbf16>
    %106 = vector.shape_cast %105 : vector<1x1x8x8xbf16> to vector<8x8xbf16>
    %cst_133 = arith.constant dense<0.000000e+00> : vector<256x8xf32>
    %107 = tpu.matmul %104, %106, %cst_133 {dimension_numbers = #tpu.dot_dimension_numbers<[1], [0], [0], [1], [0, 0, 1, 1], [], []>} : vector<256x8xbf16>, vector<8x8xbf16>, vector<256x8xf32> -> vector<256x8xf32>
    %108 = arith.addf %101, %107 : vector<256x8xf32>
    %c1_134 = arith.constant 1 : index
    %c0_135 = arith.constant 0 : index
    %c0_136 = arith.constant 0 : index
    %109 = vector.load %arg10[%c1_134, %c0_135, %c0_136] : memref<18x18x8xf32, #tpu.memory_space<vmem>>, vector<16x16x8xf32>
    %110 = vector.shape_cast %109 : vector<16x16x8xf32> to vector<256x8xf32>
    %111 = arith.truncf %110 : vector<256x8xf32> to vector<256x8xbf16>
    %c1_137 = arith.constant 1 : index
    %c0_138 = arith.constant 0 : index
    %c0_139 = arith.constant 0 : index
    %c0_140 = arith.constant 0 : index
    %112 = vector.load %arg5[%c1_137, %c0_138, %c0_139, %c0_140] : memref<3x3x8x8xbf16, #tpu.memory_space<vmem>>, vector<1x1x8x8xbf16>
    %113 = vector.shape_cast %112 : vector<1x1x8x8xbf16> to vector<8x8xbf16>
    %cst_141 = arith.constant dense<0.000000e+00> : vector<256x8xf32>
    %114 = tpu.matmul %111, %113, %cst_141 {dimension_numbers = #tpu.dot_dimension_numbers<[1], [0], [0], [1], [0, 0, 1, 1], [], []>} : vector<256x8xbf16>, vector<8x8xbf16>, vector<256x8xf32> -> vector<256x8xf32>
    %115 = arith.addf %108, %114 : vector<256x8xf32>
    %c1_142 = arith.constant 1 : index
    %c1_143 = arith.constant 1 : index
    %c0_144 = arith.constant 0 : index
    %116 = vector.load %arg10[%c1_142, %c1_143, %c0_144] : memref<18x18x8xf32, #tpu.memory_space<vmem>>, vector<16x16x8xf32>
    %117 = vector.shape_cast %116 : vector<16x16x8xf32> to vector<256x8xf32>
    %118 = arith.truncf %117 : vector<256x8xf32> to vector<256x8xbf16>
    %c1_145 = arith.constant 1 : index
    %c1_146 = arith.constant 1 : index
    %c0_147 = arith.constant 0 : index
    %c0_148 = arith.constant 0 : index
    %119 = vector.load %arg5[%c1_145, %c1_146, %c0_147, %c0_148] : memref<3x3x8x8xbf16, #tpu.memory_space<vmem>>, vector<1x1x8x8xbf16>
    %120 = vector.shape_cast %119 : vector<1x1x8x8xbf16> to vector<8x8xbf16>
    %cst_149 = arith.constant dense<0.000000e+00> : vector<256x8xf32>
    %121 = tpu.matmul %118, %120, %cst_149 {dimension_numbers = #tpu.dot_dimension_numbers<[1], [0], [0], [1], [0, 0, 1, 1], [], []>} : vector<256x8xbf16>, vector<8x8xbf16>, vector<256x8xf32> -> vector<256x8xf32>
    %122 = arith.addf %115, %121 : vector<256x8xf32>
    %c1_150 = arith.constant 1 : index
    %c2_151 = arith.constant 2 : index
    %c0_152 = arith.constant 0 : index
    %123 = vector.load %arg10[%c1_150, %c2_151, %c0_152] : memref<18x18x8xf32, #tpu.memory_space<vmem>>, vector<16x16x8xf32>
    %124 = vector.shape_cast %123 : vector<16x16x8xf32> to vector<256x8xf32>
    %125 = arith.truncf %124 : vector<256x8xf32> to vector<256x8xbf16>
    %c1_153 = arith.constant 1 : index
    %c2_154 = arith.constant 2 : index
    %c0_155 = arith.constant 0 : index
    %c0_156 = arith.constant 0 : index
    %126 = vector.load %arg5[%c1_153, %c2_154, %c0_155, %c0_156] : memref<3x3x8x8xbf16, #tpu.memory_space<vmem>>, vector<1x1x8x8xbf16>
    %127 = vector.shape_cast %126 : vector<1x1x8x8xbf16> to vector<8x8xbf16>
    %cst_157 = arith.constant dense<0.000000e+00> : vector<256x8xf32>
    %128 = tpu.matmul %125, %127, %cst_157 {dimension_numbers = #tpu.dot_dimension_numbers<[1], [0], [0], [1], [0, 0, 1, 1], [], []>} : vector<256x8xbf16>, vector<8x8xbf16>, vector<256x8xf32> -> vector<256x8xf32>
    %129 = arith.addf %122, %128 : vector<256x8xf32>
    %c2_158 = arith.constant 2 : index
    %c0_159 = arith.constant 0 : index
    %c0_160 = arith.constant 0 : index
    %130 = vector.load %arg10[%c2_158, %c0_159, %c0_160] : memref<18x18x8xf32, #tpu.memory_space<vmem>>, vector<16x16x8xf32>
    %131 = vector.shape_cast %130 : vector<16x16x8xf32> to vector<256x8xf32>
    %132 = arith.truncf %131 : vector<256x8xf32> to vector<256x8xbf16>
    %c2_161 = arith.constant 2 : index
    %c0_162 = arith.constant 0 : index
    %c0_163 = arith.constant 0 : index
    %c0_164 = arith.constant 0 : index
    %133 = vector.load %arg5[%c2_161, %c0_162, %c0_163, %c0_164] : memref<3x3x8x8xbf16, #tpu.memory_space<vmem>>, vector<1x1x8x8xbf16>
    %134 = vector.shape_cast %133 : vector<1x1x8x8xbf16> to vector<8x8xbf16>
    %cst_165 = arith.constant dense<0.000000e+00> : vector<256x8xf32>
    %135 = tpu.matmul %132, %134, %cst_165 {dimension_numbers = #tpu.dot_dimension_numbers<[1], [0], [0], [1], [0, 0, 1, 1], [], []>} : vector<256x8xbf16>, vector<8x8xbf16>, vector<256x8xf32> -> vector<256x8xf32>
    %136 = arith.addf %129, %135 : vector<256x8xf32>
    %c2_166 = arith.constant 2 : index
    %c1_167 = arith.constant 1 : index
    %c0_168 = arith.constant 0 : index
    %137 = vector.load %arg10[%c2_166, %c1_167, %c0_168] : memref<18x18x8xf32, #tpu.memory_space<vmem>>, vector<16x16x8xf32>
    %138 = vector.shape_cast %137 : vector<16x16x8xf32> to vector<256x8xf32>
    %139 = arith.truncf %138 : vector<256x8xf32> to vector<256x8xbf16>
    %c2_169 = arith.constant 2 : index
    %c1_170 = arith.constant 1 : index
    %c0_171 = arith.constant 0 : index
    %c0_172 = arith.constant 0 : index
    %140 = vector.load %arg5[%c2_169, %c1_170, %c0_171, %c0_172] : memref<3x3x8x8xbf16, #tpu.memory_space<vmem>>, vector<1x1x8x8xbf16>
    %141 = vector.shape_cast %140 : vector<1x1x8x8xbf16> to vector<8x8xbf16>
    %cst_173 = arith.constant dense<0.000000e+00> : vector<256x8xf32>
    %142 = tpu.matmul %139, %141, %cst_173 {dimension_numbers = #tpu.dot_dimension_numbers<[1], [0], [0], [1], [0, 0, 1, 1], [], []>} : vector<256x8xbf16>, vector<8x8xbf16>, vector<256x8xf32> -> vector<256x8xf32>
    %143 = arith.addf %136, %142 : vector<256x8xf32>
    %c2_174 = arith.constant 2 : index
    %c2_175 = arith.constant 2 : index
    %c0_176 = arith.constant 0 : index
    %144 = vector.load %arg10[%c2_174, %c2_175, %c0_176] : memref<18x18x8xf32, #tpu.memory_space<vmem>>, vector<16x16x8xf32>
    %145 = vector.shape_cast %144 : vector<16x16x8xf32> to vector<256x8xf32>
    %146 = arith.truncf %145 : vector<256x8xf32> to vector<256x8xbf16>
    %c2_177 = arith.constant 2 : index
    %c2_178 = arith.constant 2 : index
    %c0_179 = arith.constant 0 : index
    %c0_180 = arith.constant 0 : index
    %147 = vector.load %arg5[%c2_177, %c2_178, %c0_179, %c0_180] : memref<3x3x8x8xbf16, #tpu.memory_space<vmem>>, vector<1x1x8x8xbf16>
    %148 = vector.shape_cast %147 : vector<1x1x8x8xbf16> to vector<8x8xbf16>
    %cst_181 = arith.constant dense<0.000000e+00> : vector<256x8xf32>
    %149 = tpu.matmul %146, %148, %cst_181 {dimension_numbers = #tpu.dot_dimension_numbers<[1], [0], [0], [1], [0, 0, 1, 1], [], []>} : vector<256x8xbf16>, vector<8x8xbf16>, vector<256x8xf32> -> vector<256x8xf32>
    %150 = arith.addf %143, %149 : vector<256x8xf32>
    %c0_182 = arith.constant 0 : index
    %c0_183 = arith.constant 0 : index
    %151 = vector.load %arg6[%c0_182, %c0_183] : memref<1x8xf32, #tpu.memory_space<vmem>>, vector<1x8xf32>
    %152 = vector.broadcast %151 : vector<1x8xf32> to vector<256x8xf32>
    %153 = arith.mulf %150, %152 : vector<256x8xf32>
    %c0_184 = arith.constant 0 : index
    %c0_185 = arith.constant 0 : index
    %154 = vector.load %arg7[%c0_184, %c0_185] : memref<1x8xf32, #tpu.memory_space<vmem>>, vector<1x8xf32>
    %155 = vector.broadcast %154 : vector<1x8xf32> to vector<256x8xf32>
    %156 = arith.addf %153, %155 : vector<256x8xf32>
    %c0_186 = arith.constant 0 : index
    %c0_187 = arith.constant 0 : index
    %c0_188 = arith.constant 0 : index
    %c0_189 = arith.constant 0 : index
    %157 = vector.load %arg1[%c0_186, %c0_187, %c0_188, %c0_189] : memref<1x16x16x8xf32, #tpu.memory_space<vmem>>, vector<1x16x16x8xf32>
    %158 = vector.shape_cast %157 : vector<1x16x16x8xf32> to vector<16x16x8xf32>
    %159 = vector.shape_cast %158 : vector<16x16x8xf32> to vector<256x8xf32>
    %160 = arith.addf %156, %159 : vector<256x8xf32>
    %cst_190 = arith.constant 0.000000e+00 : f32
    %161 = vector.broadcast %cst_190 : f32 to vector<256x8xf32>
    %162 = arith.maximumf %160, %161 : vector<256x8xf32>
    %163 = vector.shape_cast %162 : vector<256x8xf32> to vector<16x16x8xf32>
    %c0_191 = arith.constant 0 : index
    %c0_192 = arith.constant 0 : index
    %c0_193 = arith.constant 0 : index
    %c0_194 = arith.constant 0 : index
    %164 = vector.load %arg8[%c0_191, %c0_192, %c0_193, %c0_194] : memref<1x16x16x8xf32, #tpu.memory_space<vmem>>, vector<1x16x16x8xf32>
    %165 = vector.shape_cast %164 : vector<1x16x16x8xf32> to vector<16x16x8xf32>
    %166 = vector.shape_cast %163 : vector<16x16x8xf32> to vector<1x16x16x8xf32>
    tpu.vector_store %arg8[%c0_191, %c0_192, %c0_193, %c0_194], %166 {strides = array<i32>} : memref<1x16x16x8xf32, #tpu.memory_space<vmem>>, vector<1x16x16x8xf32>,
    return
  }
  func.func @transform_0(%arg0: i32) -> (i32, i32, i32, i32) {
    %c0_i32 = arith.constant 0 : i32
    %c0_i32_0 = arith.constant 0 : i32
    %c0_i32_1 = arith.constant 0 : i32
    %c0_i32_2 = arith.constant 0 : i32
    return %arg0, %c0_i32, %c0_i32_0, %c0_i32_1 : i32, i32, i32, i32
  }
  func.func @transform_1(%arg0: i32) -> (i32, i32, i32, i32) {
    %c0_i32 = arith.constant 0 : i32
    %c0_i32_0 = arith.constant 0 : i32
    %c0_i32_1 = arith.constant 0 : i32
    %c0_i32_2 = arith.constant 0 : i32
    %c0_i32_3 = arith.constant 0 : i32
    return %c0_i32, %c0_i32_0, %c0_i32_1, %c0_i32_2 : i32, i32, i32, i32
  }
  func.func @transform_2(%arg0: i32) -> (i32, i32) {
    %c0_i32 = arith.constant 0 : i32
    %c0_i32_0 = arith.constant 0 : i32
    %c0_i32_1 = arith.constant 0 : i32
    return %c0_i32, %c0_i32_0 : i32, i32
  }
  func.func @transform_3(%arg0: i32) -> (i32, i32) {
    %c0_i32 = arith.constant 0 : i32
    %c0_i32_0 = arith.constant 0 : i32
    %c0_i32_1 = arith.constant 0 : i32
    return %c0_i32, %c0_i32_0 : i32, i32
  }
  func.func @transform_4(%arg0: i32) -> (i32, i32, i32, i32) {
    %c0_i32 = arith.constant 0 : i32
    %c0_i32_0 = arith.constant 0 : i32
    %c0_i32_1 = arith.constant 0 : i32
    %c0_i32_2 = arith.constant 0 : i32
    %c0_i32_3 = arith.constant 0 : i32
    return %c0_i32, %c0_i32_0, %c0_i32_1, %c0_i32_2 : i32, i32, i32, i32
  }
  func.func @transform_5(%arg0: i32) -> (i32, i32) {
    %c0_i32 = arith.constant 0 : i32
    %c0_i32_0 = arith.constant 0 : i32
    %c0_i32_1 = arith.constant 0 : i32
    return %c0_i32, %c0_i32_0 : i32, i32
  }
  func.func @transform_6(%arg0: i32) -> (i32, i32) {
    %c0_i32 = arith.constant 0 : i32
    %c0_i32_0 = arith.constant 0 : i32
    %c0_i32_1 = arith.constant 0 : i32
    return %c0_i32, %c0_i32_0 : i32, i32
  }
  func.func @transform_7(%arg0: i32) -> (i32, i32, i32, i32) {
    %c0_i32 = arith.constant 0 : i32
    %c0_i32_0 = arith.constant 0 : i32
    %c0_i32_1 = arith.constant 0 : i32
    %c0_i32_2 = arith.constant 0 : i32
    return %arg0, %c0_i32, %c0_i32_0, %c0_i32_1 : i32, i32, i32, i32
  }
}

</mosaic_0001>

<llo_original>
// kernel: tpu_custom_call.1
$region0: #{tpu_custom_call.1}
  #allocation0 [shape = 'u32[]', space=smem, size = 0x4, offset = 0x4, fixed_abs, tag = 'smem constant byte address 0x4 - core index']
  #allocation1 [shape = 'u32[72,128]{1,0:T(1,128)}', space=vmem, size = 0x9000, scoped, tag = 'internal scratch']
  #allocation2 [shape = 'f32[18,18,8]{2,1,0:T(8,128)}', space=vmem, size = 0x36000, scoped, tag = 'scratch operand']
  #allocation3 [shape = 'f32[18,18,8]{2,1,0:T(8,128)}', space=vmem, size = 0x36000, scoped, tag = 'scratch operand']
  %s0 = inlined_call_operand.vmem [shape: f32[2,16,16,8], index: 0, kind: input, shape index: {}]
  %s1 = inlined_call_operand.vmem [shape: bf16[3,3,8,8], index: 1, kind: input, shape index: {}]
  %s2 = inlined_call_operand.vmem [shape: f32[1,8], index: 2, kind: input, shape index: {}]
  %s3 = inlined_call_operand.vmem [shape: f32[1,8], index: 3, kind: input, shape index: {}]
  %s4 = inlined_call_operand.vmem [shape: bf16[3,3,8,8], index: 4, kind: input, shape index: {}]
  %s5 = inlined_call_operand.vmem [shape: f32[1,8], index: 5, kind: input, shape index: {}]
  %s6 = inlined_call_operand.vmem [shape: f32[1,8], index: 6, kind: input, shape index: {}]
  %s7 = inlined_call_operand.vmem [shape: f32[2,16,16,8], index: 7, kind: output, shape index: {}]
  %s8 = sld [smem:[#allocation0]]
  $region61: #{tpu_custom_call.1} parent=0
    _
  %s10 = ssub.s32 1, %s8
  %s11 = scalar_select 0, %s10, %s8
  loop: start=0, step=1, limit=4
  $region2: #{tpu_custom_call.1} parent=0 // loop_pre_header
    _
  $region3: #{tpu_custom_call.1} parent=0 // loop_header
    %s13 = sphi 0, %s17
    %p14 = scmp.ge.s32.totalorder %s13, 4
    %s23 = sphi 0, %s25
    %s26 = sphi 0, %s23
    %s27 = sphi 0, %s26
    %s43 = sphi 0, %s27
    %s47 = sphi 0, %s47
    %s49 = sphi 0, %s47
    %s50 = sphi 0, %s49
    %s64 = sphi 0, %s50
    %s68 = sphi 0, %s68
    %s70 = sphi 0, %s68
    %s71 = sphi 0, %s70
    %s85 = sphi 0, %s71
    %s89 = sphi 0, %s89
    %s91 = sphi 0, %s89
    %s92 = sphi 0, %s91
    %s106 = sphi 0, %s92
    %s110 = sphi 0, %s110
    %s112 = sphi 0, %s110
    %s113 = sphi 0, %s112
    %s127 = sphi 0, %s113
    %s131 = sphi 0, %s131
    %s133 = sphi 0, %s131
    %s134 = sphi 0, %s133
    %s148 = sphi 0, %s134
    %s152 = sphi 0, %s152
    %s154 = sphi 0, %s152
    %s155 = sphi 0, %s154
    %s169 = sphi 0, %s155
    %s175 = sphi 0, %s177
    %s178 = sphi 0, %s175
    %s179 = sphi 0, %s178
    %s195 = sphi 0, %s179
  $region4: #{tpu_custom_call.1} parent=0 // loop_header_branch
    %16 = sbr.rel (%p14) target = $region8
  $region5: #{tpu_custom_call.1} parent=0 // loop_body
    %s18 = ssub.s32 %s13, 1
    %s19 = ssub.s32 %s13, 2
    %s20 = sadd.s32 %s13, 1
    %s21 = ssub.s32 %s13, %s20
    %p22 = scmp.eq.s32.totalorder %s21, 0
    %s24 = sadd.s32 %s23, 1
    %s25 = scalar_select %p22, %s23, %s24
    %p28 = pneg %p22
    %p29 = scmp.eq.s32.totalorder %s13, 1
    %p30 = por %p28, %p29
    %p31 = scmp.ne.s32.totalorder %s23, %s26
    %p32 = scmp.eq.s32.totalorder %s13, 0
    %p33 = por %p31, %p32
    %p34 = scmp.ne.s32.totalorder %s23, %s26
    %p35 = scmp.eq.s32.totalorder %s18, 1
    %p36 = por %p34, %p35
    %p37 = scmp.ne.s32.totalorder %s26, %s27
    %p38 = scmp.eq.s32.totalorder %s18, 0
    %p39 = por %p37, %p38
    %p40 = scmp.ne.s32.totalorder %s26, %s27
    %p41 = scmp.eq.s32.totalorder %s19, 1
    %p42 = por %p40, %p41
    %p44 = scmp.ne.s32.totalorder %s27, %s43
    %p45 = scmp.eq.s32.totalorder %s19, 0
    %p46 = por %p44, %p45
    %s48 = sadd.s32 %s47, 1
    %p51 = scmp.eq.s32.totalorder %s13, 1
    %p52 = scmp.ne.s32.totalorder %s47, %s49
    %p53 = scmp.eq.s32.totalorder %s13, 0
    %p54 = por %p52, %p53
    %p55 = scmp.ne.s32.totalorder %s47, %s49
    %p56 = scmp.eq.s32.totalorder %s18, 1
    %p57 = por %p55, %p56
    %p58 = scmp.ne.s32.totalorder %s49, %s50
    %p59 = scmp.eq.s32.totalorder %s18, 0
    %p60 = por %p58, %p59
    %p61 = scmp.ne.s32.totalorder %s49, %s50
    %p62 = scmp.eq.s32.totalorder %s19, 1
    %p63 = por %p61, %p62
    %p65 = scmp.ne.s32.totalorder %s50, %s64
    %p66 = scmp.eq.s32.totalorder %s19, 0
    %p67 = por %p65, %p66
    %s69 = sadd.s32 %s68, 1
    %p72 = scmp.eq.s32.totalorder %s13, 1
    %p73 = scmp.ne.s32.totalorder %s68, %s70
    %p74 = scmp.eq.s32.totalorder %s13, 0
    %p75 = por %p73, %p74
    %p76 = scmp.ne.s32.totalorder %s68, %s70
    %p77 = scmp.eq.s32.totalorder %s18, 1
    %p78 = por %p76, %p77
    %p79 = scmp.ne.s32.totalorder %s70, %s71
    %p80 = scmp.eq.s32.totalorder %s18, 0
    %p81 = por %p79, %p80
    %p82 = scmp.ne.s32.totalorder %s70, %s71
    %p83 = scmp.eq.s32.totalorder %s19, 1
    %p84 = por %p82, %p83
    %p86 = scmp.ne.s32.totalorder %s71, %s85
    %p87 = scmp.eq.s32.totalorder %s19, 0
    %p88 = por %p86, %p87
    %s90 = sadd.s32 %s89, 1
    %p93 = scmp.eq.s32.totalorder %s13, 1
    %p94 = scmp.ne.s32.totalorder %s89, %s91
    %p95 = scmp.eq.s32.totalorder %s13, 0
    %p96 = por %p94, %p95
    %p97 = scmp.ne.s32.totalorder %s89, %s91
    %p98 = scmp.eq.s32.totalorder %s18, 1
    %p99 = por %p97, %p98
    %p100 = scmp.ne.s32.totalorder %s91, %s92
    %p101 = scmp.eq.s32.totalorder %s18, 0
    %p102 = por %p100, %p101
    %p103 = scmp.ne.s32.totalorder %s91, %s92
    %p104 = scmp.eq.s32.totalorder %s19, 1
    %p105 = por %p103, %p104
    %p107 = scmp.ne.s32.totalorder %s92, %s106
    %p108 = scmp.eq.s32.totalorder %s19, 0
    %p109 = por %p107, %p108
    %s111 = sadd.s32 %s110, 1
    %p114 = scmp.eq.s32.totalorder %s13, 1
    %p115 = scmp.ne.s32.totalorder %s110, %s112
    %p116 = scmp.eq.s32.totalorder %s13, 0
    %p117 = por %p115, %p116
    %p118 = scmp.ne.s32.totalorder %s110, %s112
    %p119 = scmp.eq.s32.totalorder %s18, 1
    %p120 = por %p118, %p119
    %p121 = scmp.ne.s32.totalorder %s112, %s113
    %p122 = scmp.eq.s32.totalorder %s18, 0
    %p123 = por %p121, %p122
    %p124 = scmp.ne.s32.totalorder %s112, %s113
    %p125 = scmp.eq.s32.totalorder %s19, 1
    %p126 = por %p124, %p125
    %p128 = scmp.ne.s32.totalorder %s113, %s127
    %p129 = scmp.eq.s32.totalorder %s19, 0
    %p130 = por %p128, %p129
    %s132 = sadd.s32 %s131, 1
    %p135 = scmp.eq.s32.totalorder %s13, 1
    %p136 = scmp.ne.s32.totalorder %s131, %s133
    %p137 = scmp.eq.s32.totalorder %s13, 0
    %p138 = por %p136, %p137
    %p139 = scmp.ne.s32.totalorder %s131, %s133
    %p140 = scmp.eq.s32.totalorder %s18, 1
    %p141 = por %p139, %p140
    %p142 = scmp.ne.s32.totalorder %s133, %s134
    %p143 = scmp.eq.s32.totalorder %s18, 0
    %p144 = por %p142, %p143
    %p145 = scmp.ne.s32.totalorder %s133, %s134
    %p146 = scmp.eq.s32.totalorder %s19, 1
    %p147 = por %p145, %p146
    %p149 = scmp.ne.s32.totalorder %s134, %s148
    %p150 = scmp.eq.s32.totalorder %s19, 0
    %p151 = por %p149, %p150
    %s153 = sadd.s32 %s152, 1
    %p156 = scmp.eq.s32.totalorder %s13, 1
    %p157 = scmp.ne.s32.totalorder %s152, %s154
    %p158 = scmp.eq.s32.totalorder %s13, 0
    %p159 = por %p157, %p158
    %p160 = scmp.ne.s32.totalorder %s152, %s154
    %p161 = scmp.eq.s32.totalorder %s18, 1
    %p162 = por %p160, %p161
    %p163 = scmp.ne.s32.totalorder %s154, %s155
    %p164 = scmp.eq.s32.totalorder %s18, 0
    %p165 = por %p163, %p164
    %p166 = scmp.ne.s32.totalorder %s154, %s155
    %p167 = scmp.eq.s32.totalorder %s19, 1
    %p168 = por %p166, %p167
    %p170 = scmp.ne.s32.totalorder %s155, %s169
    %p171 = scmp.eq.s32.totalorder %s19, 0
    %p172 = por %p170, %p171
    %s173 = ssub.s32 %s13, %s20
    %p174 = scmp.eq.s32.totalorder %s173, 0
    %s176 = sadd.s32 %s175, 1
    %s177 = scalar_select %p174, %s175, %s176
    %p180 = pneg %p174
    %p181 = scmp.eq.s32.totalorder %s13, 1
    %p182 = por %p180, %p181
    %p183 = scmp.ne.s32.totalorder %s175, %s178
    %p184 = scmp.eq.s32.totalorder %s13, 0
    %p185 = por %p183, %p184
    %p186 = scmp.ne.s32.totalorder %s175, %s178
    %p187 = scmp.eq.s32.totalorder %s18, 1
    %p188 = por %p186, %p187
    %p189 = scmp.ne.s32.totalorder %s178, %s179
    %p190 = scmp.eq.s32.totalorder %s18, 0
    %p191 = por %p189, %p190
    %p192 = scmp.ne.s32.totalorder %s178, %s179
    %p193 = scmp.eq.s32.totalorder %s19, 1
    %p194 = por %p192, %p193
    %p196 = scmp.ne.s32.totalorder %s179, %s195
    %p197 = scmp.eq.s32.totalorder %s19, 0
    %p198 = por %p196, %p197
    %p199 = scmp.le.s32.totalorder 1, %s13
    %p200 = scmp.lt.s32.totalorder %s13, 3
    %p201 = pnand %p199, %p200
    %p202 = pneg %p201
    // Predicated region
    $region9: #{tpu_custom_call.1} parent=5 // pred_check
      _
    $region10: #{tpu_custom_call.1} parent=5 // pred_check_branch
      %204 = sbr.rel (%p201) target = $region12
    $region11: #{tpu_custom_call.1} parent=5 // pred_region
      %s205 = ssub.s32 %s13, 1
      // Predicated region
      $region13: #{tpu_custom_call.1} parent=11 // pred_check
        %p206 = pneg %p60
      $region14: #{tpu_custom_call.1} parent=11 // pred_check_branch
        %208 = sbr.rel (%p206) target = $region16
      $region15: #{tpu_custom_call.1} parent=11 // pred_region
        _
      $region16: #{tpu_custom_call.1} parent=11 // pred_fallthru
        _
      // Predicated region
      $region17: #{tpu_custom_call.1} parent=11 // pred_check
        %p209 = pneg %p81
      $region18: #{tpu_custom_call.1} parent=11 // pred_check_branch
        %211 = sbr.rel (%p209) target = $region20
      $region19: #{tpu_custom_call.1} parent=11 // pred_region
        _
      $region20: #{tpu_custom_call.1} parent=11 // pred_fallthru
        _
      // Predicated region
      $region21: #{tpu_custom_call.1} parent=11 // pred_check
        %p212 = pneg %p102
      $region22: #{tpu_custom_call.1} parent=11 // pred_check_branch
        %214 = sbr.rel (%p212) target = $region24
      $region23: #{tpu_custom_call.1} parent=11 // pred_region
        _
      $region24: #{tpu_custom_call.1} parent=11 // pred_fallthru
        _
      // Predicated region
      $region25: #{tpu_custom_call.1} parent=11 // pred_check
        %p215 = pneg %p123
      $region26: #{tpu_custom_call.1} parent=11 // pred_check_branch
        %217 = sbr.rel (%p215) target = $region28
      $region27: #{tpu_custom_call.1} parent=11 // pred_region
        _
      $region28: #{tpu_custom_call.1} parent=11 // pred_fallthru
        _
      // Predicated region
      $region29: #{tpu_custom_call.1} parent=11 // pred_check
        %p218 = pneg %p144
      $region30: #{tpu_custom_call.1} parent=11 // pred_check_branch
        %220 = sbr.rel (%p218) target = $region32
      $region31: #{tpu_custom_call.1} parent=11 // pred_region
        _
      $region32: #{tpu_custom_call.1} parent=11 // pred_fallthru
        _
      // Predicated region
      $region33: #{tpu_custom_call.1} parent=11 // pred_check
        %p221 = pneg %p165
      $region34: #{tpu_custom_call.1} parent=11 // pred_check_branch
        %223 = sbr.rel (%p221) target = $region36
      $region35: #{tpu_custom_call.1} parent=11 // pred_region
        _
      $region36: #{tpu_custom_call.1} parent=11 // pred_fallthru
        _
    $region12: #{tpu_custom_call.1} parent=5 // pred_fallthru
      _
    %p224 = scmp.lt.s32.totalorder %s13, 2
    // Predicated region
    $region37: #{tpu_custom_call.1} parent=5 // pred_check
      %p225 = pneg %p224
    $region38: #{tpu_custom_call.1} parent=5 // pred_check_branch
      %227 = sbr.rel (%p225) target = $region40
    $region39: #{tpu_custom_call.1} parent=5 // pred_region
      // Predicated region
      $region41: #{tpu_custom_call.1} parent=39 // pred_check
        %p228 = pneg %p33
      $region42: #{tpu_custom_call.1} parent=39 // pred_check_branch
        %230 = sbr.rel (%p228) target = $region44
      $region43: #{tpu_custom_call.1} parent=39 // pred_region
        %p231 = scmp.lt.s32.totalorder %s13, 1
        %s232 = scalar_select %p231, %s13, 1
        %s233 = smul.addr %s232, 32
        %s234 = smul.addr %s233, 8
        %s235 = scalar_lea.vmem %s0, %s234
      $region44: #{tpu_custom_call.1} parent=39 // pred_fallthru
        _
    $region40: #{tpu_custom_call.1} parent=5 // pred_fallthru
      _
    %p236 = scmp.le.s32.totalorder 1, %s13
    %p237 = scmp.lt.s32.totalorder %s13, 3
    %p238 = pnand %p236, %p237
    %p239 = pneg %p238
    // Predicated region
    $region45: #{tpu_custom_call.1} parent=5 // pred_check
      _
    $region46: #{tpu_custom_call.1} parent=5 // pred_check_branch
      %241 = sbr.rel (%p238) target = $region48
    $region47: #{tpu_custom_call.1} parent=5 // pred_region
      %s242 = ssub.s32 %s13, 1
      %p243 = scmp.lt.s32.totalorder %s18, 1
      %s244 = scalar_select %p243, %s18, 1
      %s245 = smul.addr %s244, 32
      %s246 = smul.addr %s245, 8
      %s247 = scalar_lea.vmem %s0, %s246
      %p248 = pneg %p39
      %p249 = pneg %p36
      %p250 = pneg %p60
      %p251 = pneg %p57
      %p252 = pneg %p81
      %p253 = pneg %p78
      %p254 = pneg %p102
      %p255 = pneg %p99
      %p256 = pneg %p123
      %p257 = pneg %p120
      %p258 = pneg %p144
      %p259 = pneg %p141
      %p260 = pneg %p165
      %p261 = pneg %p162
      %p262 = pneg %p191
      %p263 = pneg %p188
      %p264 = scmp.lt.s32.totalorder %s18, 1
      %s265 = scalar_select %p264, %s18, 1
      %s266 = smul.addr %s265, 32
      %s267 = smul.addr %s266, 8
      %s268 = scalar_lea.vmem %s7, %s267
      %p269 = scmp.lt.s32.totalorder %s18, 1
      %s270 = scalar_select %p269, %s18, 1
      %s271 = smul.addr %s270, 32
      %s272 = smul.addr %s271, 8
      %s273 = scalar_lea.vmem %s0, %s272
      %p274 = scmp.lt.s32.totalorder %s18, 1
      %s275 = scalar_select %p274, %s18, 1
      %s276 = smul.addr %s275, 32
      %s277 = smul.addr %s276, 8
      %s278 = scalar_lea.vmem %s7, %s277
      %vm280 = vcmask 64512
      %281 = vst.msk [vmem:[#allocation2] sm:$0xff] %vm280, 0.0
      %282 = vst.msk [vmem:[#allocation2 + $0x8] sm:$0xff] %vm280, 0.0
      %vm283 = vcmask 58368
      %284 = vst.msk [vmem:[#allocation2 + $0x10] sm:$0x3] %vm283, 0.0
      %s285 = scalar_lea.vmem [#allocation2], 408
      %286 = vst.msk [vmem:[%s285] sm:$0xff] %vm280, 0.0
      %287 = vst.msk [vmem:[%s285 + $0x8] sm:$0xff] %vm280, 0.0
      %288 = vst.msk [vmem:[%s285 + $0x10] sm:$0x3] %vm283, 0.0
      %vm289 = vcmask 57344
      %290 = vst.msk [vmem:[#allocation2] sm:$0x1] %vm289, 0.0
      %291 = vst.msk [vmem:[#allocation2 + $0x18] sm:$0x1] %vm289, 0.0
      %292 = vst.msk [vmem:[#allocation2 + $0x30] sm:$0x1] %vm289, 0.0
      %293 = vst.msk [vmem:[#allocation2 + $0x48] sm:$0x1] %vm289, 0.0
      %294 = vst.msk [vmem:[#allocation2 + $0x60] sm:$0x1] %vm289, 0.0
      %295 = vst.msk [vmem:[#allocation2 + $0x78] sm:$0x1] %vm289, 0.0
      %296 = vst.msk [vmem:[#allocation2 + $0x90] sm:$0x1] %vm289, 0.0
      %297 = vst.msk [vmem:[#allocation2 + $0xa8] sm:$0x1] %vm289, 0.0
      %298 = vst.msk [vmem:[#allocation2 + $0xc0] sm:$0x1] %vm289, 0.0
      %299 = vst.msk [vmem:[#allocation2 + $0xd8] sm:$0x1] %vm289, 0.0
      %300 = vst.msk [vmem:[#allocation2 + $0xf0] sm:$0x1] %vm289, 0.0
      %301 = vst.msk [vmem:[#allocation2 + $0x108] sm:$0x1] %vm289, 0.0
      %302 = vst.msk [vmem:[#allocation2 + $0x120] sm:$0x1] %vm289, 0.0
      %303 = vst.msk [vmem:[#allocation2 + $0x138] sm:$0x1] %vm289, 0.0
      %304 = vst.msk [vmem:[#allocation2 + $0x150] sm:$0x1] %vm289, 0.0
      %305 = vst.msk [vmem:[#allocation2 + $0x168] sm:$0x1] %vm289, 0.0
      %306 = vst.msk [vmem:[#allocation2 + $0x180] sm:$0x1] %vm289, 0.0
      %307 = vst.msk [vmem:[#allocation2 + $0x198] sm:$0x1] %vm289, 0.0
      %308 = vst.msk [vmem:[#allocation2 + $0x11] sm:$0x1] %vm289, 0.0
      %309 = vst.msk [vmem:[#allocation2 + $0x29] sm:$0x1] %vm289, 0.0
      %310 = vst.msk [vmem:[#allocation2 + $0x41] sm:$0x1] %vm289, 0.0
      %311 = vst.msk [vmem:[#allocation2 + $0x59] sm:$0x1] %vm289, 0.0
      %312 = vst.msk [vmem:[#allocation2 + $0x71] sm:$0x1] %vm289, 0.0
      %313 = vst.msk [vmem:[#allocation2 + $0x89] sm:$0x1] %vm289, 0.0
      %314 = vst.msk [vmem:[#allocation2 + $0xa1] sm:$0x1] %vm289, 0.0
      %315 = vst.msk [vmem:[#allocation2 + $0xb9] sm:$0x1] %vm289, 0.0
      %316 = vst.msk [vmem:[#allocation2 + $0xd1] sm:$0x1] %vm289, 0.0
      %317 = vst.msk [vmem:[#allocation2 + $0xe9] sm:$0x1] %vm289, 0.0
      %318 = vst.msk [vmem:[#allocation2 + $0x101] sm:$0x1] %vm289, 0.0
      %319 = vst.msk [vmem:[#allocation2 + $0x119] sm:$0x1] %vm289, 0.0
      %320 = vst.msk [vmem:[#allocation2 + $0x131] sm:$0x1] %vm289, 0.0
      %321 = vst.msk [vmem:[#allocation2 + $0x149] sm:$0x1] %vm289, 0.0
      %322 = vst.msk [vmem:[#allocation2 + $0x161] sm:$0x1] %vm289, 0.0
      %323 = vst.msk [vmem:[#allocation2 + $0x179] sm:$0x1] %vm289, 0.0
      %324 = vst.msk [vmem:[#allocation2 + $0x191] sm:$0x1] %vm289, 0.0
      %325 = vst.msk [vmem:[#allocation2 + $0x1a9] sm:$0x1] %vm289, 0.0
      %326 = vst.msk [vmem:[#allocation3] sm:$0xff] %vm280, 0.0
      %327 = vst.msk [vmem:[#allocation3 + $0x8] sm:$0xff] %vm280, 0.0
      %328 = vst.msk [vmem:[#allocation3 + $0x10] sm:$0x3] %vm283, 0.0
      %s329 = scalar_lea.vmem [#allocation3], 408
      %330 = vst.msk [vmem:[%s329] sm:$0xff] %vm280, 0.0
      %331 = vst.msk [vmem:[%s329 + $0x8] sm:$0xff] %vm280, 0.0
      %332 = vst.msk [vmem:[%s329 + $0x10] sm:$0x3] %vm283, 0.0
      %333 = vst.msk [vmem:[#allocation3] sm:$0x1] %vm289, 0.0
      %334 = vst.msk [vmem:[#allocation3 + $0x18] sm:$0x1] %vm289, 0.0
      %335 = vst.msk [vmem:[#allocation3 + $0x30] sm:$0x1] %vm289, 0.0
      %336 = vst.msk [vmem:[#allocation3 + $0x48] sm:$0x1] %vm289, 0.0
      %337 = vst.msk [vmem:[#allocation3 + $0x60] sm:$0x1] %vm289, 0.0
      %338 = vst.msk [vmem:[#allocation3 + $0x78] sm:$0x1] %vm289, 0.0
      %339 = vst.msk [vmem:[#allocation3 + $0x90] sm:$0x1] %vm289, 0.0
      %340 = vst.msk [vmem:[#allocation3 + $0xa8] sm:$0x1] %vm289, 0.0
      %341 = vst.msk [vmem:[#allocation3 + $0xc0] sm:$0x1] %vm289, 0.0
      %342 = vst.msk [vmem:[#allocation3 + $0xd8] sm:$0x1] %vm289, 0.0
      %343 = vst.msk [vmem:[#allocation3 + $0xf0] sm:$0x1] %vm289, 0.0
      %344 = vst.msk [vmem:[#allocation3 + $0x108] sm:$0x1] %vm289, 0.0
      %345 = vst.msk [vmem:[#allocation3 + $0x120] sm:$0x1] %vm289, 0.0
      %346 = vst.msk [vmem:[#allocation3 + $0x138] sm:$0x1] %vm289, 0.0
      %347 = vst.msk [vmem:[#allocation3 + $0x150] sm:$0x1] %vm289, 0.0
      %348 = vst.msk [vmem:[#allocation3 + $0x168] sm:$0x1] %vm289, 0.0
      %349 = vst.msk [vmem:[#allocation3 + $0x180] sm:$0x1] %vm289, 0.0
      %350 = vst.msk [vmem:[#allocation3 + $0x198] sm:$0x1] %vm289, 0.0
      %351 = vst.msk [vmem:[#allocation3 + $0x11] sm:$0x1] %vm289, 0.0
      %352 = vst.msk [vmem:[#allocation3 + $0x29] sm:$0x1] %vm289, 0.0
      %353 = vst.msk [vmem:[#allocation3 + $0x41] sm:$0x1] %vm289, 0.0
      %354 = vst.msk [vmem:[#allocation3 + $0x59] sm:$0x1] %vm289, 0.0
      %355 = vst.msk [vmem:[#allocation3 + $0x71] sm:$0x1] %vm289, 0.0
      %356 = vst.msk [vmem:[#allocation3 + $0x89] sm:$0x1] %vm289, 0.0
      %357 = vst.msk [vmem:[#allocation3 + $0xa1] sm:$0x1] %vm289, 0.0
      %358 = vst.msk [vmem:[#allocation3 + $0xb9] sm:$0x1] %vm289, 0.0
      %359 = vst.msk [vmem:[#allocation3 + $0xd1] sm:$0x1] %vm289, 0.0
      %360 = vst.msk [vmem:[#allocation3 + $0xe9] sm:$0x1] %vm289, 0.0
      %361 = vst.msk [vmem:[#allocation3 + $0x101] sm:$0x1] %vm289, 0.0
      %362 = vst.msk [vmem:[#allocation3 + $0x119] sm:$0x1] %vm289, 0.0
      %363 = vst.msk [vmem:[#allocation3 + $0x131] sm:$0x1] %vm289, 0.0
      %364 = vst.msk [vmem:[#allocation3 + $0x149] sm:$0x1] %vm289, 0.0
      %365 = vst.msk [vmem:[#allocation3 + $0x161] sm:$0x1] %vm289, 0.0
      %366 = vst.msk [vmem:[#allocation3 + $0x179] sm:$0x1] %vm289, 0.0
      %367 = vst.msk [vmem:[#allocation3 + $0x191] sm:$0x1] %vm289, 0.0
      %368 = vst.msk [vmem:[#allocation3 + $0x1a9] sm:$0x1] %vm289, 0.0
      %v369 = vld [vmem:[%s273] sm:$0xff]
      %v370 = vld [vmem:[%s273 + $0x8] sm:$0xff]
      %v371 = vld [vmem:[%s273 + $0x10] sm:$0xff]
      %v372 = vld [vmem:[%s273 + $0x18] sm:$0xff]
      %v373 = vld [vmem:[%s273 + $0x20] sm:$0xff]
      %v374 = vld [vmem:[%s273 + $0x28] sm:$0xff]
      %v375 = vld [vmem:[%s273 + $0x30] sm:$0xff]
      %v376 = vld [vmem:[%s273 + $0x38] sm:$0xff]
      %v377 = vld [vmem:[%s273 + $0x40] sm:$0xff]
      %v378 = vld [vmem:[%s273 + $0x48] sm:$0xff]
      %v379 = vld [vmem:[%s273 + $0x50] sm:$0xff]
      %v380 = vld [vmem:[%s273 + $0x58] sm:$0xff]
      %v381 = vld [vmem:[%s273 + $0x60] sm:$0xff]
      %v382 = vld [vmem:[%s273 + $0x68] sm:$0xff]
      %v383 = vld [vmem:[%s273 + $0x70] sm:$0xff]
      %v384 = vld [vmem:[%s273 + $0x78] sm:$0xff]
      %v385 = vld [vmem:[%s273 + $0x80] sm:$0xff]
      %v386 = vld [vmem:[%s273 + $0x88] sm:$0xff]
      %v387 = vld [vmem:[%s273 + $0x90] sm:$0xff]
      %v388 = vld [vmem:[%s273 + $0x98] sm:$0xff]
      %v389 = vld [vmem:[%s273 + $0xa0] sm:$0xff]
      %v390 = vld [vmem:[%s273 + $0xa8] sm:$0xff]
      %v391 = vld [vmem:[%s273 + $0xb0] sm:$0xff]
      %v392 = vld [vmem:[%s273 + $0xb8] sm:$0xff]
      %v393 = vld [vmem:[%s273 + $0xc0] sm:$0xff]
      %v394 = vld [vmem:[%s273 + $0xc8] sm:$0xff]
      %v395 = vld [vmem:[%s273 + $0xd0] sm:$0xff]
      %v396 = vld [vmem:[%s273 + $0xd8] sm:$0xff]
      %v397 = vld [vmem:[%s273 + $0xe0] sm:$0xff]
      %v398 = vld [vmem:[%s273 + $0xe8] sm:$0xff]
      %v399 = vld [vmem:[%s273 + $0xf0] sm:$0xff]
      %v400 = vld [vmem:[%s273 + $0xf8] sm:$0xff]
      %s401 = scalar_lea.vmem [#allocation2], 24
      %402 = vst.msk [vmem:[%s401 + $0x1] sm:$0xff] %vm280, %v369
      %403 = vst.msk [vmem:[%s401 + $0x9] sm:$0xff] %vm280, %v370
      %404 = vst.msk [vmem:[%s401 + $0x19] sm:$0xff] %vm280, %v371
      %405 = vst.msk [vmem:[%s401 + $0x21] sm:$0xff] %vm280, %v372
      %406 = vst.msk [vmem:[%s401 + $0x31] sm:$0xff] %vm280, %v373
      %407 = vst.msk [vmem:[%s401 + $0x39] sm:$0xff] %vm280, %v374
      %408 = vst.msk [vmem:[%s401 + $0x49] sm:$0xff] %vm280, %v375
      %409 = vst.msk [vmem:[%s401 + $0x51] sm:$0xff] %vm280, %v376
      %410 = vst.msk [vmem:[%s401 + $0x61] sm:$0xff] %vm280, %v377
      %411 = vst.msk [vmem:[%s401 + $0x69] sm:$0xff] %vm280, %v378
      %412 = vst.msk [vmem:[%s401 + $0x79] sm:$0xff] %vm280, %v379
      %413 = vst.msk [vmem:[%s401 + $0x81] sm:$0xff] %vm280, %v380
      %414 = vst.msk [vmem:[%s401 + $0x91] sm:$0xff] %vm280, %v381
      %415 = vst.msk [vmem:[%s401 + $0x99] sm:$0xff] %vm280, %v382
      %416 = vst.msk [vmem:[%s401 + $0xa9] sm:$0xff] %vm280, %v383
      %417 = vst.msk [vmem:[%s401 + $0xb1] sm:$0xff] %vm280, %v384
      %418 = vst.msk [vmem:[%s401 + $0xc1] sm:$0xff] %vm280, %v385
      %419 = vst.msk [vmem:[%s401 + $0xc9] sm:$0xff] %vm280, %v386
      %420 = vst.msk [vmem:[%s401 + $0xd9] sm:$0xff] %vm280, %v387
      %421 = vst.msk [vmem:[%s401 + $0xe1] sm:$0xff] %vm280, %v388
      %422 = vst.msk [vmem:[%s401 + $0xf1] sm:$0xff] %vm280, %v389
      %423 = vst.msk [vmem:[%s401 + $0xf9] sm:$0xff] %vm280, %v390
      %424 = vst.msk [vmem:[%s401 + $0x109] sm:$0xff] %vm280, %v391
      %425 = vst.msk [vmem:[%s401 + $0x111] sm:$0xff] %vm280, %v392
      %426 = vst.msk [vmem:[%s401 + $0x121] sm:$0xff] %vm280, %v393
      %427 = vst.msk [vmem:[%s401 + $0x129] sm:$0xff] %vm280, %v394
      %428 = vst.msk [vmem:[%s401 + $0x139] sm:$0xff] %vm280, %v395
      %429 = vst.msk [vmem:[%s401 + $0x141] sm:$0xff] %vm280, %v396
      %430 = vst.msk [vmem:[%s401 + $0x151] sm:$0xff] %vm280, %v397
      %431 = vst.msk [vmem:[%s401 + $0x159] sm:$0xff] %vm280, %v398
      %432 = vst.msk [vmem:[%s401 + $0x169] sm:$0xff] %vm280, %v399
      %433 = vst.msk [vmem:[%s401 + $0x171] sm:$0xff] %vm280, %v400
      %v434 = vld [vmem:[#allocation2] sm:$0xff]
      %v435 = vld [vmem:[#allocation2 + $0x8] sm:$0xff]
      %v436 = vld [vmem:[#allocation2 + $0x18] sm:$0xff]
      %v437 = vld [vmem:[#allocation2 + $0x20] sm:$0xff]
      %v438 = vld [vmem:[#allocation2 + $0x30] sm:$0xff]
      %v439 = vld [vmem:[#allocation2 + $0x38] sm:$0xff]
      %v440 = vld [vmem:[#allocation2 + $0x48] sm:$0xff]
      %v441 = vld [vmem:[#allocation2 + $0x50] sm:$0xff]
      %v442 = vld [vmem:[#allocation2 + $0x60] sm:$0xff]
      %v443 = vld [vmem:[#allocation2 + $0x68] sm:$0xff]
      %v444 = vld [vmem:[#allocation2 + $0x78] sm:$0xff]
      %v445 = vld [vmem:[#allocation2 + $0x80] sm:$0xff]
      %v446 = vld [vmem:[#allocation2 + $0x90] sm:$0xff]
      %v447 = vld [vmem:[#allocation2 + $0x98] sm:$0xff]
      %v448 = vld [vmem:[#allocation2 + $0xa8] sm:$0xff]
      %v449 = vld [vmem:[#allocation2 + $0xb0] sm:$0xff]
      %v450 = vld [vmem:[#allocation2 + $0xc0] sm:$0xff]
      %v451 = vld [vmem:[#allocation2 + $0xc8] sm:$0xff]
      %v452 = vld [vmem:[#allocation2 + $0xd8] sm:$0xff]
      %v453 = vld [vmem:[#allocation2 + $0xe0] sm:$0xff]
      %v454 = vld [vmem:[#allocation2 + $0xf0] sm:$0xff]
      %v455 = vld [vmem:[#allocation2 + $0xf8] sm:$0xff]
      %v456 = vld [vmem:[#allocation2 + $0x108] sm:$0xff]
      %v457 = vld [vmem:[#allocation2 + $0x110] sm:$0xff]
      %v458 = vld [vmem:[#allocation2 + $0x120] sm:$0xff]
      %v459 = vld [vmem:[#allocation2 + $0x128] sm:$0xff]
      %v460 = vld [vmem:[#allocation2 + $0x138] sm:$0xff]
      %v461 = vld [vmem:[#allocation2 + $0x140] sm:$0xff]
      %v462 = vld [vmem:[#allocation2 + $0x150] sm:$0xff]
      %v463 = vld [vmem:[#allocation2 + $0x158] sm:$0xff]
      %v464 = vld [vmem:[#allocation2 + $0x168] sm:$0xff]
      %v465 = vld [vmem:[#allocation2 + $0x170] sm:$0xff]
      %v466 = vpack.c.bf16 %v435, %v434
      %v467 = vpack.c.bf16 %v437, %v436
      %v468 = vpack.c.bf16 %v439, %v438
      %v469 = vpack.c.bf16 %v441, %v440
      %v470 = vpack.c.bf16 %v443, %v442
      %v471 = vpack.c.bf16 %v445, %v444
      %v472 = vpack.c.bf16 %v447, %v446
      %v473 = vpack.c.bf16 %v449, %v448
      %v474 = vpack.c.bf16 %v451, %v450
      %v475 = vpack.c.bf16 %v453, %v452
      %v476 = vpack.c.bf16 %v455, %v454
      %v477 = vpack.c.bf16 %v457, %v456
      %v478 = vpack.c.bf16 %v459, %v458
      %v479 = vpack.c.bf16 %v461, %v460
      %v480 = vpack.c.bf16 %v463, %v462
      %v481 = vpack.c.bf16 %v465, %v464
      %v482 = vld [vmem:[%s1] sm:$0xf]
      %v483 = vld [vmem:[#allocation2 + $0x1] sm:$0xff]
      %v484 = vld [vmem:[#allocation2 + $0x9] sm:$0xff]
      %v485 = vld [vmem:[#allocation2 + $0x19] sm:$0xff]
      %v486 = vld [vmem:[#allocation2 + $0x21] sm:$0xff]
      %v487 = vld [vmem:[#allocation2 + $0x31] sm:$0xff]
      %v488 = vld [vmem:[#allocation2 + $0x39] sm:$0xff]
      %v489 = vld [vmem:[#allocation2 + $0x49] sm:$0xff]
      %v490 = vld [vmem:[#allocation2 + $0x51] sm:$0xff]
      %v491 = vld [vmem:[#allocation2 + $0x61] sm:$0xff]
      %v492 = vld [vmem:[#allocation2 + $0x69] sm:$0xff]
      %v493 = vld [vmem:[#allocation2 + $0x79] sm:$0xff]
      %v494 = vld [vmem:[#allocation2 + $0x81] sm:$0xff]
      %v495 = vld [vmem:[#allocation2 + $0x91] sm:$0xff]
      %v496 = vld [vmem:[#allocation2 + $0x99] sm:$0xff]
      %v497 = vld [vmem:[#allocation2 + $0xa9] sm:$0xff]
      %v498 = vld [vmem:[#allocation2 + $0xb1] sm:$0xff]
      %v499 = vld [vmem:[#allocation2 + $0xc1] sm:$0xff]
      %v500 = vld [vmem:[#allocation2 + $0xc9] sm:$0xff]
      %v501 = vld [vmem:[#allocation2 + $0xd9] sm:$0xff]
      %v502 = vld [vmem:[#allocation2 + $0xe1] sm:$0xff]
      %v503 = vld [vmem:[#allocation2 + $0xf1] sm:$0xff]
      %v504 = vld [vmem:[#allocation2 + $0xf9] sm:$0xff]
      %v505 = vld [vmem:[#allocation2 + $0x109] sm:$0xff]
      %v506 = vld [vmem:[#allocation2 + $0x111] sm:$0xff]
      %v507 = vld [vmem:[#allocation2 + $0x121] sm:$0xff]
      %v508 = vld [vmem:[#allocation2 + $0x129] sm:$0xff]
      %v509 = vld [vmem:[#allocation2 + $0x139] sm:$0xff]
      %v510 = vld [vmem:[#allocation2 + $0x141] sm:$0xff]
      %v511 = vld [vmem:[#allocation2 + $0x151] sm:$0xff]
      %v512 = vld [vmem:[#allocation2 + $0x159] sm:$0xff]
      %v513 = vld [vmem:[#allocation2 + $0x169] sm:$0xff]
      %v514 = vld [vmem:[#allocation2 + $0x171] sm:$0xff]
      %v515 = vpack.c.bf16 %v484, %v483
      %v516 = vpack.c.bf16 %v486, %v485
      %v517 = vpack.c.bf16 %v488, %v487
      %v518 = vpack.c.bf16 %v490, %v489
      %v519 = vpack.c.bf16 %v492, %v491
      %v520 = vpack.c.bf16 %v494, %v493
      %v521 = vpack.c.bf16 %v496, %v495
      %v522 = vpack.c.bf16 %v498, %v497
      %v523 = vpack.c.bf16 %v500, %v499
      %v524 = vpack.c.bf16 %v502, %v501
      %v525 = vpack.c.bf16 %v504, %v503
      %v526 = vpack.c.bf16 %v506, %v505
      %v527 = vpack.c.bf16 %v508, %v507
      %v528 = vpack.c.bf16 %v510, %v509
      %v529 = vpack.c.bf16 %v512, %v511
      %v530 = vpack.c.bf16 %v514, %v513
      %s531 = scalar_lea.vmem %s1, 4
      %v532 = vld [vmem:[%s531] sm:$0xf]
      %v534 = vsel %vm280, %v515, 0
      %v537 = vsel %vm280, %v516, 0
      %v540 = vsel %vm280, %v517, 0
      %v543 = vsel %vm280, %v518, 0
      %v546 = vsel %vm280, %v519, 0
      %v549 = vsel %vm280, %v520, 0
      %v552 = vsel %vm280, %v521, 0
      %v555 = vsel %vm280, %v522, 0
      %v558 = vsel %vm280, %v523, 0
      %v561 = vsel %vm280, %v524, 0
      %v564 = vsel %vm280, %v525, 0
      %v567 = vsel %vm280, %v526, 0
      %v570 = vsel %vm280, %v527, 0
      %v573 = vsel %vm280, %v528, 0
      %v576 = vsel %vm280, %v529, 0
      %v579 = vsel %vm280, %v530, 0
      %vm581 = vcmask 1043456
      %v583 = vsel %vm581, %v532, 0
      %585 = vmatpush.bf16.msra.mxu0 0
      %586 = vmatpush.bf16.msra.mxu0 0
      %587 = vmatpush.bf16.msra.mxu0 0
      %588 = vmatpush.bf16.msra.mxu0 0
      %589 = vmatpush.bf16.msra.mxu0 0
      %590 = vmatpush.bf16.msra.mxu0 0
      %591 = vmatpush.bf16.msra.mxu0 0
      %592 = vmatpush.bf16.msra.mxu0 %v583
      %593 = vmatmul.bf16.gmra.mxu0 %v534
      %v594 = vpop.f32.mrf.mxu0
      %v595 = vadd.f32 0.0, %v594
      %v596 = vpop.f32.mrf.mxu0
      %v597 = vadd.f32 0.0, %v596
      %598 = vmatmul.bf16.gmra.mxu0 %v537
      %v599 = vpop.f32.mrf.mxu0
      %v600 = vadd.f32 0.0, %v599
      %v601 = vpop.f32.mrf.mxu0
      %v602 = vadd.f32 0.0, %v601
      %603 = vmatmul.bf16.gmra.mxu0 %v540
      %v604 = vpop.f32.mrf.mxu0
      %v605 = vadd.f32 0.0, %v604
      %v606 = vpop.f32.mrf.mxu0
      %v607 = vadd.f32 0.0, %v606
      %608 = vmatmul.bf16.gmra.mxu0 %v543
      %v609 = vpop.f32.mrf.mxu0
      %v610 = vadd.f32 0.0, %v609
      %v611 = vpop.f32.mrf.mxu0
      %v612 = vadd.f32 0.0, %v611
      %613 = vmatmul.bf16.gmra.mxu0 %v546
      %v614 = vpop.f32.mrf.mxu0
      %v615 = vadd.f32 0.0, %v614
      %v616 = vpop.f32.mrf.mxu0
      %v617 = vadd.f32 0.0, %v616
      %618 = vmatmul.bf16.gmra.mxu0 %v549
      %v619 = vpop.f32.mrf.mxu0
      %v620 = vadd.f32 0.0, %v619
      %v621 = vpop.f32.mrf.mxu0
      %v622 = vadd.f32 0.0, %v621
      %623 = vmatmul.bf16.gmra.mxu0 %v552
      %v624 = vpop.f32.mrf.mxu0
      %v625 = vadd.f32 0.0, %v624
      %v626 = vpop.f32.mrf.mxu0
      %v627 = vadd.f32 0.0, %v626
      %628 = vmatmul.bf16.gmra.mxu0 %v555
      %v629 = vpop.f32.mrf.mxu0
      %v630 = vadd.f32 0.0, %v629
      %v631 = vpop.f32.mrf.mxu0
      %v632 = vadd.f32 0.0, %v631
      %633 = vmatmul.bf16.gmra.mxu0 %v558
      %v634 = vpop.f32.mrf.mxu0
      %v635 = vadd.f32 0.0, %v634
      %v636 = vpop.f32.mrf.mxu0
      %v637 = vadd.f32 0.0, %v636
      %638 = vmatmul.bf16.gmra.mxu0 %v561
      %v639 = vpop.f32.mrf.mxu0
      %v640 = vadd.f32 0.0, %v639
      %v641 = vpop.f32.mrf.mxu0
      %v642 = vadd.f32 0.0, %v641
      %643 = vmatmul.bf16.gmra.mxu0 %v564
      %v644 = vpop.f32.mrf.mxu0
      %v645 = vadd.f32 0.0, %v644
      %v646 = vpop.f32.mrf.mxu0
      %v647 = vadd.f32 0.0, %v646
      %648 = vmatmul.bf16.gmra.mxu0 %v567
      %v649 = vpop.f32.mrf.mxu0
      %v650 = vadd.f32 0.0, %v649
      %v651 = vpop.f32.mrf.mxu0
      %v652 = vadd.f32 0.0, %v651
      %653 = vmatmul.bf16.gmra.mxu0 %v570
      %v654 = vpop.f32.mrf.mxu0
      %v655 = vadd.f32 0.0, %v654
      %v656 = vpop.f32.mrf.mxu0
      %v657 = vadd.f32 0.0, %v656
      %658 = vmatmul.bf16.gmra.mxu0 %v573
      %v659 = vpop.f32.mrf.mxu0
      %v660 = vadd.f32 0.0, %v659
      %v661 = vpop.f32.mrf.mxu0
      %v662 = vadd.f32 0.0, %v661
      %663 = vmatmul.bf16.gmra.mxu0 %v576
      %v664 = vpop.f32.mrf.mxu0
      %v665 = vadd.f32 0.0, %v664
      %v666 = vpop.f32.mrf.mxu0
      %v667 = vadd.f32 0.0, %v666
      %668 = vmatmul.bf16.gmra.mxu0 %v579
      %v669 = vpop.f32.mrf.mxu0
      %v670 = vadd.f32 0.0, %v669
      %v671 = vpop.f32.mrf.mxu0
      %v672 = vadd.f32 0.0, %v671
      %673 = vdwg.mxu0
      %v675 = vsel %vm280, %v466, 0
      %v678 = vsel %vm280, %v467, 0
      %v681 = vsel %vm280, %v468, 0
      %v684 = vsel %vm280, %v469, 0
      %v687 = vsel %vm280, %v470, 0
      %v690 = vsel %vm280, %v471, 0
      %v693 = vsel %vm280, %v472, 0
      %v696 = vsel %vm280, %v473, 0
      %v699 = vsel %vm280, %v474, 0
      %v702 = vsel %vm280, %v475, 0
      %v705 = vsel %vm280, %v476, 0
      %v708 = vsel %vm280, %v477, 0
      %v711 = vsel %vm280, %v478, 0
      %v714 = vsel %vm280, %v479, 0
      %v717 = vsel %vm280, %v480, 0
      %v720 = vsel %vm280, %v481, 0
      %v723 = vsel %vm581, %v482, 0
      %725 = vmatpush.bf16.msra.mxu0 0
      %726 = vmatpush.bf16.msra.mxu0 0
      %727 = vmatpush.bf16.msra.mxu0 0
      %728 = vmatpush.bf16.msra.mxu0 0
      %729 = vmatpush.bf16.msra.mxu0 0
      %730 = vmatpush.bf16.msra.mxu0 0
      %731 = vmatpush.bf16.msra.mxu0 0
      %732 = vmatpush.bf16.msra.mxu0 %v723
      %733 = vmatmul.bf16.gmra.mxu0 %v675
      %v734 = vpop.f32.mrf.mxu0
      %v735 = vadd.f32 %v595, %v734
      %v736 = vpop.f32.mrf.mxu0
      %v737 = vadd.f32 %v597, %v736
      %738 = vmatmul.bf16.gmra.mxu0 %v678
      %v739 = vpop.f32.mrf.mxu0
      %v740 = vadd.f32 %v600, %v739
      %v741 = vpop.f32.mrf.mxu0
      %v742 = vadd.f32 %v602, %v741
      %743 = vmatmul.bf16.gmra.mxu0 %v681
      %v744 = vpop.f32.mrf.mxu0
      %v745 = vadd.f32 %v605, %v744
      %v746 = vpop.f32.mrf.mxu0
      %v747 = vadd.f32 %v607, %v746
      %748 = vmatmul.bf16.gmra.mxu0 %v684
      %v749 = vpop.f32.mrf.mxu0
      %v750 = vadd.f32 %v610, %v749
      %v751 = vpop.f32.mrf.mxu0
      %v752 = vadd.f32 %v612, %v751
      %753 = vmatmul.bf16.gmra.mxu0 %v687
      %v754 = vpop.f32.mrf.mxu0
      %v755 = vadd.f32 %v615, %v754
      %v756 = vpop.f32.mrf.mxu0
      %v757 = vadd.f32 %v617, %v756
      %758 = vmatmul.bf16.gmra.mxu0 %v690
      %v759 = vpop.f32.mrf.mxu0
      %v760 = vadd.f32 %v620, %v759
      %v761 = vpop.f32.mrf.mxu0
      %v762 = vadd.f32 %v622, %v761
      %763 = vmatmul.bf16.gmra.mxu0 %v693
      %v764 = vpop.f32.mrf.mxu0
      %v765 = vadd.f32 %v625, %v764
      %v766 = vpop.f32.mrf.mxu0
      %v767 = vadd.f32 %v627, %v766
      %768 = vmatmul.bf16.gmra.mxu0 %v696
      %v769 = vpop.f32.mrf.mxu0
      %v770 = vadd.f32 %v630, %v769
      %v771 = vpop.f32.mrf.mxu0
      %v772 = vadd.f32 %v632, %v771
      %773 = vmatmul.bf16.gmra.mxu0 %v699
      %v774 = vpop.f32.mrf.mxu0
      %v775 = vadd.f32 %v635, %v774
      %v776 = vpop.f32.mrf.mxu0
      %v777 = vadd.f32 %v637, %v776
      %778 = vmatmul.bf16.gmra.mxu0 %v702
      %v779 = vpop.f32.mrf.mxu0
      %v780 = vadd.f32 %v640, %v779
      %v781 = vpop.f32.mrf.mxu0
      %v782 = vadd.f32 %v642, %v781
      %783 = vmatmul.bf16.gmra.mxu0 %v705
      %v784 = vpop.f32.mrf.mxu0
      %v785 = vadd.f32 %v645, %v784
      %v786 = vpop.f32.mrf.mxu0
      %v787 = vadd.f32 %v647, %v786
      %788 = vmatmul.bf16.gmra.mxu0 %v708
      %v789 = vpop.f32.mrf.mxu0
      %v790 = vadd.f32 %v650, %v789
      %v791 = vpop.f32.mrf.mxu0
      %v792 = vadd.f32 %v652, %v791
      %793 = vmatmul.bf16.gmra.mxu0 %v711
      %v794 = vpop.f32.mrf.mxu0
      %v795 = vadd.f32 %v655, %v794
      %v796 = vpop.f32.mrf.mxu0
      %v797 = vadd.f32 %v657, %v796
      %798 = vmatmul.bf16.gmra.mxu0 %v714
      %v799 = vpop.f32.mrf.mxu0
      %v800 = vadd.f32 %v660, %v799
      %v801 = vpop.f32.mrf.mxu0
      %v802 = vadd.f32 %v662, %v801
      %803 = vmatmul.bf16.gmra.mxu0 %v717
      %v804 = vpop.f32.mrf.mxu0
      %v805 = vadd.f32 %v665, %v804
      %v806 = vpop.f32.mrf.mxu0
      %v807 = vadd.f32 %v667, %v806
      %808 = vmatmul.bf16.gmra.mxu0 %v720
      %v809 = vpop.f32.mrf.mxu0
      %v810 = vadd.f32 %v670, %v809
      %v811 = vpop.f32.mrf.mxu0
      %v812 = vadd.f32 %v672, %v811
      %813 = vdwg.mxu0
      %v814 = vld [vmem:[#allocation2 + $0x2] sm:$0xff]
      %v815 = vld [vmem:[#allocation2 + $0xa] sm:$0xff]
      %v816 = vld [vmem:[#allocation2 + $0x1a] sm:$0xff]
      %v817 = vld [vmem:[#allocation2 + $0x22] sm:$0xff]
      %v818 = vld [vmem:[#allocation2 + $0x32] sm:$0xff]
      %v819 = vld [vmem:[#allocation2 + $0x3a] sm:$0xff]
      %v820 = vld [vmem:[#allocation2 + $0x4a] sm:$0xff]
      %v821 = vld [vmem:[#allocation2 + $0x52] sm:$0xff]
      %v822 = vld [vmem:[#allocation2 + $0x62] sm:$0xff]
      %v823 = vld [vmem:[#allocation2 + $0x6a] sm:$0xff]
      %v824 = vld [vmem:[#allocation2 + $0x7a] sm:$0xff]
      %v825 = vld [vmem:[#allocation2 + $0x82] sm:$0xff]
      %v826 = vld [vmem:[#allocation2 + $0x92] sm:$0xff]
      %v827 = vld [vmem:[#allocation2 + $0x9a] sm:$0xff]
      %v828 = vld [vmem:[#allocation2 + $0xaa] sm:$0xff]
      %v829 = vld [vmem:[#allocation2 + $0xb2] sm:$0xff]
      %v830 = vld [vmem:[#allocation2 + $0xc2] sm:$0xff]
      %v831 = vld [vmem:[#allocation2 + $0xca] sm:$0xff]
      %v832 = vld [vmem:[#allocation2 + $0xda] sm:$0xff]
      %v833 = vld [vmem:[#allocation2 + $0xe2] sm:$0xff]
      %v834 = vld [vmem:[#allocation2 + $0xf2] sm:$0xff]
      %v835 = vld [vmem:[#allocation2 + $0xfa] sm:$0xff]
      %v836 = vld [vmem:[#allocation2 + $0x10a] sm:$0xff]
      %v837 = vld [vmem:[#allocation2 + $0x112] sm:$0xff]
      %v838 = vld [vmem:[#allocation2 + $0x122] sm:$0xff]
      %v839 = vld [vmem:[#allocation2 + $0x12a] sm:$0xff]
      %v840 = vld [vmem:[#allocation2 + $0x13a] sm:$0xff]
      %v841 = vld [vmem:[#allocation2 + $0x142] sm:$0xff]
      %v842 = vld [vmem:[#allocation2 + $0x152] sm:$0xff]
      %v843 = vld [vmem:[#allocation2 + $0x15a] sm:$0xff]
      %v844 = vld [vmem:[#allocation2 + $0x16a] sm:$0xff]
      %v845 = vld [vmem:[#allocation2 + $0x172] sm:$0xff]
      %v846 = vpack.c.bf16 %v815, %v814
      %v847 = vpack.c.bf16 %v817, %v816
      %v848 = vpack.c.bf16 %v819, %v818
      %v849 = vpack.c.bf16 %v821, %v820
      %v850 = vpack.c.bf16 %v823, %v822
      %v851 = vpack.c.bf16 %v825, %v824
      %v852 = vpack.c.bf16 %v827, %v826
      %v853 = vpack.c.bf16 %v829, %v828
      %v854 = vpack.c.bf16 %v831, %v830
      %v855 = vpack.c.bf16 %v833, %v832
      %v856 = vpack.c.bf16 %v835, %v834
      %v857 = vpack.c.bf16 %v837, %v836
      %v858 = vpack.c.bf16 %v839, %v838
      %v859 = vpack.c.bf16 %v841, %v840
      %v860 = vpack.c.bf16 %v843, %v842
      %v861 = vpack.c.bf16 %v845, %v844
      %s862 = scalar_lea.vmem %s1, 8
      %v863 = vld [vmem:[%s862] sm:$0xf]
      %v865 = vsel %vm280, %v846, 0
      %v868 = vsel %vm280, %v847, 0
      %v871 = vsel %vm280, %v848, 0
      %v874 = vsel %vm280, %v849, 0
      %v877 = vsel %vm280, %v850, 0
      %v880 = vsel %vm280, %v851, 0
      %v883 = vsel %vm280, %v852, 0
      %v886 = vsel %vm280, %v853, 0
      %v889 = vsel %vm280, %v854, 0
      %v892 = vsel %vm280, %v855, 0
      %v895 = vsel %vm280, %v856, 0
      %v898 = vsel %vm280, %v857, 0
      %v901 = vsel %vm280, %v858, 0
      %v904 = vsel %vm280, %v859, 0
      %v907 = vsel %vm280, %v860, 0
      %v910 = vsel %vm280, %v861, 0
      %v913 = vsel %vm581, %v863, 0
      %915 = vmatpush.bf16.msra.mxu0 0
      %916 = vmatpush.bf16.msra.mxu0 0
      %917 = vmatpush.bf16.msra.mxu0 0
      %918 = vmatpush.bf16.msra.mxu0 0
      %919 = vmatpush.bf16.msra.mxu0 0
      %920 = vmatpush.bf16.msra.mxu0 0
      %921 = vmatpush.bf16.msra.mxu0 0
      %922 = vmatpush.bf16.msra.mxu0 %v913
      %923 = vmatmul.bf16.gmra.mxu0 %v865
      %v924 = vpop.f32.mrf.mxu0
      %v925 = vadd.f32 0.0, %v924
      %v926 = vpop.f32.mrf.mxu0
      %v927 = vadd.f32 0.0, %v926
      %928 = vmatmul.bf16.gmra.mxu0 %v868
      %v929 = vpop.f32.mrf.mxu0
      %v930 = vadd.f32 0.0, %v929
      %v931 = vpop.f32.mrf.mxu0
      %v932 = vadd.f32 0.0, %v931
      %933 = vmatmul.bf16.gmra.mxu0 %v871
      %v934 = vpop.f32.mrf.mxu0
      %v935 = vadd.f32 0.0, %v934
      %v936 = vpop.f32.mrf.mxu0
      %v937 = vadd.f32 0.0, %v936
      %938 = vmatmul.bf16.gmra.mxu0 %v874
      %v939 = vpop.f32.mrf.mxu0
      %v940 = vadd.f32 0.0, %v939
      %v941 = vpop.f32.mrf.mxu0
      %v942 = vadd.f32 0.0, %v941
      %943 = vmatmul.bf16.gmra.mxu0 %v877
      %v944 = vpop.f32.mrf.mxu0
      %v945 = vadd.f32 0.0, %v944
      %v946 = vpop.f32.mrf.mxu0
      %v947 = vadd.f32 0.0, %v946
      %948 = vmatmul.bf16.gmra.mxu0 %v880
      %v949 = vpop.f32.mrf.mxu0
      %v950 = vadd.f32 0.0, %v949
      %v951 = vpop.f32.mrf.mxu0
      %v952 = vadd.f32 0.0, %v951
      %953 = vmatmul.bf16.gmra.mxu0 %v883
      %v954 = vpop.f32.mrf.mxu0
      %v955 = vadd.f32 0.0, %v954
      %v956 = vpop.f32.mrf.mxu0
      %v957 = vadd.f32 0.0, %v956
      %958 = vmatmul.bf16.gmra.mxu0 %v886
      %v959 = vpop.f32.mrf.mxu0
      %v960 = vadd.f32 0.0, %v959
      %v961 = vpop.f32.mrf.mxu0
      %v962 = vadd.f32 0.0, %v961
      %963 = vmatmul.bf16.gmra.mxu0 %v889
      %v964 = vpop.f32.mrf.mxu0
      %v965 = vadd.f32 0.0, %v964
      %v966 = vpop.f32.mrf.mxu0
      %v967 = vadd.f32 0.0, %v966
      %968 = vmatmul.bf16.gmra.mxu0 %v892
      %v969 = vpop.f32.mrf.mxu0
      %v970 = vadd.f32 0.0, %v969
      %v971 = vpop.f32.mrf.mxu0
      %v972 = vadd.f32 0.0, %v971
      %973 = vmatmul.bf16.gmra.mxu0 %v895
      %v974 = vpop.f32.mrf.mxu0
      %v975 = vadd.f32 0.0, %v974
      %v976 = vpop.f32.mrf.mxu0
      %v977 = vadd.f32 0.0, %v976
      %978 = vmatmul.bf16.gmra.mxu0 %v898
      %v979 = vpop.f32.mrf.mxu0
      %v980 = vadd.f32 0.0, %v979
      %v981 = vpop.f32.mrf.mxu0
      %v982 = vadd.f32 0.0, %v981
      %983 = vmatmul.bf16.gmra.mxu0 %v901
      %v984 = vpop.f32.mrf.mxu0
      %v985 = vadd.f32 0.0, %v984
      %v986 = vpop.f32.mrf.mxu0
      %v987 = vadd.f32 0.0, %v986
      %988 = vmatmul.bf16.gmra.mxu0 %v904
      %v989 = vpop.f32.mrf.mxu0
      %v990 = vadd.f32 0.0, %v989
      %v991 = vpop.f32.mrf.mxu0
      %v992 = vadd.f32 0.0, %v991
      %993 = vmatmul.bf16.gmra.mxu0 %v907
      %v994 = vpop.f32.mrf.mxu0
      %v995 = vadd.f32 0.0, %v994
      %v996 = vpop.f32.mrf.mxu0
      %v997 = vadd.f32 0.0, %v996
      %998 = vmatmul.bf16.gmra.mxu0 %v910
      %v999 = vpop.f32.mrf.mxu0
      %v1000 = vadd.f32 0.0, %v999
      %v1001 = vpop.f32.mrf.mxu0
      %v1002 = vadd.f32 0.0, %v1001
      %1003 = vdwg.mxu0
      %v1004 = vadd.f32 %v735, %v925
      %v1005 = vadd.f32 %v737, %v927
      %v1006 = vadd.f32 %v740, %v930
      %v1007 = vadd.f32 %v742, %v932
      %v1008 = vadd.f32 %v745, %v935
      %v1009 = vadd.f32 %v747, %v937
      %v1010 = vadd.f32 %v750, %v940
      %v1011 = vadd.f32 %v752, %v942
      %v1012 = vadd.f32 %v755, %v945
      %v1013 = vadd.f32 %v757, %v947
      %v1014 = vadd.f32 %v760, %v950
      %v1015 = vadd.f32 %v762, %v952
      %v1016 = vadd.f32 %v765, %v955
      %v1017 = vadd.f32 %v767, %v957
      %v1018 = vadd.f32 %v770, %v960
      %v1019 = vadd.f32 %v772, %v962
      %v1020 = vadd.f32 %v775, %v965
      %v1021 = vadd.f32 %v777, %v967
      %v1022 = vadd.f32 %v780, %v970
      %v1023 = vadd.f32 %v782, %v972
      %v1024 = vadd.f32 %v785, %v975
      %v1025 = vadd.f32 %v787, %v977
      %v1026 = vadd.f32 %v790, %v980
      %v1027 = vadd.f32 %v792, %v982
      %v1028 = vadd.f32 %v795, %v985
      %v1029 = vadd.f32 %v797, %v987
      %v1030 = vadd.f32 %v800, %v990
      %v1031 = vadd.f32 %v802, %v992
      %v1032 = vadd.f32 %v805, %v995
      %v1033 = vadd.f32 %v807, %v997
      %v1034 = vadd.f32 %v810, %v1000
      %v1035 = vadd.f32 %v812, %v1002
      %v1036 = vld [vmem:[%s401] sm:$0xff]
      %v1037 = vld [vmem:[%s401 + $0x8] sm:$0xff]
      %v1038 = vld [vmem:[%s401 + $0x18] sm:$0xff]
      %v1039 = vld [vmem:[%s401 + $0x20] sm:$0xff]
      %v1040 = vld [vmem:[%s401 + $0x30] sm:$0xff]
      %v1041 = vld [vmem:[%s401 + $0x38] sm:$0xff]
      %v1042 = vld [vmem:[%s401 + $0x48] sm:$0xff]
      %v1043 = vld [vmem:[%s401 + $0x50] sm:$0xff]
      %v1044 = vld [vmem:[%s401 + $0x60] sm:$0xff]
      %v1045 = vld [vmem:[%s401 + $0x68] sm:$0xff]
      %v1046 = vld [vmem:[%s401 + $0x78] sm:$0xff]
      %v1047 = vld [vmem:[%s401 + $0x80] sm:$0xff]
      %v1048 = vld [vmem:[%s401 + $0x90] sm:$0xff]
      %v1049 = vld [vmem:[%s401 + $0x98] sm:$0xff]
      %v1050 = vld [vmem:[%s401 + $0xa8] sm:$0xff]
      %v1051 = vld [vmem:[%s401 + $0xb0] sm:$0xff]
      %v1052 = vld [vmem:[%s401 + $0xc0] sm:$0xff]
      %v1053 = vld [vmem:[%s401 + $0xc8] sm:$0xff]
      %v1054 = vld [vmem:[%s401 + $0xd8] sm:$0xff]
      %v1055 = vld [vmem:[%s401 + $0xe0] sm:$0xff]
      %v1056 = vld [vmem:[%s401 + $0xf0] sm:$0xff]
      %v1057 = vld [vmem:[%s401 + $0xf8] sm:$0xff]
      %v1058 = vld [vmem:[%s401 + $0x108] sm:$0xff]
      %v1059 = vld [vmem:[%s401 + $0x110] sm:$0xff]
      %v1060 = vld [vmem:[%s401 + $0x120] sm:$0xff]
      %v1061 = vld [vmem:[%s401 + $0x128] sm:$0xff]
      %v1062 = vld [vmem:[%s401 + $0x138] sm:$0xff]
      %v1063 = vld [vmem:[%s401 + $0x140] sm:$0xff]
      %v1064 = vld [vmem:[%s401 + $0x150] sm:$0xff]
      %v1065 = vld [vmem:[%s401 + $0x158] sm:$0xff]
      %v1066 = vld [vmem:[%s401 + $0x168] sm:$0xff]
      %v1067 = vld [vmem:[%s401 + $0x170] sm:$0xff]
      %v1068 = vpack.c.bf16 %v1037, %v1036
      %v1069 = vpack.c.bf16 %v1039, %v1038
      %v1070 = vpack.c.bf16 %v1041, %v1040
      %v1071 = vpack.c.bf16 %v1043, %v1042
      %v1072 = vpack.c.bf16 %v1045, %v1044
      %v1073 = vpack.c.bf16 %v1047, %v1046
      %v1074 = vpack.c.bf16 %v1049, %v1048
      %v1075 = vpack.c.bf16 %v1051, %v1050
      %v1076 = vpack.c.bf16 %v1053, %v1052
      %v1077 = vpack.c.bf16 %v1055, %v1054
      %v1078 = vpack.c.bf16 %v1057, %v1056
      %v1079 = vpack.c.bf16 %v1059, %v1058
      %v1080 = vpack.c.bf16 %v1061, %v1060
      %v1081 = vpack.c.bf16 %v1063, %v1062
      %v1082 = vpack.c.bf16 %v1065, %v1064
      %v1083 = vpack.c.bf16 %v1067, %v1066
      %s1084 = scalar_lea.vmem %s1, 12
      %v1085 = vld [vmem:[%s1084] sm:$0xf]
      %v1087 = vsel %vm280, %v1068, 0
      %v1090 = vsel %vm280, %v1069, 0
      %v1093 = vsel %vm280, %v1070, 0
      %v1096 = vsel %vm280, %v1071, 0
      %v1099 = vsel %vm280, %v1072, 0
      %v1102 = vsel %vm280, %v1073, 0
      %v1105 = vsel %vm280, %v1074, 0
      %v1108 = vsel %vm280, %v1075, 0
      %v1111 = vsel %vm280, %v1076, 0
      %v1114 = vsel %vm280, %v1077, 0
      %v1117 = vsel %vm280, %v1078, 0
      %v1120 = vsel %vm280, %v1079, 0
      %v1123 = vsel %vm280, %v1080, 0
      %v1126 = vsel %vm280, %v1081, 0
      %v1129 = vsel %vm280, %v1082, 0
      %v1132 = vsel %vm280, %v1083, 0
      %v1135 = vsel %vm581, %v1085, 0
      %1137 = vmatpush.bf16.msra.mxu0 0
      %1138 = vmatpush.bf16.msra.mxu0 0
      %1139 = vmatpush.bf16.msra.mxu0 0
      %1140 = vmatpush.bf16.msra.mxu0 0
      %1141 = vmatpush.bf16.msra.mxu0 0
      %1142 = vmatpush.bf16.msra.mxu0 0
      %1143 = vmatpush.bf16.msra.mxu0 0
      %1144 = vmatpush.bf16.msra.mxu0 %v1135
      %1145 = vmatmul.bf16.gmra.mxu0 %v1087
      %v1146 = vpop.f32.mrf.mxu0
      %v1147 = vadd.f32 0.0, %v1146
      %v1148 = vpop.f32.mrf.mxu0
      %v1149 = vadd.f32 0.0, %v1148
      %1150 = vmatmul.bf16.gmra.mxu0 %v1090
      %v1151 = vpop.f32.mrf.mxu0
      %v1152 = vadd.f32 0.0, %v1151
      %v1153 = vpop.f32.mrf.mxu0
      %v1154 = vadd.f32 0.0, %v1153
      %1155 = vmatmul.bf16.gmra.mxu0 %v1093
      %v1156 = vpop.f32.mrf.mxu0
      %v1157 = vadd.f32 0.0, %v1156
      %v1158 = vpop.f32.mrf.mxu0
      %v1159 = vadd.f32 0.0, %v1158
      %1160 = vmatmul.bf16.gmra.mxu0 %v1096
      %v1161 = vpop.f32.mrf.mxu0
      %v1162 = vadd.f32 0.0, %v1161
      %v1163 = vpop.f32.mrf.mxu0
      %v1164 = vadd.f32 0.0, %v1163
      %1165 = vmatmul.bf16.gmra.mxu0 %v1099
      %v1166 = vpop.f32.mrf.mxu0
      %v1167 = vadd.f32 0.0, %v1166
      %v1168 = vpop.f32.mrf.mxu0
      %v1169 = vadd.f32 0.0, %v1168
      %1170 = vmatmul.bf16.gmra.mxu0 %v1102
      %v1171 = vpop.f32.mrf.mxu0
      %v1172 = vadd.f32 0.0, %v1171
      %v1173 = vpop.f32.mrf.mxu0
      %v1174 = vadd.f32 0.0, %v1173
      %1175 = vmatmul.bf16.gmra.mxu0 %v1105
      %v1176 = vpop.f32.mrf.mxu0
      %v1177 = vadd.f32 0.0, %v1176
      %v1178 = vpop.f32.mrf.mxu0
      %v1179 = vadd.f32 0.0, %v1178
      %1180 = vmatmul.bf16.gmra.mxu0 %v1108
      %v1181 = vpop.f32.mrf.mxu0
      %v1182 = vadd.f32 0.0, %v1181
      %v1183 = vpop.f32.mrf.mxu0
      %v1184 = vadd.f32 0.0, %v1183
      %1185 = vmatmul.bf16.gmra.mxu0 %v1111
      %v1186 = vpop.f32.mrf.mxu0
      %v1187 = vadd.f32 0.0, %v1186
      %v1188 = vpop.f32.mrf.mxu0
      %v1189 = vadd.f32 0.0, %v1188
      %1190 = vmatmul.bf16.gmra.mxu0 %v1114
      %v1191 = vpop.f32.mrf.mxu0
      %v1192 = vadd.f32 0.0, %v1191
      %v1193 = vpop.f32.mrf.mxu0
      %v1194 = vadd.f32 0.0, %v1193
      %1195 = vmatmul.bf16.gmra.mxu0 %v1117
      %v1196 = vpop.f32.mrf.mxu0
      %v1197 = vadd.f32 0.0, %v1196
      %v1198 = vpop.f32.mrf.mxu0
      %v1199 = vadd.f32 0.0, %v1198
      %1200 = vmatmul.bf16.gmra.mxu0 %v1120
      %v1201 = vpop.f32.mrf.mxu0
      %v1202 = vadd.f32 0.0, %v1201
      %v1203 = vpop.f32.mrf.mxu0
      %v1204 = vadd.f32 0.0, %v1203
      %1205 = vmatmul.bf16.gmra.mxu0 %v1123
      %v1206 = vpop.f32.mrf.mxu0
      %v1207 = vadd.f32 0.0, %v1206
      %v1208 = vpop.f32.mrf.mxu0
      %v1209 = vadd.f32 0.0, %v1208
      %1210 = vmatmul.bf16.gmra.mxu0 %v1126
      %v1211 = vpop.f32.mrf.mxu0
      %v1212 = vadd.f32 0.0, %v1211
      %v1213 = vpop.f32.mrf.mxu0
      %v1214 = vadd.f32 0.0, %v1213
      %1215 = vmatmul.bf16.gmra.mxu0 %v1129
      %v1216 = vpop.f32.mrf.mxu0
      %v1217 = vadd.f32 0.0, %v1216
      %v1218 = vpop.f32.mrf.mxu0
      %v1219 = vadd.f32 0.0, %v1218
      %1220 = vmatmul.bf16.gmra.mxu0 %v1132
      %v1221 = vpop.f32.mrf.mxu0
      %v1222 = vadd.f32 0.0, %v1221
      %v1223 = vpop.f32.mrf.mxu0
      %v1224 = vadd.f32 0.0, %v1223
      %1225 = vdwg.mxu0
      %v1226 = vadd.f32 %v1004, %v1147
      %v1227 = vadd.f32 %v1005, %v1149
      %v1228 = vadd.f32 %v1006, %v1152
      %v1229 = vadd.f32 %v1007, %v1154
      %v1230 = vadd.f32 %v1008, %v1157
      %v1231 = vadd.f32 %v1009, %v1159
      %v1232 = vadd.f32 %v1010, %v1162
      %v1233 = vadd.f32 %v1011, %v1164
      %v1234 = vadd.f32 %v1012, %v1167
      %v1235 = vadd.f32 %v1013, %v1169
      %v1236 = vadd.f32 %v1014, %v1172
      %v1237 = vadd.f32 %v1015, %v1174
      %v1238 = vadd.f32 %v1016, %v1177
      %v1239 = vadd.f32 %v1017, %v1179
      %v1240 = vadd.f32 %v1018, %v1182
      %v1241 = vadd.f32 %v1019, %v1184
      %v1242 = vadd.f32 %v1020, %v1187
      %v1243 = vadd.f32 %v1021, %v1189
      %v1244 = vadd.f32 %v1022, %v1192
      %v1245 = vadd.f32 %v1023, %v1194
      %v1246 = vadd.f32 %v1024, %v1197
      %v1247 = vadd.f32 %v1025, %v1199
      %v1248 = vadd.f32 %v1026, %v1202
      %v1249 = vadd.f32 %v1027, %v1204
      %v1250 = vadd.f32 %v1028, %v1207
      %v1251 = vadd.f32 %v1029, %v1209
      %v1252 = vadd.f32 %v1030, %v1212
      %v1253 = vadd.f32 %v1031, %v1214
      %v1254 = vadd.f32 %v1032, %v1217
      %v1255 = vadd.f32 %v1033, %v1219
      %v1256 = vadd.f32 %v1034, %v1222
      %v1257 = vadd.f32 %v1035, %v1224
      %v1258 = vld [vmem:[%s401 + $0x1] sm:$0xff]
      %v1259 = vld [vmem:[%s401 + $0x9] sm:$0xff]
      %v1260 = vld [vmem:[%s401 + $0x19] sm:$0xff]
      %v1261 = vld [vmem:[%s401 + $0x21] sm:$0xff]
      %v1262 = vld [vmem:[%s401 + $0x31] sm:$0xff]
      %v1263 = vld [vmem:[%s401 + $0x39] sm:$0xff]
      %v1264 = vld [vmem:[%s401 + $0x49] sm:$0xff]
      %v1265 = vld [vmem:[%s401 + $0x51] sm:$0xff]
      %v1266 = vld [vmem:[%s401 + $0x61] sm:$0xff]
      %v1267 = vld [vmem:[%s401 + $0x69] sm:$0xff]
      %v1268 = vld [vmem:[%s401 + $0x79] sm:$0xff]
      %v1269 = vld [vmem:[%s401 + $0x81] sm:$0xff]
      %v1270 = vld [vmem:[%s401 + $0x91] sm:$0xff]
      %v1271 = vld [vmem:[%s401 + $0x99] sm:$0xff]
      %v1272 = vld [vmem:[%s401 + $0xa9] sm:$0xff]
      %v1273 = vld [vmem:[%s401 + $0xb1] sm:$0xff]
      %v1274 = vld [vmem:[%s401 + $0xc1] sm:$0xff]
      %v1275 = vld [vmem:[%s401 + $0xc9] sm:$0xff]
      %v1276 = vld [vmem:[%s401 + $0xd9] sm:$0xff]
      %v1277 = vld [vmem:[%s401 + $0xe1] sm:$0xff]
      %v1278 = vld [vmem:[%s401 + $0xf1] sm:$0xff]
      %v1279 = vld [vmem:[%s401 + $0xf9] sm:$0xff]
      %v1280 = vld [vmem:[%s401 + $0x109] sm:$0xff]
      %v1281 = vld [vmem:[%s401 + $0x111] sm:$0xff]
      %v1282 = vld [vmem:[%s401 + $0x121] sm:$0xff]
      %v1283 = vld [vmem:[%s401 + $0x129] sm:$0xff]
      %v1284 = vld [vmem:[%s401 + $0x139] sm:$0xff]
      %v1285 = vld [vmem:[%s401 + $0x141] sm:$0xff]
      %v1286 = vld [vmem:[%s401 + $0x151] sm:$0xff]
      %v1287 = vld [vmem:[%s401 + $0x159] sm:$0xff]
      %v1288 = vld [vmem:[%s401 + $0x169] sm:$0xff]
      %v1289 = vld [vmem:[%s401 + $0x171] sm:$0xff]
      %v1290 = vpack.c.bf16 %v1259, %v1258
      %v1291 = vpack.c.bf16 %v1261, %v1260
      %v1292 = vpack.c.bf16 %v1263, %v1262
      %v1293 = vpack.c.bf16 %v1265, %v1264
      %v1294 = vpack.c.bf16 %v1267, %v1266
      %v1295 = vpack.c.bf16 %v1269, %v1268
      %v1296 = vpack.c.bf16 %v1271, %v1270
      %v1297 = vpack.c.bf16 %v1273, %v1272
      %v1298 = vpack.c.bf16 %v1275, %v1274
      %v1299 = vpack.c.bf16 %v1277, %v1276
      %v1300 = vpack.c.bf16 %v1279, %v1278
      %v1301 = vpack.c.bf16 %v1281, %v1280
      %v1302 = vpack.c.bf16 %v1283, %v1282
      %v1303 = vpack.c.bf16 %v1285, %v1284
      %v1304 = vpack.c.bf16 %v1287, %v1286
      %v1305 = vpack.c.bf16 %v1289, %v1288
      %s1306 = scalar_lea.vmem %s1, 16
      %v1307 = vld [vmem:[%s1306] sm:$0xf]
      %v1309 = vsel %vm280, %v1290, 0
      %v1312 = vsel %vm280, %v1291, 0
      %v1315 = vsel %vm280, %v1292, 0
      %v1318 = vsel %vm280, %v1293, 0
      %v1321 = vsel %vm280, %v1294, 0
      %v1324 = vsel %vm280, %v1295, 0
      %v1327 = vsel %vm280, %v1296, 0
      %v1330 = vsel %vm280, %v1297, 0
      %v1333 = vsel %vm280, %v1298, 0
      %v1336 = vsel %vm280, %v1299, 0
      %v1339 = vsel %vm280, %v1300, 0
      %v1342 = vsel %vm280, %v1301, 0
      %v1345 = vsel %vm280, %v1302, 0
      %v1348 = vsel %vm280, %v1303, 0
      %v1351 = vsel %vm280, %v1304, 0
      %v1354 = vsel %vm280, %v1305, 0
      %v1357 = vsel %vm581, %v1307, 0
      %1359 = vmatpush.bf16.msra.mxu0 0
      %1360 = vmatpush.bf16.msra.mxu0 0
      %1361 = vmatpush.bf16.msra.mxu0 0
      %1362 = vmatpush.bf16.msra.mxu0 0
      %1363 = vmatpush.bf16.msra.mxu0 0
      %1364 = vmatpush.bf16.msra.mxu0 0
      %1365 = vmatpush.bf16.msra.mxu0 0
      %1366 = vmatpush.bf16.msra.mxu0 %v1357
      %1367 = vmatmul.bf16.gmra.mxu0 %v1309
      %v1368 = vpop.f32.mrf.mxu0
      %v1369 = vadd.f32 0.0, %v1368
      %v1370 = vpop.f32.mrf.mxu0
      %v1371 = vadd.f32 0.0, %v1370
      %1372 = vmatmul.bf16.gmra.mxu0 %v1312
      %v1373 = vpop.f32.mrf.mxu0
      %v1374 = vadd.f32 0.0, %v1373
      %v1375 = vpop.f32.mrf.mxu0
      %v1376 = vadd.f32 0.0, %v1375
      %1377 = vmatmul.bf16.gmra.mxu0 %v1315
      %v1378 = vpop.f32.mrf.mxu0
      %v1379 = vadd.f32 0.0, %v1378
      %v1380 = vpop.f32.mrf.mxu0
      %v1381 = vadd.f32 0.0, %v1380
      %1382 = vmatmul.bf16.gmra.mxu0 %v1318
      %v1383 = vpop.f32.mrf.mxu0
      %v1384 = vadd.f32 0.0, %v1383
      %v1385 = vpop.f32.mrf.mxu0
      %v1386 = vadd.f32 0.0, %v1385
      %1387 = vmatmul.bf16.gmra.mxu0 %v1321
      %v1388 = vpop.f32.mrf.mxu0
      %v1389 = vadd.f32 0.0, %v1388
      %v1390 = vpop.f32.mrf.mxu0
      %v1391 = vadd.f32 0.0, %v1390
      %1392 = vmatmul.bf16.gmra.mxu0 %v1324
      %v1393 = vpop.f32.mrf.mxu0
      %v1394 = vadd.f32 0.0, %v1393
      %v1395 = vpop.f32.mrf.mxu0
      %v1396 = vadd.f32 0.0, %v1395
      %1397 = vmatmul.bf16.gmra.mxu0 %v1327
      %v1398 = vpop.f32.mrf.mxu0
      %v1399 = vadd.f32 0.0, %v1398
      %v1400 = vpop.f32.mrf.mxu0
      %v1401 = vadd.f32 0.0, %v1400
      %1402 = vmatmul.bf16.gmra.mxu0 %v1330
      %v1403 = vpop.f32.mrf.mxu0
      %v1404 = vadd.f32 0.0, %v1403
      %v1405 = vpop.f32.mrf.mxu0
      %v1406 = vadd.f32 0.0, %v1405
      %1407 = vmatmul.bf16.gmra.mxu0 %v1333
      %v1408 = vpop.f32.mrf.mxu0
      %v1409 = vadd.f32 0.0, %v1408
      %v1410 = vpop.f32.mrf.mxu0
      %v1411 = vadd.f32 0.0, %v1410
      %1412 = vmatmul.bf16.gmra.mxu0 %v1336
      %v1413 = vpop.f32.mrf.mxu0
      %v1414 = vadd.f32 0.0, %v1413
      %v1415 = vpop.f32.mrf.mxu0
      %v1416 = vadd.f32 0.0, %v1415
      %1417 = vmatmul.bf16.gmra.mxu0 %v1339
      %v1418 = vpop.f32.mrf.mxu0
      %v1419 = vadd.f32 0.0, %v1418
      %v1420 = vpop.f32.mrf.mxu0
      %v1421 = vadd.f32 0.0, %v1420
      %1422 = vmatmul.bf16.gmra.mxu0 %v1342
      %v1423 = vpop.f32.mrf.mxu0
      %v1424 = vadd.f32 0.0, %v1423
      %v1425 = vpop.f32.mrf.mxu0
      %v1426 = vadd.f32 0.0, %v1425
      %1427 = vmatmul.bf16.gmra.mxu0 %v1345
      %v1428 = vpop.f32.mrf.mxu0
      %v1429 = vadd.f32 0.0, %v1428
      %v1430 = vpop.f32.mrf.mxu0
      %v1431 = vadd.f32 0.0, %v1430
      %1432 = vmatmul.bf16.gmra.mxu0 %v1348
      %v1433 = vpop.f32.mrf.mxu0
      %v1434 = vadd.f32 0.0, %v1433
      %v1435 = vpop.f32.mrf.mxu0
      %v1436 = vadd.f32 0.0, %v1435
      %1437 = vmatmul.bf16.gmra.mxu0 %v1351
      %v1438 = vpop.f32.mrf.mxu0
      %v1439 = vadd.f32 0.0, %v1438
      %v1440 = vpop.f32.mrf.mxu0
      %v1441 = vadd.f32 0.0, %v1440
      %1442 = vmatmul.bf16.gmra.mxu0 %v1354
      %v1443 = vpop.f32.mrf.mxu0
      %v1444 = vadd.f32 0.0, %v1443
      %v1445 = vpop.f32.mrf.mxu0
      %v1446 = vadd.f32 0.0, %v1445
      %1447 = vdwg.mxu0
      %v1448 = vadd.f32 %v1226, %v1369
      %v1449 = vadd.f32 %v1227, %v1371
      %v1450 = vadd.f32 %v1228, %v1374
      %v1451 = vadd.f32 %v1229, %v1376
      %v1452 = vadd.f32 %v1230, %v1379
      %v1453 = vadd.f32 %v1231, %v1381
      %v1454 = vadd.f32 %v1232, %v1384
      %v1455 = vadd.f32 %v1233, %v1386
      %v1456 = vadd.f32 %v1234, %v1389
      %v1457 = vadd.f32 %v1235, %v1391
      %v1458 = vadd.f32 %v1236, %v1394
      %v1459 = vadd.f32 %v1237, %v1396
      %v1460 = vadd.f32 %v1238, %v1399
      %v1461 = vadd.f32 %v1239, %v1401
      %v1462 = vadd.f32 %v1240, %v1404
      %v1463 = vadd.f32 %v1241, %v1406
      %v1464 = vadd.f32 %v1242, %v1409
      %v1465 = vadd.f32 %v1243, %v1411
      %v1466 = vadd.f32 %v1244, %v1414
      %v1467 = vadd.f32 %v1245, %v1416
      %v1468 = vadd.f32 %v1246, %v1419
      %v1469 = vadd.f32 %v1247, %v1421
      %v1470 = vadd.f32 %v1248, %v1424
      %v1471 = vadd.f32 %v1249, %v1426
      %v1472 = vadd.f32 %v1250, %v1429
      %v1473 = vadd.f32 %v1251, %v1431
      %v1474 = vadd.f32 %v1252, %v1434
      %v1475 = vadd.f32 %v1253, %v1436
      %v1476 = vadd.f32 %v1254, %v1439
      %v1477 = vadd.f32 %v1255, %v1441
      %v1478 = vadd.f32 %v1256, %v1444
      %v1479 = vadd.f32 %v1257, %v1446
      %v1480 = vld [vmem:[%s401 + $0x2] sm:$0xff]
      %v1481 = vld [vmem:[%s401 + $0xa] sm:$0xff]
      %v1482 = vld [vmem:[%s401 + $0x1a] sm:$0xff]
      %v1483 = vld [vmem:[%s401 + $0x22] sm:$0xff]
      %v1484 = vld [vmem:[%s401 + $0x32] sm:$0xff]
      %v1485 = vld [vmem:[%s401 + $0x3a] sm:$0xff]
      %v1486 = vld [vmem:[%s401 + $0x4a] sm:$0xff]
      %v1487 = vld [vmem:[%s401 + $0x52] sm:$0xff]
      %v1488 = vld [vmem:[%s401 + $0x62] sm:$0xff]
      %v1489 = vld [vmem:[%s401 + $0x6a] sm:$0xff]
      %v1490 = vld [vmem:[%s401 + $0x7a] sm:$0xff]
      %v1491 = vld [vmem:[%s401 + $0x82] sm:$0xff]
      %v1492 = vld [vmem:[%s401 + $0x92] sm:$0xff]
      %v1493 = vld [vmem:[%s401 + $0x9a] sm:$0xff]
      %v1494 = vld [vmem:[%s401 + $0xaa] sm:$0xff]
      %v1495 = vld [vmem:[%s401 + $0xb2] sm:$0xff]
      %v1496 = vld [vmem:[%s401 + $0xc2] sm:$0xff]
      %v1497 = vld [vmem:[%s401 + $0xca] sm:$0xff]
      %v1498 = vld [vmem:[%s401 + $0xda] sm:$0xff]
      %v1499 = vld [vmem:[%s401 + $0xe2] sm:$0xff]
      %v1500 = vld [vmem:[%s401 + $0xf2] sm:$0xff]
      %v1501 = vld [vmem:[%s401 + $0xfa] sm:$0xff]
      %v1502 = vld [vmem:[%s401 + $0x10a] sm:$0xff]
      %v1503 = vld [vmem:[%s401 + $0x112] sm:$0xff]
      %v1504 = vld [vmem:[%s401 + $0x122] sm:$0xff]
      %v1505 = vld [vmem:[%s401 + $0x12a] sm:$0xff]
      %v1506 = vld [vmem:[%s401 + $0x13a] sm:$0xff]
      %v1507 = vld [vmem:[%s401 + $0x142] sm:$0xff]
      %v1508 = vld [vmem:[%s401 + $0x152] sm:$0xff]
      %v1509 = vld [vmem:[%s401 + $0x15a] sm:$0xff]
      %v1510 = vld [vmem:[%s401 + $0x16a] sm:$0xff]
      %v1511 = vld [vmem:[%s401 + $0x172] sm:$0xff]
      %v1512 = vpack.c.bf16 %v1481, %v1480
      %v1513 = vpack.c.bf16 %v1483, %v1482
      %v1514 = vpack.c.bf16 %v1485, %v1484
      %v1515 = vpack.c.bf16 %v1487, %v1486
      %v1516 = vpack.c.bf16 %v1489, %v1488
      %v1517 = vpack.c.bf16 %v1491, %v1490
      %v1518 = vpack.c.bf16 %v1493, %v1492
      %v1519 = vpack.c.bf16 %v1495, %v1494
      %v1520 = vpack.c.bf16 %v1497, %v1496
      %v1521 = vpack.c.bf16 %v1499, %v1498
      %v1522 = vpack.c.bf16 %v1501, %v1500
      %v1523 = vpack.c.bf16 %v1503, %v1502
      %v1524 = vpack.c.bf16 %v1505, %v1504
      %v1525 = vpack.c.bf16 %v1507, %v1506
      %v1526 = vpack.c.bf16 %v1509, %v1508
      %v1527 = vpack.c.bf16 %v1511, %v1510
      %s1528 = scalar_lea.vmem %s1, 20
      %v1529 = vld [vmem:[%s1528] sm:$0xf]
      %v1531 = vsel %vm280, %v1512, 0
      %v1534 = vsel %vm280, %v1513, 0
      %v1537 = vsel %vm280, %v1514, 0
      %v1540 = vsel %vm280, %v1515, 0
      %v1543 = vsel %vm280, %v1516, 0
      %v1546 = vsel %vm280, %v1517, 0
      %v1549 = vsel %vm280, %v1518, 0
      %v1552 = vsel %vm280, %v1519, 0
      %v1555 = vsel %vm280, %v1520, 0
      %v1558 = vsel %vm280, %v1521, 0
      %v1561 = vsel %vm280, %v1522, 0
      %v1564 = vsel %vm280, %v1523, 0
      %v1567 = vsel %vm280, %v1524, 0
      %v1570 = vsel %vm280, %v1525, 0
      %v1573 = vsel %vm280, %v1526, 0
      %v1576 = vsel %vm280, %v1527, 0
      %v1579 = vsel %vm581, %v1529, 0
      %1581 = vmatpush.bf16.msra.mxu0 0
      %1582 = vmatpush.bf16.msra.mxu0 0
      %1583 = vmatpush.bf16.msra.mxu0 0
      %1584 = vmatpush.bf16.msra.mxu0 0
      %1585 = vmatpush.bf16.msra.mxu0 0
      %1586 = vmatpush.bf16.msra.mxu0 0
      %1587 = vmatpush.bf16.msra.mxu0 0
      %1588 = vmatpush.bf16.msra.mxu0 %v1579
      %1589 = vmatmul.bf16.gmra.mxu0 %v1531
      %v1590 = vpop.f32.mrf.mxu0
      %v1591 = vadd.f32 0.0, %v1590
      %v1592 = vpop.f32.mrf.mxu0
      %v1593 = vadd.f32 0.0, %v1592
      %1594 = vmatmul.bf16.gmra.mxu0 %v1534
      %v1595 = vpop.f32.mrf.mxu0
      %v1596 = vadd.f32 0.0, %v1595
      %v1597 = vpop.f32.mrf.mxu0
      %v1598 = vadd.f32 0.0, %v1597
      %1599 = vmatmul.bf16.gmra.mxu0 %v1537
      %v1600 = vpop.f32.mrf.mxu0
      %v1601 = vadd.f32 0.0, %v1600
      %v1602 = vpop.f32.mrf.mxu0
      %v1603 = vadd.f32 0.0, %v1602
      %1604 = vmatmul.bf16.gmra.mxu0 %v1540
      %v1605 = vpop.f32.mrf.mxu0
      %v1606 = vadd.f32 0.0, %v1605
      %v1607 = vpop.f32.mrf.mxu0
      %v1608 = vadd.f32 0.0, %v1607
      %1609 = vmatmul.bf16.gmra.mxu0 %v1543
      %v1610 = vpop.f32.mrf.mxu0
      %v1611 = vadd.f32 0.0, %v1610
      %v1612 = vpop.f32.mrf.mxu0
      %v1613 = vadd.f32 0.0, %v1612
      %1614 = vmatmul.bf16.gmra.mxu0 %v1546
      %v1615 = vpop.f32.mrf.mxu0
      %v1616 = vadd.f32 0.0, %v1615
      %v1617 = vpop.f32.mrf.mxu0
      %v1618 = vadd.f32 0.0, %v1617
      %1619 = vmatmul.bf16.gmra.mxu0 %v1549
      %v1620 = vpop.f32.mrf.mxu0
      %v1621 = vadd.f32 0.0, %v1620
      %v1622 = vpop.f32.mrf.mxu0
      %v1623 = vadd.f32 0.0, %v1622
      %1624 = vmatmul.bf16.gmra.mxu0 %v1552
      %v1625 = vpop.f32.mrf.mxu0
      %v1626 = vadd.f32 0.0, %v1625
      %v1627 = vpop.f32.mrf.mxu0
      %v1628 = vadd.f32 0.0, %v1627
      %1629 = vmatmul.bf16.gmra.mxu0 %v1555
      %v1630 = vpop.f32.mrf.mxu0
      %v1631 = vadd.f32 0.0, %v1630
      %v1632 = vpop.f32.mrf.mxu0
      %v1633 = vadd.f32 0.0, %v1632
      %1634 = vmatmul.bf16.gmra.mxu0 %v1558
      %v1635 = vpop.f32.mrf.mxu0
      %v1636 = vadd.f32 0.0, %v1635
      %v1637 = vpop.f32.mrf.mxu0
      %v1638 = vadd.f32 0.0, %v1637
      %1639 = vmatmul.bf16.gmra.mxu0 %v1561
      %v1640 = vpop.f32.mrf.mxu0
      %v1641 = vadd.f32 0.0, %v1640
      %v1642 = vpop.f32.mrf.mxu0
      %v1643 = vadd.f32 0.0, %v1642
      %1644 = vmatmul.bf16.gmra.mxu0 %v1564
      %v1645 = vpop.f32.mrf.mxu0
      %v1646 = vadd.f32 0.0, %v1645
      %v1647 = vpop.f32.mrf.mxu0
      %v1648 = vadd.f32 0.0, %v1647
      %1649 = vmatmul.bf16.gmra.mxu0 %v1567
      %v1650 = vpop.f32.mrf.mxu0
      %v1651 = vadd.f32 0.0, %v1650
      %v1652 = vpop.f32.mrf.mxu0
      %v1653 = vadd.f32 0.0, %v1652
      %1654 = vmatmul.bf16.gmra.mxu0 %v1570
      %v1655 = vpop.f32.mrf.mxu0
      %v1656 = vadd.f32 0.0, %v1655
      %v1657 = vpop.f32.mrf.mxu0
      %v1658 = vadd.f32 0.0, %v1657
      %1659 = vmatmul.bf16.gmra.mxu0 %v1573
      %v1660 = vpop.f32.mrf.mxu0
      %v1661 = vadd.f32 0.0, %v1660
      %v1662 = vpop.f32.mrf.mxu0
      %v1663 = vadd.f32 0.0, %v1662
      %1664 = vmatmul.bf16.gmra.mxu0 %v1576
      %v1665 = vpop.f32.mrf.mxu0
      %v1666 = vadd.f32 0.0, %v1665
      %v1667 = vpop.f32.mrf.mxu0
      %v1668 = vadd.f32 0.0, %v1667
      %1669 = vdwg.mxu0
      %v1670 = vadd.f32 %v1448, %v1591
      %v1671 = vadd.f32 %v1449, %v1593
      %v1672 = vadd.f32 %v1450, %v1596
      %v1673 = vadd.f32 %v1451, %v1598
      %v1674 = vadd.f32 %v1452, %v1601
      %v1675 = vadd.f32 %v1453, %v1603
      %v1676 = vadd.f32 %v1454, %v1606
      %v1677 = vadd.f32 %v1455, %v1608
      %v1678 = vadd.f32 %v1456, %v1611
      %v1679 = vadd.f32 %v1457, %v1613
      %v1680 = vadd.f32 %v1458, %v1616
      %v1681 = vadd.f32 %v1459, %v1618
      %v1682 = vadd.f32 %v1460, %v1621
      %v1683 = vadd.f32 %v1461, %v1623
      %v1684 = vadd.f32 %v1462, %v1626
      %v1685 = vadd.f32 %v1463, %v1628
      %v1686 = vadd.f32 %v1464, %v1631
      %v1687 = vadd.f32 %v1465, %v1633
      %v1688 = vadd.f32 %v1466, %v1636
      %v1689 = vadd.f32 %v1467, %v1638
      %v1690 = vadd.f32 %v1468, %v1641
      %v1691 = vadd.f32 %v1469, %v1643
      %v1692 = vadd.f32 %v1470, %v1646
      %v1693 = vadd.f32 %v1471, %v1648
      %v1694 = vadd.f32 %v1472, %v1651
      %v1695 = vadd.f32 %v1473, %v1653
      %v1696 = vadd.f32 %v1474, %v1656
      %v1697 = vadd.f32 %v1475, %v1658
      %v1698 = vadd.f32 %v1476, %v1661
      %v1699 = vadd.f32 %v1477, %v1663
      %v1700 = vadd.f32 %v1478, %v1666
      %v1701 = vadd.f32 %v1479, %v1668
      %s1702 = scalar_lea.vmem [#allocation2], 48
      %v1703 = vld [vmem:[%s1702] sm:$0xff]
      %v1704 = vld [vmem:[%s1702 + $0x8] sm:$0xff]
      %v1705 = vld [vmem:[%s1702 + $0x18] sm:$0xff]
      %v1706 = vld [vmem:[%s1702 + $0x20] sm:$0xff]
      %v1707 = vld [vmem:[%s1702 + $0x30] sm:$0xff]
      %v1708 = vld [vmem:[%s1702 + $0x38] sm:$0xff]
      %v1709 = vld [vmem:[%s1702 + $0x48] sm:$0xff]
      %v1710 = vld [vmem:[%s1702 + $0x50] sm:$0xff]
      %v1711 = vld [vmem:[%s1702 + $0x60] sm:$0xff]
      %v1712 = vld [vmem:[%s1702 + $0x68] sm:$0xff]
      %v1713 = vld [vmem:[%s1702 + $0x78] sm:$0xff]
      %v1714 = vld [vmem:[%s1702 + $0x80] sm:$0xff]
      %v1715 = vld [vmem:[%s1702 + $0x90] sm:$0xff]
      %v1716 = vld [vmem:[%s1702 + $0x98] sm:$0xff]
      %v1717 = vld [vmem:[%s1702 + $0xa8] sm:$0xff]
      %v1718 = vld [vmem:[%s1702 + $0xb0] sm:$0xff]
      %v1719 = vld [vmem:[%s1702 + $0xc0] sm:$0xff]
      %v1720 = vld [vmem:[%s1702 + $0xc8] sm:$0xff]
      %v1721 = vld [vmem:[%s1702 + $0xd8] sm:$0xff]
      %v1722 = vld [vmem:[%s1702 + $0xe0] sm:$0xff]
      %v1723 = vld [vmem:[%s1702 + $0xf0] sm:$0xff]
      %v1724 = vld [vmem:[%s1702 + $0xf8] sm:$0xff]
      %v1725 = vld [vmem:[%s1702 + $0x108] sm:$0xff]
      %v1726 = vld [vmem:[%s1702 + $0x110] sm:$0xff]
      %v1727 = vld [vmem:[%s1702 + $0x120] sm:$0xff]
      %v1728 = vld [vmem:[%s1702 + $0x128] sm:$0xff]
      %v1729 = vld [vmem:[%s1702 + $0x138] sm:$0xff]
      %v1730 = vld [vmem:[%s1702 + $0x140] sm:$0xff]
      %v1731 = vld [vmem:[%s1702 + $0x150] sm:$0xff]
      %v1732 = vld [vmem:[%s1702 + $0x158] sm:$0xff]
      %v1733 = vld [vmem:[%s1702 + $0x168] sm:$0xff]
      %v1734 = vld [vmem:[%s1702 + $0x170] sm:$0xff]
      %v1735 = vpack.c.bf16 %v1704, %v1703
      %v1736 = vpack.c.bf16 %v1706, %v1705
      %v1737 = vpack.c.bf16 %v1708, %v1707
      %v1738 = vpack.c.bf16 %v1710, %v1709
      %v1739 = vpack.c.bf16 %v1712, %v1711
      %v1740 = vpack.c.bf16 %v1714, %v1713
      %v1741 = vpack.c.bf16 %v1716, %v1715
      %v1742 = vpack.c.bf16 %v1718, %v1717
      %v1743 = vpack.c.bf16 %v1720, %v1719
      %v1744 = vpack.c.bf16 %v1722, %v1721
      %v1745 = vpack.c.bf16 %v1724, %v1723
      %v1746 = vpack.c.bf16 %v1726, %v1725
      %v1747 = vpack.c.bf16 %v1728, %v1727
      %v1748 = vpack.c.bf16 %v1730, %v1729
      %v1749 = vpack.c.bf16 %v1732, %v1731
      %v1750 = vpack.c.bf16 %v1734, %v1733
      %s1751 = scalar_lea.vmem %s1, 24
      %v1752 = vld [vmem:[%s1751] sm:$0xf]
      %v1754 = vsel %vm280, %v1735, 0
      %v1757 = vsel %vm280, %v1736, 0
      %v1760 = vsel %vm280, %v1737, 0
      %v1763 = vsel %vm280, %v1738, 0
      %v1766 = vsel %vm280, %v1739, 0
      %v1769 = vsel %vm280, %v1740, 0
      %v1772 = vsel %vm280, %v1741, 0
      %v1775 = vsel %vm280, %v1742, 0
      %v1778 = vsel %vm280, %v1743, 0
      %v1781 = vsel %vm280, %v1744, 0
      %v1784 = vsel %vm280, %v1745, 0
      %v1787 = vsel %vm280, %v1746, 0
      %v1790 = vsel %vm280, %v1747, 0
      %v1793 = vsel %vm280, %v1748, 0
      %v1796 = vsel %vm280, %v1749, 0
      %v1799 = vsel %vm280, %v1750, 0
      %v1802 = vsel %vm581, %v1752, 0
      %1804 = vmatpush.bf16.msra.mxu0 0
      %1805 = vmatpush.bf16.msra.mxu0 0
      %1806 = vmatpush.bf16.msra.mxu0 0
      %1807 = vmatpush.bf16.msra.mxu0 0
      %1808 = vmatpush.bf16.msra.mxu0 0
      %1809 = vmatpush.bf16.msra.mxu0 0
      %1810 = vmatpush.bf16.msra.mxu0 0
      %1811 = vmatpush.bf16.msra.mxu0 %v1802
      %1812 = vmatmul.bf16.gmra.mxu0 %v1754
      %v1813 = vpop.f32.mrf.mxu0
      %v1814 = vadd.f32 0.0, %v1813
      %v1815 = vpop.f32.mrf.mxu0
      %v1816 = vadd.f32 0.0, %v1815
      %1817 = vmatmul.bf16.gmra.mxu0 %v1757
      %v1818 = vpop.f32.mrf.mxu0
      %v1819 = vadd.f32 0.0, %v1818
      %v1820 = vpop.f32.mrf.mxu0
      %v1821 = vadd.f32 0.0, %v1820
      %1822 = vmatmul.bf16.gmra.mxu0 %v1760
      %v1823 = vpop.f32.mrf.mxu0
      %v1824 = vadd.f32 0.0, %v1823
      %v1825 = vpop.f32.mrf.mxu0
      %v1826 = vadd.f32 0.0, %v1825
      %1827 = vmatmul.bf16.gmra.mxu0 %v1763
      %v1828 = vpop.f32.mrf.mxu0
      %v1829 = vadd.f32 0.0, %v1828
      %v1830 = vpop.f32.mrf.mxu0
      %v1831 = vadd.f32 0.0, %v1830
      %1832 = vmatmul.bf16.gmra.mxu0 %v1766
      %v1833 = vpop.f32.mrf.mxu0
      %v1834 = vadd.f32 0.0, %v1833
      %v1835 = vpop.f32.mrf.mxu0
      %v1836 = vadd.f32 0.0, %v1835
      %1837 = vmatmul.bf16.gmra.mxu0 %v1769
      %v1838 = vpop.f32.mrf.mxu0
      %v1839 = vadd.f32 0.0, %v1838
      %v1840 = vpop.f32.mrf.mxu0
      %v1841 = vadd.f32 0.0, %v1840
      %1842 = vmatmul.bf16.gmra.mxu0 %v1772
      %v1843 = vpop.f32.mrf.mxu0
      %v1844 = vadd.f32 0.0, %v1843
      %v1845 = vpop.f32.mrf.mxu0
      %v1846 = vadd.f32 0.0, %v1845
      %1847 = vmatmul.bf16.gmra.mxu0 %v1775
      %v1848 = vpop.f32.mrf.mxu0
      %v1849 = vadd.f32 0.0, %v1848
      %v1850 = vpop.f32.mrf.mxu0
      %v1851 = vadd.f32 0.0, %v1850
      %1852 = vmatmul.bf16.gmra.mxu0 %v1778
      %v1853 = vpop.f32.mrf.mxu0
      %v1854 = vadd.f32 0.0, %v1853
      %v1855 = vpop.f32.mrf.mxu0
      %v1856 = vadd.f32 0.0, %v1855
      %1857 = vmatmul.bf16.gmra.mxu0 %v1781
      %v1858 = vpop.f32.mrf.mxu0
      %v1859 = vadd.f32 0.0, %v1858
      %v1860 = vpop.f32.mrf.mxu0
      %v1861 = vadd.f32 0.0, %v1860
      %1862 = vmatmul.bf16.gmra.mxu0 %v1784
      %v1863 = vpop.f32.mrf.mxu0
      %v1864 = vadd.f32 0.0, %v1863
      %v1865 = vpop.f32.mrf.mxu0
      %v1866 = vadd.f32 0.0, %v1865
      %1867 = vmatmul.bf16.gmra.mxu0 %v1787
      %v1868 = vpop.f32.mrf.mxu0
      %v1869 = vadd.f32 0.0, %v1868
      %v1870 = vpop.f32.mrf.mxu0
      %v1871 = vadd.f32 0.0, %v1870
      %1872 = vmatmul.bf16.gmra.mxu0 %v1790
      %v1873 = vpop.f32.mrf.mxu0
      %v1874 = vadd.f32 0.0, %v1873
      %v1875 = vpop.f32.mrf.mxu0
      %v1876 = vadd.f32 0.0, %v1875
      %1877 = vmatmul.bf16.gmra.mxu0 %v1793
      %v1878 = vpop.f32.mrf.mxu0
      %v1879 = vadd.f32 0.0, %v1878
      %v1880 = vpop.f32.mrf.mxu0
      %v1881 = vadd.f32 0.0, %v1880
      %1882 = vmatmul.bf16.gmra.mxu0 %v1796
      %v1883 = vpop.f32.mrf.mxu0
      %v1884 = vadd.f32 0.0, %v1883
      %v1885 = vpop.f32.mrf.mxu0
      %v1886 = vadd.f32 0.0, %v1885
      %1887 = vmatmul.bf16.gmra.mxu0 %v1799
      %v1888 = vpop.f32.mrf.mxu0
      %v1889 = vadd.f32 0.0, %v1888
      %v1890 = vpop.f32.mrf.mxu0
      %v1891 = vadd.f32 0.0, %v1890
      %1892 = vdwg.mxu0
      %v1893 = vadd.f32 %v1670, %v1814
      %v1894 = vadd.f32 %v1671, %v1816
      %v1895 = vadd.f32 %v1672, %v1819
      %v1896 = vadd.f32 %v1673, %v1821
      %v1897 = vadd.f32 %v1674, %v1824
      %v1898 = vadd.f32 %v1675, %v1826
      %v1899 = vadd.f32 %v1676, %v1829
      %v1900 = vadd.f32 %v1677, %v1831
      %v1901 = vadd.f32 %v1678, %v1834
      %v1902 = vadd.f32 %v1679, %v1836
      %v1903 = vadd.f32 %v1680, %v1839
      %v1904 = vadd.f32 %v1681, %v1841
      %v1905 = vadd.f32 %v1682, %v1844
      %v1906 = vadd.f32 %v1683, %v1846
      %v1907 = vadd.f32 %v1684, %v1849
      %v1908 = vadd.f32 %v1685, %v1851
      %v1909 = vadd.f32 %v1686, %v1854
      %v1910 = vadd.f32 %v1687, %v1856
      %v1911 = vadd.f32 %v1688, %v1859
      %v1912 = vadd.f32 %v1689, %v1861
      %v1913 = vadd.f32 %v1690, %v1864
      %v1914 = vadd.f32 %v1691, %v1866
      %v1915 = vadd.f32 %v1692, %v1869
      %v1916 = vadd.f32 %v1693, %v1871
      %v1917 = vadd.f32 %v1694, %v1874
      %v1918 = vadd.f32 %v1695, %v1876
      %v1919 = vadd.f32 %v1696, %v1879
      %v1920 = vadd.f32 %v1697, %v1881
      %v1921 = vadd.f32 %v1698, %v1884
      %v1922 = vadd.f32 %v1699, %v1886
      %v1923 = vadd.f32 %v1700, %v1889
      %v1924 = vadd.f32 %v1701, %v1891
      %v1925 = vld [vmem:[%s1702 + $0x1] sm:$0xff]
      %v1926 = vld [vmem:[%s1702 + $0x9] sm:$0xff]
      %v1927 = vld [vmem:[%s1702 + $0x19] sm:$0xff]
      %v1928 = vld [vmem:[%s1702 + $0x21] sm:$0xff]
      %v1929 = vld [vmem:[%s1702 + $0x31] sm:$0xff]
      %v1930 = vld [vmem:[%s1702 + $0x39] sm:$0xff]
      %v1931 = vld [vmem:[%s1702 + $0x49] sm:$0xff]
      %v1932 = vld [vmem:[%s1702 + $0x51] sm:$0xff]
      %v1933 = vld [vmem:[%s1702 + $0x61] sm:$0xff]
      %v1934 = vld [vmem:[%s1702 + $0x69] sm:$0xff]
      %v1935 = vld [vmem:[%s1702 + $0x79] sm:$0xff]
      %v1936 = vld [vmem:[%s1702 + $0x81] sm:$0xff]
      %v1937 = vld [vmem:[%s1702 + $0x91] sm:$0xff]
      %v1938 = vld [vmem:[%s1702 + $0x99] sm:$0xff]
      %v1939 = vld [vmem:[%s1702 + $0xa9] sm:$0xff]
      %v1940 = vld [vmem:[%s1702 + $0xb1] sm:$0xff]
      %v1941 = vld [vmem:[%s1702 + $0xc1] sm:$0xff]
      %v1942 = vld [vmem:[%s1702 + $0xc9] sm:$0xff]
      %v1943 = vld [vmem:[%s1702 + $0xd9] sm:$0xff]
      %v1944 = vld [vmem:[%s1702 + $0xe1] sm:$0xff]
      %v1945 = vld [vmem:[%s1702 + $0xf1] sm:$0xff]
      %v1946 = vld [vmem:[%s1702 + $0xf9] sm:$0xff]
      %v1947 = vld [vmem:[%s1702 + $0x109] sm:$0xff]
      %v1948 = vld [vmem:[%s1702 + $0x111] sm:$0xff]
      %v1949 = vld [vmem:[%s1702 + $0x121] sm:$0xff]
      %v1950 = vld [vmem:[%s1702 + $0x129] sm:$0xff]
      %v1951 = vld [vmem:[%s1702 + $0x139] sm:$0xff]
      %v1952 = vld [vmem:[%s1702 + $0x141] sm:$0xff]
      %v1953 = vld [vmem:[%s1702 + $0x151] sm:$0xff]
      %v1954 = vld [vmem:[%s1702 + $0x159] sm:$0xff]
      %v1955 = vld [vmem:[%s1702 + $0x169] sm:$0xff]
      %v1956 = vld [vmem:[%s1702 + $0x171] sm:$0xff]
      %v1957 = vpack.c.bf16 %v1926, %v1925
      %v1958 = vpack.c.bf16 %v1928, %v1927
      %v1959 = vpack.c.bf16 %v1930, %v1929
      %v1960 = vpack.c.bf16 %v1932, %v1931
      %v1961 = vpack.c.bf16 %v1934, %v1933
      %v1962 = vpack.c.bf16 %v1936, %v1935
      %v1963 = vpack.c.bf16 %v1938, %v1937
      %v1964 = vpack.c.bf16 %v1940, %v1939
      %v1965 = vpack.c.bf16 %v1942, %v1941
      %v1966 = vpack.c.bf16 %v1944, %v1943
      %v1967 = vpack.c.bf16 %v1946, %v1945
      %v1968 = vpack.c.bf16 %v1948, %v1947
      %v1969 = vpack.c.bf16 %v1950, %v1949
      %v1970 = vpack.c.bf16 %v1952, %v1951
      %v1971 = vpack.c.bf16 %v1954, %v1953
      %v1972 = vpack.c.bf16 %v1956, %v1955
      %s1973 = scalar_lea.vmem %s1, 28
      %v1974 = vld [vmem:[%s1973] sm:$0xf]
      %v1976 = vsel %vm280, %v1957, 0
      %v1979 = vsel %vm280, %v1958, 0
      %v1982 = vsel %vm280, %v1959, 0
      %v1985 = vsel %vm280, %v1960, 0
      %v1988 = vsel %vm280, %v1961, 0
      %v1991 = vsel %vm280, %v1962, 0
      %v1994 = vsel %vm280, %v1963, 0
      %v1997 = vsel %vm280, %v1964, 0
      %v2000 = vsel %vm280, %v1965, 0
      %v2003 = vsel %vm280, %v1966, 0
      %v2006 = vsel %vm280, %v1967, 0
      %v2009 = vsel %vm280, %v1968, 0
      %v2012 = vsel %vm280, %v1969, 0
      %v2015 = vsel %vm280, %v1970, 0
      %v2018 = vsel %vm280, %v1971, 0
      %v2021 = vsel %vm280, %v1972, 0
      %v2024 = vsel %vm581, %v1974, 0
      %2026 = vmatpush.bf16.msra.mxu0 0
      %2027 = vmatpush.bf16.msra.mxu0 0
      %2028 = vmatpush.bf16.msra.mxu0 0
      %2029 = vmatpush.bf16.msra.mxu0 0
      %2030 = vmatpush.bf16.msra.mxu0 0
      %2031 = vmatpush.bf16.msra.mxu0 0
      %2032 = vmatpush.bf16.msra.mxu0 0
      %2033 = vmatpush.bf16.msra.mxu0 %v2024
      %2034 = vmatmul.bf16.gmra.mxu0 %v1976
      %v2035 = vpop.f32.mrf.mxu0
      %v2036 = vadd.f32 0.0, %v2035
      %v2037 = vpop.f32.mrf.mxu0
      %v2038 = vadd.f32 0.0, %v2037
      %2039 = vmatmul.bf16.gmra.mxu0 %v1979
      %v2040 = vpop.f32.mrf.mxu0
      %v2041 = vadd.f32 0.0, %v2040
      %v2042 = vpop.f32.mrf.mxu0
      %v2043 = vadd.f32 0.0, %v2042
      %2044 = vmatmul.bf16.gmra.mxu0 %v1982
      %v2045 = vpop.f32.mrf.mxu0
      %v2046 = vadd.f32 0.0, %v2045
      %v2047 = vpop.f32.mrf.mxu0
      %v2048 = vadd.f32 0.0, %v2047
      %2049 = vmatmul.bf16.gmra.mxu0 %v1985
      %v2050 = vpop.f32.mrf.mxu0
      %v2051 = vadd.f32 0.0, %v2050
      %v2052 = vpop.f32.mrf.mxu0
      %v2053 = vadd.f32 0.0, %v2052
      %2054 = vmatmul.bf16.gmra.mxu0 %v1988
      %v2055 = vpop.f32.mrf.mxu0
      %v2056 = vadd.f32 0.0, %v2055
      %v2057 = vpop.f32.mrf.mxu0
      %v2058 = vadd.f32 0.0, %v2057
      %2059 = vmatmul.bf16.gmra.mxu0 %v1991
      %v2060 = vpop.f32.mrf.mxu0
      %v2061 = vadd.f32 0.0, %v2060
      %v2062 = vpop.f32.mrf.mxu0
      %v2063 = vadd.f32 0.0, %v2062
      %2064 = vmatmul.bf16.gmra.mxu0 %v1994
      %v2065 = vpop.f32.mrf.mxu0
      %v2066 = vadd.f32 0.0, %v2065
      %v2067 = vpop.f32.mrf.mxu0
      %v2068 = vadd.f32 0.0, %v2067
      %2069 = vmatmul.bf16.gmra.mxu0 %v1997
      %v2070 = vpop.f32.mrf.mxu0
      %v2071 = vadd.f32 0.0, %v2070
      %v2072 = vpop.f32.mrf.mxu0
      %v2073 = vadd.f32 0.0, %v2072
      %2074 = vmatmul.bf16.gmra.mxu0 %v2000
      %v2075 = vpop.f32.mrf.mxu0
      %v2076 = vadd.f32 0.0, %v2075
      %v2077 = vpop.f32.mrf.mxu0
      %v2078 = vadd.f32 0.0, %v2077
      %2079 = vmatmul.bf16.gmra.mxu0 %v2003
      %v2080 = vpop.f32.mrf.mxu0
      %v2081 = vadd.f32 0.0, %v2080
      %v2082 = vpop.f32.mrf.mxu0
      %v2083 = vadd.f32 0.0, %v2082
      %2084 = vmatmul.bf16.gmra.mxu0 %v2006
      %v2085 = vpop.f32.mrf.mxu0
      %v2086 = vadd.f32 0.0, %v2085
      %v2087 = vpop.f32.mrf.mxu0
      %v2088 = vadd.f32 0.0, %v2087
      %2089 = vmatmul.bf16.gmra.mxu0 %v2009
      %v2090 = vpop.f32.mrf.mxu0
      %v2091 = vadd.f32 0.0, %v2090
      %v2092 = vpop.f32.mrf.mxu0
      %v2093 = vadd.f32 0.0, %v2092
      %2094 = vmatmul.bf16.gmra.mxu0 %v2012
      %v2095 = vpop.f32.mrf.mxu0
      %v2096 = vadd.f32 0.0, %v2095
      %v2097 = vpop.f32.mrf.mxu0
      %v2098 = vadd.f32 0.0, %v2097
      %2099 = vmatmul.bf16.gmra.mxu0 %v2015
      %v2100 = vpop.f32.mrf.mxu0
      %v2101 = vadd.f32 0.0, %v2100
      %v2102 = vpop.f32.mrf.mxu0
      %v2103 = vadd.f32 0.0, %v2102
      %2104 = vmatmul.bf16.gmra.mxu0 %v2018
      %v2105 = vpop.f32.mrf.mxu0
      %v2106 = vadd.f32 0.0, %v2105
      %v2107 = vpop.f32.mrf.mxu0
      %v2108 = vadd.f32 0.0, %v2107
      %2109 = vmatmul.bf16.gmra.mxu0 %v2021
      %v2110 = vpop.f32.mrf.mxu0
      %v2111 = vadd.f32 0.0, %v2110
      %v2112 = vpop.f32.mrf.mxu0
      %v2113 = vadd.f32 0.0, %v2112
      %2114 = vdwg.mxu0
      %v2115 = vadd.f32 %v1893, %v2036
      %v2116 = vadd.f32 %v1894, %v2038
      %v2117 = vadd.f32 %v1895, %v2041
      %v2118 = vadd.f32 %v1896, %v2043
      %v2119 = vadd.f32 %v1897, %v2046
      %v2120 = vadd.f32 %v1898, %v2048
      %v2121 = vadd.f32 %v1899, %v2051
      %v2122 = vadd.f32 %v1900, %v2053
      %v2123 = vadd.f32 %v1901, %v2056
      %v2124 = vadd.f32 %v1902, %v2058
      %v2125 = vadd.f32 %v1903, %v2061
      %v2126 = vadd.f32 %v1904, %v2063
      %v2127 = vadd.f32 %v1905, %v2066
      %v2128 = vadd.f32 %v1906, %v2068
      %v2129 = vadd.f32 %v1907, %v2071
      %v2130 = vadd.f32 %v1908, %v2073
      %v2131 = vadd.f32 %v1909, %v2076
      %v2132 = vadd.f32 %v1910, %v2078
      %v2133 = vadd.f32 %v1911, %v2081
      %v2134 = vadd.f32 %v1912, %v2083
      %v2135 = vadd.f32 %v1913, %v2086
      %v2136 = vadd.f32 %v1914, %v2088
      %v2137 = vadd.f32 %v1915, %v2091
      %v2138 = vadd.f32 %v1916, %v2093
      %v2139 = vadd.f32 %v1917, %v2096
      %v2140 = vadd.f32 %v1918, %v2098
      %v2141 = vadd.f32 %v1919, %v2101
      %v2142 = vadd.f32 %v1920, %v2103
      %v2143 = vadd.f32 %v1921, %v2106
      %v2144 = vadd.f32 %v1922, %v2108
      %v2145 = vadd.f32 %v1923, %v2111
      %v2146 = vadd.f32 %v1924, %v2113
      %v2147 = vld [vmem:[%s1702 + $0x2] sm:$0xff]
      %v2148 = vld [vmem:[%s1702 + $0xa] sm:$0xff]
      %v2149 = vld [vmem:[%s1702 + $0x1a] sm:$0xff]
      %v2150 = vld [vmem:[%s1702 + $0x22] sm:$0xff]
      %v2151 = vld [vmem:[%s1702 + $0x32] sm:$0xff]
      %v2152 = vld [vmem:[%s1702 + $0x3a] sm:$0xff]
      %v2153 = vld [vmem:[%s1702 + $0x4a] sm:$0xff]
      %v2154 = vld [vmem:[%s1702 + $0x52] sm:$0xff]
      %v2155 = vld [vmem:[%s1702 + $0x62] sm:$0xff]
      %v2156 = vld [vmem:[%s1702 + $0x6a] sm:$0xff]
      %v2157 = vld [vmem:[%s1702 + $0x7a] sm:$0xff]
      %v2158 = vld [vmem:[%s1702 + $0x82] sm:$0xff]
      %v2159 = vld [vmem:[%s1702 + $0x92] sm:$0xff]
      %v2160 = vld [vmem:[%s1702 + $0x9a] sm:$0xff]
      %v2161 = vld [vmem:[%s1702 + $0xaa] sm:$0xff]
      %v2162 = vld [vmem:[%s1702 + $0xb2] sm:$0xff]
      %v2163 = vld [vmem:[%s1702 + $0xc2] sm:$0xff]
      %v2164 = vld [vmem:[%s1702 + $0xca] sm:$0xff]
      %v2165 = vld [vmem:[%s1702 + $0xda] sm:$0xff]
      %v2166 = vld [vmem:[%s1702 + $0xe2] sm:$0xff]
      %v2167 = vld [vmem:[%s1702 + $0xf2] sm:$0xff]
      %v2168 = vld [vmem:[%s1702 + $0xfa] sm:$0xff]
      %v2169 = vld [vmem:[%s1702 + $0x10a] sm:$0xff]
      %v2170 = vld [vmem:[%s1702 + $0x112] sm:$0xff]
      %v2171 = vld [vmem:[%s1702 + $0x122] sm:$0xff]
      %v2172 = vld [vmem:[%s1702 + $0x12a] sm:$0xff]
      %v2173 = vld [vmem:[%s1702 + $0x13a] sm:$0xff]
      %v2174 = vld [vmem:[%s1702 + $0x142] sm:$0xff]
      %v2175 = vld [vmem:[%s1702 + $0x152] sm:$0xff]
      %v2176 = vld [vmem:[%s1702 + $0x15a] sm:$0xff]
      %v2177 = vld [vmem:[%s1702 + $0x16a] sm:$0xff]
      %v2178 = vld [vmem:[%s1702 + $0x172] sm:$0xff]
      %v2179 = vpack.c.bf16 %v2148, %v2147
      %v2180 = vpack.c.bf16 %v2150, %v2149
      %v2181 = vpack.c.bf16 %v2152, %v2151
      %v2182 = vpack.c.bf16 %v2154, %v2153
      %v2183 = vpack.c.bf16 %v2156, %v2155
      %v2184 = vpack.c.bf16 %v2158, %v2157
      %v2185 = vpack.c.bf16 %v2160, %v2159
      %v2186 = vpack.c.bf16 %v2162, %v2161
      %v2187 = vpack.c.bf16 %v2164, %v2163
      %v2188 = vpack.c.bf16 %v2166, %v2165
      %v2189 = vpack.c.bf16 %v2168, %v2167
      %v2190 = vpack.c.bf16 %v2170, %v2169
      %v2191 = vpack.c.bf16 %v2172, %v2171
      %v2192 = vpack.c.bf16 %v2174, %v2173
      %v2193 = vpack.c.bf16 %v2176, %v2175
      %v2194 = vpack.c.bf16 %v2178, %v2177
      %s2195 = scalar_lea.vmem %s1, 32
      %v2196 = vld [vmem:[%s2195] sm:$0xf]
      %v2198 = vsel %vm280, %v2179, 0
      %v2201 = vsel %vm280, %v2180, 0
      %v2204 = vsel %vm280, %v2181, 0
      %v2207 = vsel %vm280, %v2182, 0
      %v2210 = vsel %vm280, %v2183, 0
      %v2213 = vsel %vm280, %v2184, 0
      %v2216 = vsel %vm280, %v2185, 0
      %v2219 = vsel %vm280, %v2186, 0
      %v2222 = vsel %vm280, %v2187, 0
      %v2225 = vsel %vm280, %v2188, 0
      %v2228 = vsel %vm280, %v2189, 0
      %v2231 = vsel %vm280, %v2190, 0
      %v2234 = vsel %vm280, %v2191, 0
      %v2237 = vsel %vm280, %v2192, 0
      %v2240 = vsel %vm280, %v2193, 0
      %v2243 = vsel %vm280, %v2194, 0
      %v2246 = vsel %vm581, %v2196, 0
      %2248 = vmatpush.bf16.msra.mxu0 0
      %2249 = vmatpush.bf16.msra.mxu0 0
      %2250 = vmatpush.bf16.msra.mxu0 0
      %2251 = vmatpush.bf16.msra.mxu0 0
      %2252 = vmatpush.bf16.msra.mxu0 0
      %2253 = vmatpush.bf16.msra.mxu0 0
      %2254 = vmatpush.bf16.msra.mxu0 0
      %2255 = vmatpush.bf16.msra.mxu0 %v2246
      %2256 = vmatmul.bf16.gmra.mxu0 %v2198
      %v2257 = vpop.f32.mrf.mxu0
      %v2258 = vadd.f32 0.0, %v2257
      %v2259 = vpop.f32.mrf.mxu0
      %v2260 = vadd.f32 0.0, %v2259
      %2261 = vmatmul.bf16.gmra.mxu0 %v2201
      %v2262 = vpop.f32.mrf.mxu0
      %v2263 = vadd.f32 0.0, %v2262
      %v2264 = vpop.f32.mrf.mxu0
      %v2265 = vadd.f32 0.0, %v2264
      %2266 = vmatmul.bf16.gmra.mxu0 %v2204
      %v2267 = vpop.f32.mrf.mxu0
      %v2268 = vadd.f32 0.0, %v2267
      %v2269 = vpop.f32.mrf.mxu0
      %v2270 = vadd.f32 0.0, %v2269
      %2271 = vmatmul.bf16.gmra.mxu0 %v2207
      %v2272 = vpop.f32.mrf.mxu0
      %v2273 = vadd.f32 0.0, %v2272
      %v2274 = vpop.f32.mrf.mxu0
      %v2275 = vadd.f32 0.0, %v2274
      %2276 = vmatmul.bf16.gmra.mxu0 %v2210
      %v2277 = vpop.f32.mrf.mxu0
      %v2278 = vadd.f32 0.0, %v2277
      %v2279 = vpop.f32.mrf.mxu0
      %v2280 = vadd.f32 0.0, %v2279
      %2281 = vmatmul.bf16.gmra.mxu0 %v2213
      %v2282 = vpop.f32.mrf.mxu0
      %v2283 = vadd.f32 0.0, %v2282
      %v2284 = vpop.f32.mrf.mxu0
      %v2285 = vadd.f32 0.0, %v2284
      %2286 = vmatmul.bf16.gmra.mxu0 %v2216
      %v2287 = vpop.f32.mrf.mxu0
      %v2288 = vadd.f32 0.0, %v2287
      %v2289 = vpop.f32.mrf.mxu0
      %v2290 = vadd.f32 0.0, %v2289
      %2291 = vmatmul.bf16.gmra.mxu0 %v2219
      %v2292 = vpop.f32.mrf.mxu0
      %v2293 = vadd.f32 0.0, %v2292
      %v2294 = vpop.f32.mrf.mxu0
      %v2295 = vadd.f32 0.0, %v2294
      %2296 = vmatmul.bf16.gmra.mxu0 %v2222
      %v2297 = vpop.f32.mrf.mxu0
      %v2298 = vadd.f32 0.0, %v2297
      %v2299 = vpop.f32.mrf.mxu0
      %v2300 = vadd.f32 0.0, %v2299
      %2301 = vmatmul.bf16.gmra.mxu0 %v2225
      %v2302 = vpop.f32.mrf.mxu0
      %v2303 = vadd.f32 0.0, %v2302
      %v2304 = vpop.f32.mrf.mxu0
      %v2305 = vadd.f32 0.0, %v2304
      %2306 = vmatmul.bf16.gmra.mxu0 %v2228
      %v2307 = vpop.f32.mrf.mxu0
      %v2308 = vadd.f32 0.0, %v2307
      %v2309 = vpop.f32.mrf.mxu0
      %v2310 = vadd.f32 0.0, %v2309
      %2311 = vmatmul.bf16.gmra.mxu0 %v2231
      %v2312 = vpop.f32.mrf.mxu0
      %v2313 = vadd.f32 0.0, %v2312
      %v2314 = vpop.f32.mrf.mxu0
      %v2315 = vadd.f32 0.0, %v2314
      %2316 = vmatmul.bf16.gmra.mxu0 %v2234
      %v2317 = vpop.f32.mrf.mxu0
      %v2318 = vadd.f32 0.0, %v2317
      %v2319 = vpop.f32.mrf.mxu0
      %v2320 = vadd.f32 0.0, %v2319
      %2321 = vmatmul.bf16.gmra.mxu0 %v2237
      %v2322 = vpop.f32.mrf.mxu0
      %v2323 = vadd.f32 0.0, %v2322
      %v2324 = vpop.f32.mrf.mxu0
      %v2325 = vadd.f32 0.0, %v2324
      %2326 = vmatmul.bf16.gmra.mxu0 %v2240
      %v2327 = vpop.f32.mrf.mxu0
      %v2328 = vadd.f32 0.0, %v2327
      %v2329 = vpop.f32.mrf.mxu0
      %v2330 = vadd.f32 0.0, %v2329
      %2331 = vmatmul.bf16.gmra.mxu0 %v2243
      %v2332 = vpop.f32.mrf.mxu0
      %v2333 = vadd.f32 0.0, %v2332
      %v2334 = vpop.f32.mrf.mxu0
      %v2335 = vadd.f32 0.0, %v2334
      %2336 = vdwg.mxu0
      %v2337 = vadd.f32 %v2115, %v2258
      %v2338 = vadd.f32 %v2116, %v2260
      %v2339 = vadd.f32 %v2117, %v2263
      %v2340 = vadd.f32 %v2118, %v2265
      %v2341 = vadd.f32 %v2119, %v2268
      %v2342 = vadd.f32 %v2120, %v2270
      %v2343 = vadd.f32 %v2121, %v2273
      %v2344 = vadd.f32 %v2122, %v2275
      %v2345 = vadd.f32 %v2123, %v2278
      %v2346 = vadd.f32 %v2124, %v2280
      %v2347 = vadd.f32 %v2125, %v2283
      %v2348 = vadd.f32 %v2126, %v2285
      %v2349 = vadd.f32 %v2127, %v2288
      %v2350 = vadd.f32 %v2128, %v2290
      %v2351 = vadd.f32 %v2129, %v2293
      %v2352 = vadd.f32 %v2130, %v2295
      %v2353 = vadd.f32 %v2131, %v2298
      %v2354 = vadd.f32 %v2132, %v2300
      %v2355 = vadd.f32 %v2133, %v2303
      %v2356 = vadd.f32 %v2134, %v2305
      %v2357 = vadd.f32 %v2135, %v2308
      %v2358 = vadd.f32 %v2136, %v2310
      %v2359 = vadd.f32 %v2137, %v2313
      %v2360 = vadd.f32 %v2138, %v2315
      %v2361 = vadd.f32 %v2139, %v2318
      %v2362 = vadd.f32 %v2140, %v2320
      %v2363 = vadd.f32 %v2141, %v2323
      %v2364 = vadd.f32 %v2142, %v2325
      %v2365 = vadd.f32 %v2143, %v2328
      %v2366 = vadd.f32 %v2144, %v2330
      %v2367 = vadd.f32 %v2145, %v2333
      %v2368 = vadd.f32 %v2146, %v2335
      %v2369 = vld [vmem:[%s2] sm:$0x1]
      %v2371 = vperm.slane %v2369, 0
      %v2373 = vmul.f32 %v2337, %v2371
      %v2374 = vmul.f32 %v2338, %v2371
      %v2375 = vmul.f32 %v2339, %v2371
      %v2376 = vmul.f32 %v2340, %v2371
      %v2377 = vmul.f32 %v2341, %v2371
      %v2378 = vmul.f32 %v2342, %v2371
      %v2379 = vmul.f32 %v2343, %v2371
      %v2380 = vmul.f32 %v2344, %v2371
      %v2381 = vmul.f32 %v2345, %v2371
      %v2382 = vmul.f32 %v2346, %v2371
      %v2383 = vmul.f32 %v2347, %v2371
      %v2384 = vmul.f32 %v2348, %v2371
      %v2385 = vmul.f32 %v2349, %v2371
      %v2386 = vmul.f32 %v2350, %v2371
      %v2387 = vmul.f32 %v2351, %v2371
      %v2388 = vmul.f32 %v2352, %v2371
      %v2389 = vmul.f32 %v2353, %v2371
      %v2390 = vmul.f32 %v2354, %v2371
      %v2391 = vmul.f32 %v2355, %v2371
      %v2392 = vmul.f32 %v2356, %v2371
      %v2393 = vmul.f32 %v2357, %v2371
      %v2394 = vmul.f32 %v2358, %v2371
      %v2395 = vmul.f32 %v2359, %v2371
      %v2396 = vmul.f32 %v2360, %v2371
      %v2397 = vmul.f32 %v2361, %v2371
      %v2398 = vmul.f32 %v2362, %v2371
      %v2399 = vmul.f32 %v2363, %v2371
      %v2400 = vmul.f32 %v2364, %v2371
      %v2401 = vmul.f32 %v2365, %v2371
      %v2402 = vmul.f32 %v2366, %v2371
      %v2403 = vmul.f32 %v2367, %v2371
      %v2404 = vmul.f32 %v2368, %v2371
      %v2405 = vld [vmem:[%s3] sm:$0x1]
      %v2407 = vperm.slane %v2405, 0
      %v2409 = vadd.f32 %v2373, %v2407
      %v2410 = vadd.f32 %v2374, %v2407
      %v2411 = vadd.f32 %v2375, %v2407
      %v2412 = vadd.f32 %v2376, %v2407
      %v2413 = vadd.f32 %v2377, %v2407
      %v2414 = vadd.f32 %v2378, %v2407
      %v2415 = vadd.f32 %v2379, %v2407
      %v2416 = vadd.f32 %v2380, %v2407
      %v2417 = vadd.f32 %v2381, %v2407
      %v2418 = vadd.f32 %v2382, %v2407
      %v2419 = vadd.f32 %v2383, %v2407
      %v2420 = vadd.f32 %v2384, %v2407
      %v2421 = vadd.f32 %v2385, %v2407
      %v2422 = vadd.f32 %v2386, %v2407
      %v2423 = vadd.f32 %v2387, %v2407
      %v2424 = vadd.f32 %v2388, %v2407
      %v2425 = vadd.f32 %v2389, %v2407
      %v2426 = vadd.f32 %v2390, %v2407
      %v2427 = vadd.f32 %v2391, %v2407
      %v2428 = vadd.f32 %v2392, %v2407
      %v2429 = vadd.f32 %v2393, %v2407
      %v2430 = vadd.f32 %v2394, %v2407
      %v2431 = vadd.f32 %v2395, %v2407
      %v2432 = vadd.f32 %v2396, %v2407
      %v2433 = vadd.f32 %v2397, %v2407
      %v2434 = vadd.f32 %v2398, %v2407
      %v2435 = vadd.f32 %v2399, %v2407
      %v2436 = vadd.f32 %v2400, %v2407
      %v2437 = vadd.f32 %v2401, %v2407
      %v2438 = vadd.f32 %v2402, %v2407
      %v2439 = vadd.f32 %v2403, %v2407
      %v2440 = vadd.f32 %v2404, %v2407
      %v2441 = vmax.f32 %v2409, 0.0
      %v2442 = vmax.f32 %v2410, 0.0
      %v2443 = vmax.f32 %v2411, 0.0
      %v2444 = vmax.f32 %v2412, 0.0
      %v2445 = vmax.f32 %v2413, 0.0
      %v2446 = vmax.f32 %v2414, 0.0
      %v2447 = vmax.f32 %v2415, 0.0
      %v2448 = vmax.f32 %v2416, 0.0
      %v2449 = vmax.f32 %v2417, 0.0
      %v2450 = vmax.f32 %v2418, 0.0
      %v2451 = vmax.f32 %v2419, 0.0
      %v2452 = vmax.f32 %v2420, 0.0
      %v2453 = vmax.f32 %v2421, 0.0
      %v2454 = vmax.f32 %v2422, 0.0
      %v2455 = vmax.f32 %v2423, 0.0
      %v2456 = vmax.f32 %v2424, 0.0
      %v2457 = vmax.f32 %v2425, 0.0
      %v2458 = vmax.f32 %v2426, 0.0
      %v2459 = vmax.f32 %v2427, 0.0
      %v2460 = vmax.f32 %v2428, 0.0
      %v2461 = vmax.f32 %v2429, 0.0
      %v2462 = vmax.f32 %v2430, 0.0
      %v2463 = vmax.f32 %v2431, 0.0
      %v2464 = vmax.f32 %v2432, 0.0
      %v2465 = vmax.f32 %v2433, 0.0
      %v2466 = vmax.f32 %v2434, 0.0
      %v2467 = vmax.f32 %v2435, 0.0
      %v2468 = vmax.f32 %v2436, 0.0
      %v2469 = vmax.f32 %v2437, 0.0
      %v2470 = vmax.f32 %v2438, 0.0
      %v2471 = vmax.f32 %v2439, 0.0
      %v2472 = vmax.f32 %v2440, 0.0
      %s2473 = scalar_lea.vmem [#allocation3], 24
      %2474 = vst.msk [vmem:[%s2473 + $0x1] sm:$0xff] %vm280, %v2441
      %2475 = vst.msk [vmem:[%s2473 + $0x9] sm:$0xff] %vm280, %v2442
      %2476 = vst.msk [vmem:[%s2473 + $0x19] sm:$0xff] %vm280, %v2443
      %2477 = vst.msk [vmem:[%s2473 + $0x21] sm:$0xff] %vm280, %v2444
      %2478 = vst.msk [vmem:[%s2473 + $0x31] sm:$0xff] %vm280, %v2445
      %2479 = vst.msk [vmem:[%s2473 + $0x39] sm:$0xff] %vm280, %v2446
      %2480 = vst.msk [vmem:[%s2473 + $0x49] sm:$0xff] %vm280, %v2447
      %2481 = vst.msk [vmem:[%s2473 + $0x51] sm:$0xff] %vm280, %v2448
      %2482 = vst.msk [vmem:[%s2473 + $0x61] sm:$0xff] %vm280, %v2449
      %2483 = vst.msk [vmem:[%s2473 + $0x69] sm:$0xff] %vm280, %v2450
      %2484 = vst.msk [vmem:[%s2473 + $0x79] sm:$0xff] %vm280, %v2451
      %2485 = vst.msk [vmem:[%s2473 + $0x81] sm:$0xff] %vm280, %v2452
      %2486 = vst.msk [vmem:[%s2473 + $0x91] sm:$0xff] %vm280, %v2453
      %2487 = vst.msk [vmem:[%s2473 + $0x99] sm:$0xff] %vm280, %v2454
      %2488 = vst.msk [vmem:[%s2473 + $0xa9] sm:$0xff] %vm280, %v2455
      %2489 = vst.msk [vmem:[%s2473 + $0xb1] sm:$0xff] %vm280, %v2456
      %2490 = vst.msk [vmem:[%s2473 + $0xc1] sm:$0xff] %vm280, %v2457
      %2491 = vst.msk [vmem:[%s2473 + $0xc9] sm:$0xff] %vm280, %v2458
      %2492 = vst.msk [vmem:[%s2473 + $0xd9] sm:$0xff] %vm280, %v2459
      %2493 = vst.msk [vmem:[%s2473 + $0xe1] sm:$0xff] %vm280, %v2460
      %2494 = vst.msk [vmem:[%s2473 + $0xf1] sm:$0xff] %vm280, %v2461
      %2495 = vst.msk [vmem:[%s2473 + $0xf9] sm:$0xff] %vm280, %v2462
      %2496 = vst.msk [vmem:[%s2473 + $0x109] sm:$0xff] %vm280, %v2463
      %2497 = vst.msk [vmem:[%s2473 + $0x111] sm:$0xff] %vm280, %v2464
      %2498 = vst.msk [vmem:[%s2473 + $0x121] sm:$0xff] %vm280, %v2465
      %2499 = vst.msk [vmem:[%s2473 + $0x129] sm:$0xff] %vm280, %v2466
      %2500 = vst.msk [vmem:[%s2473 + $0x139] sm:$0xff] %vm280, %v2467
      %2501 = vst.msk [vmem:[%s2473 + $0x141] sm:$0xff] %vm280, %v2468
      %2502 = vst.msk [vmem:[%s2473 + $0x151] sm:$0xff] %vm280, %v2469
      %2503 = vst.msk [vmem:[%s2473 + $0x159] sm:$0xff] %vm280, %v2470
      %2504 = vst.msk [vmem:[%s2473 + $0x169] sm:$0xff] %vm280, %v2471
      %2505 = vst.msk [vmem:[%s2473 + $0x171] sm:$0xff] %vm280, %v2472
      %v2506 = vld [vmem:[#allocation3] sm:$0xff]
      %v2507 = vld [vmem:[#allocation3 + $0x8] sm:$0xff]
      %v2508 = vld [vmem:[#allocation3 + $0x18] sm:$0xff]
      %v2509 = vld [vmem:[#allocation3 + $0x20] sm:$0xff]
      %v2510 = vld [vmem:[#allocation3 + $0x30] sm:$0xff]
      %v2511 = vld [vmem:[#allocation3 + $0x38] sm:$0xff]
      %v2512 = vld [vmem:[#allocation3 + $0x48] sm:$0xff]
      %v2513 = vld [vmem:[#allocation3 + $0x50] sm:$0xff]
      %v2514 = vld [vmem:[#allocation3 + $0x60] sm:$0xff]
      %v2515 = vld [vmem:[#allocation3 + $0x68] sm:$0xff]
      %v2516 = vld [vmem:[#allocation3 + $0x78] sm:$0xff]
      %v2517 = vld [vmem:[#allocation3 + $0x80] sm:$0xff]
      %v2518 = vld [vmem:[#allocation3 + $0x90] sm:$0xff]
      %v2519 = vld [vmem:[#allocation3 + $0x98] sm:$0xff]
      %v2520 = vld [vmem:[#allocation3 + $0xa8] sm:$0xff]
      %v2521 = vld [vmem:[#allocation3 + $0xb0] sm:$0xff]
      %v2522 = vld [vmem:[#allocation3 + $0xc0] sm:$0xff]
      %v2523 = vld [vmem:[#allocation3 + $0xc8] sm:$0xff]
      %v2524 = vld [vmem:[#allocation3 + $0xd8] sm:$0xff]
      %v2525 = vld [vmem:[#allocation3 + $0xe0] sm:$0xff]
      %v2526 = vld [vmem:[#allocation3 + $0xf0] sm:$0xff]
      %v2527 = vld [vmem:[#allocation3 + $0xf8] sm:$0xff]
      %v2528 = vld [vmem:[#allocation3 + $0x108] sm:$0xff]
      %v2529 = vld [vmem:[#allocation3 + $0x110] sm:$0xff]
      %v2530 = vld [vmem:[#allocation3 + $0x120] sm:$0xff]
      %v2531 = vld [vmem:[#allocation3 + $0x128] sm:$0xff]
      %v2532 = vld [vmem:[#allocation3 + $0x138] sm:$0xff]
      %v2533 = vld [vmem:[#allocation3 + $0x140] sm:$0xff]
      %v2534 = vld [vmem:[#allocation3 + $0x150] sm:$0xff]
      %v2535 = vld [vmem:[#allocation3 + $0x158] sm:$0xff]
      %v2536 = vld [vmem:[#allocation3 + $0x168] sm:$0xff]
      %v2537 = vld [vmem:[#allocation3 + $0x170] sm:$0xff]
      %v2538 = vpack.c.bf16 %v2507, %v2506
      %v2539 = vpack.c.bf16 %v2509, %v2508
      %v2540 = vpack.c.bf16 %v2511, %v2510
      %v2541 = vpack.c.bf16 %v2513, %v2512
      %v2542 = vpack.c.bf16 %v2515, %v2514
      %v2543 = vpack.c.bf16 %v2517, %v2516
      %v2544 = vpack.c.bf16 %v2519, %v2518
      %v2545 = vpack.c.bf16 %v2521, %v2520
      %v2546 = vpack.c.bf16 %v2523, %v2522
      %v2547 = vpack.c.bf16 %v2525, %v2524
      %v2548 = vpack.c.bf16 %v2527, %v2526
      %v2549 = vpack.c.bf16 %v2529, %v2528
      %v2550 = vpack.c.bf16 %v2531, %v2530
      %v2551 = vpack.c.bf16 %v2533, %v2532
      %v2552 = vpack.c.bf16 %v2535, %v2534
      %v2553 = vpack.c.bf16 %v2537, %v2536
      %v2554 = vld [vmem:[%s4] sm:$0xf]
      %v2555 = vld [vmem:[#allocation3 + $0x1] sm:$0xff]
      %v2556 = vld [vmem:[#allocation3 + $0x9] sm:$0xff]
      %v2557 = vld [vmem:[#allocation3 + $0x19] sm:$0xff]
      %v2558 = vld [vmem:[#allocation3 + $0x21] sm:$0xff]
      %v2559 = vld [vmem:[#allocation3 + $0x31] sm:$0xff]
      %v2560 = vld [vmem:[#allocation3 + $0x39] sm:$0xff]
      %v2561 = vld [vmem:[#allocation3 + $0x49] sm:$0xff]
      %v2562 = vld [vmem:[#allocation3 + $0x51] sm:$0xff]
      %v2563 = vld [vmem:[#allocation3 + $0x61] sm:$0xff]
      %v2564 = vld [vmem:[#allocation3 + $0x69] sm:$0xff]
      %v2565 = vld [vmem:[#allocation3 + $0x79] sm:$0xff]
      %v2566 = vld [vmem:[#allocation3 + $0x81] sm:$0xff]
      %v2567 = vld [vmem:[#allocation3 + $0x91] sm:$0xff]
      %v2568 = vld [vmem:[#allocation3 + $0x99] sm:$0xff]
      %v2569 = vld [vmem:[#allocation3 + $0xa9] sm:$0xff]
      %v2570 = vld [vmem:[#allocation3 + $0xb1] sm:$0xff]
      %v2571 = vld [vmem:[#allocation3 + $0xc1] sm:$0xff]
      %v2572 = vld [vmem:[#allocation3 + $0xc9] sm:$0xff]
      %v2573 = vld [vmem:[#allocation3 + $0xd9] sm:$0xff]
      %v2574 = vld [vmem:[#allocation3 + $0xe1] sm:$0xff]
      %v2575 = vld [vmem:[#allocation3 + $0xf1] sm:$0xff]
      %v2576 = vld [vmem:[#allocation3 + $0xf9] sm:$0xff]
      %v2577 = vld [vmem:[#allocation3 + $0x109] sm:$0xff]
      %v2578 = vld [vmem:[#allocation3 + $0x111] sm:$0xff]
      %v2579 = vld [vmem:[#allocation3 + $0x121] sm:$0xff]
      %v2580 = vld [vmem:[#allocation3 + $0x129] sm:$0xff]
      %v2581 = vld [vmem:[#allocation3 + $0x139] sm:$0xff]
      %v2582 = vld [vmem:[#allocation3 + $0x141] sm:$0xff]
      %v2583 = vld [vmem:[#allocation3 + $0x151] sm:$0xff]
      %v2584 = vld [vmem:[#allocation3 + $0x159] sm:$0xff]
      %v2585 = vld [vmem:[#allocation3 + $0x169] sm:$0xff]
      %v2586 = vld [vmem:[#allocation3 + $0x171] sm:$0xff]
      %v2587 = vpack.c.bf16 %v2556, %v2555
      %v2588 = vpack.c.bf16 %v2558, %v2557
      %v2589 = vpack.c.bf16 %v2560, %v2559
      %v2590 = vpack.c.bf16 %v2562, %v2561
      %v2591 = vpack.c.bf16 %v2564, %v2563
      %v2592 = vpack.c.bf16 %v2566, %v2565
      %v2593 = vpack.c.bf16 %v2568, %v2567
      %v2594 = vpack.c.bf16 %v2570, %v2569
      %v2595 = vpack.c.bf16 %v2572, %v2571
      %v2596 = vpack.c.bf16 %v2574, %v2573
      %v2597 = vpack.c.bf16 %v2576, %v2575
      %v2598 = vpack.c.bf16 %v2578, %v2577
      %v2599 = vpack.c.bf16 %v2580, %v2579
      %v2600 = vpack.c.bf16 %v2582, %v2581
      %v2601 = vpack.c.bf16 %v2584, %v2583
      %v2602 = vpack.c.bf16 %v2586, %v2585
      %s2603 = scalar_lea.vmem %s4, 4
      %v2604 = vld [vmem:[%s2603] sm:$0xf]
      %v2606 = vsel %vm280, %v2587, 0
      %v2609 = vsel %vm280, %v2588, 0
      %v2612 = vsel %vm280, %v2589, 0
      %v2615 = vsel %vm280, %v2590, 0
      %v2618 = vsel %vm280, %v2591, 0
      %v2621 = vsel %vm280, %v2592, 0
      %v2624 = vsel %vm280, %v2593, 0
      %v2627 = vsel %vm280, %v2594, 0
      %v2630 = vsel %vm280, %v2595, 0
      %v2633 = vsel %vm280, %v2596, 0
      %v2636 = vsel %vm280, %v2597, 0
      %v2639 = vsel %vm280, %v2598, 0
      %v2642 = vsel %vm280, %v2599, 0
      %v2645 = vsel %vm280, %v2600, 0
      %v2648 = vsel %vm280, %v2601, 0
      %v2651 = vsel %vm280, %v2602, 0
      %v2654 = vsel %vm581, %v2604, 0
      %2656 = vmatpush.bf16.msra.mxu0 0
      %2657 = vmatpush.bf16.msra.mxu0 0
      %2658 = vmatpush.bf16.msra.mxu0 0
      %2659 = vmatpush.bf16.msra.mxu0 0
      %2660 = vmatpush.bf16.msra.mxu0 0
      %2661 = vmatpush.bf16.msra.mxu0 0
      %2662 = vmatpush.bf16.msra.mxu0 0
      %2663 = vmatpush.bf16.msra.mxu0 %v2654
      %2664 = vmatmul.bf16.gmra.mxu0 %v2606
      %v2665 = vpop.f32.mrf.mxu0
      %v2666 = vadd.f32 0.0, %v2665
      %v2667 = vpop.f32.mrf.mxu0
      %v2668 = vadd.f32 0.0, %v2667
      %2669 = vmatmul.bf16.gmra.mxu0 %v2609
      %v2670 = vpop.f32.mrf.mxu0
      %v2671 = vadd.f32 0.0, %v2670
      %v2672 = vpop.f32.mrf.mxu0
      %v2673 = vadd.f32 0.0, %v2672
      %2674 = vmatmul.bf16.gmra.mxu0 %v2612
      %v2675 = vpop.f32.mrf.mxu0
      %v2676 = vadd.f32 0.0, %v2675
      %v2677 = vpop.f32.mrf.mxu0
      %v2678 = vadd.f32 0.0, %v2677
      %2679 = vmatmul.bf16.gmra.mxu0 %v2615
      %v2680 = vpop.f32.mrf.mxu0
      %v2681 = vadd.f32 0.0, %v2680
      %v2682 = vpop.f32.mrf.mxu0
      %v2683 = vadd.f32 0.0, %v2682
      %2684 = vmatmul.bf16.gmra.mxu0 %v2618
      %v2685 = vpop.f32.mrf.mxu0
      %v2686 = vadd.f32 0.0, %v2685
      %v2687 = vpop.f32.mrf.mxu0
      %v2688 = vadd.f32 0.0, %v2687
      %2689 = vmatmul.bf16.gmra.mxu0 %v2621
      %v2690 = vpop.f32.mrf.mxu0
      %v2691 = vadd.f32 0.0, %v2690
      %v2692 = vpop.f32.mrf.mxu0
      %v2693 = vadd.f32 0.0, %v2692
      %2694 = vmatmul.bf16.gmra.mxu0 %v2624
      %v2695 = vpop.f32.mrf.mxu0
      %v2696 = vadd.f32 0.0, %v2695
      %v2697 = vpop.f32.mrf.mxu0
      %v2698 = vadd.f32 0.0, %v2697
      %2699 = vmatmul.bf16.gmra.mxu0 %v2627
      %v2700 = vpop.f32.mrf.mxu0
      %v2701 = vadd.f32 0.0, %v2700
      %v2702 = vpop.f32.mrf.mxu0
      %v2703 = vadd.f32 0.0, %v2702
      %2704 = vmatmul.bf16.gmra.mxu0 %v2630
      %v2705 = vpop.f32.mrf.mxu0
      %v2706 = vadd.f32 0.0, %v2705
      %v2707 = vpop.f32.mrf.mxu0
      %v2708 = vadd.f32 0.0, %v2707
      %2709 = vmatmul.bf16.gmra.mxu0 %v2633
      %v2710 = vpop.f32.mrf.mxu0
      %v2711 = vadd.f32 0.0, %v2710
      %v2712 = vpop.f32.mrf.mxu0
      %v2713 = vadd.f32 0.0, %v2712
      %2714 = vmatmul.bf16.gmra.mxu0 %v2636
      %v2715 = vpop.f32.mrf.mxu0
      %v2716 = vadd.f32 0.0, %v2715
      %v2717 = vpop.f32.mrf.mxu0
      %v2718 = vadd.f32 0.0, %v2717
      %2719 = vmatmul.bf16.gmra.mxu0 %v2639
      %v2720 = vpop.f32.mrf.mxu0
      %v2721 = vadd.f32 0.0, %v2720
      %v2722 = vpop.f32.mrf.mxu0
      %v2723 = vadd.f32 0.0, %v2722
      %2724 = vmatmul.bf16.gmra.mxu0 %v2642
      %v2725 = vpop.f32.mrf.mxu0
      %v2726 = vadd.f32 0.0, %v2725
      %v2727 = vpop.f32.mrf.mxu0
      %v2728 = vadd.f32 0.0, %v2727
      %2729 = vmatmul.bf16.gmra.mxu0 %v2645
      %v2730 = vpop.f32.mrf.mxu0
      %v2731 = vadd.f32 0.0, %v2730
      %v2732 = vpop.f32.mrf.mxu0
      %v2733 = vadd.f32 0.0, %v2732
      %2734 = vmatmul.bf16.gmra.mxu0 %v2648
      %v2735 = vpop.f32.mrf.mxu0
      %v2736 = vadd.f32 0.0, %v2735
      %v2737 = vpop.f32.mrf.mxu0
      %v2738 = vadd.f32 0.0, %v2737
      %2739 = vmatmul.bf16.gmra.mxu0 %v2651
      %v2740 = vpop.f32.mrf.mxu0
      %v2741 = vadd.f32 0.0, %v2740
      %v2742 = vpop.f32.mrf.mxu0
      %v2743 = vadd.f32 0.0, %v2742
      %2744 = vdwg.mxu0
      %v2746 = vsel %vm280, %v2538, 0
      %v2749 = vsel %vm280, %v2539, 0
      %v2752 = vsel %vm280, %v2540, 0
      %v2755 = vsel %vm280, %v2541, 0
      %v2758 = vsel %vm280, %v2542, 0
      %v2761 = vsel %vm280, %v2543, 0
      %v2764 = vsel %vm280, %v2544, 0
      %v2767 = vsel %vm280, %v2545, 0
      %v2770 = vsel %vm280, %v2546, 0
      %v2773 = vsel %vm280, %v2547, 0
      %v2776 = vsel %vm280, %v2548, 0
      %v2779 = vsel %vm280, %v2549, 0
      %v2782 = vsel %vm280, %v2550, 0
      %v2785 = vsel %vm280, %v2551, 0
      %v2788 = vsel %vm280, %v2552, 0
      %v2791 = vsel %vm280, %v2553, 0
      %v2794 = vsel %vm581, %v2554, 0
      %2796 = vmatpush.bf16.msra.mxu0 0
      %2797 = vmatpush.bf16.msra.mxu0 0
      %2798 = vmatpush.bf16.msra.mxu0 0
      %2799 = vmatpush.bf16.msra.mxu0 0
      %2800 = vmatpush.bf16.msra.mxu0 0
      %2801 = vmatpush.bf16.msra.mxu0 0
      %2802 = vmatpush.bf16.msra.mxu0 0
      %2803 = vmatpush.bf16.msra.mxu0 %v2794
      %2804 = vmatmul.bf16.gmra.mxu0 %v2746
      %v2805 = vpop.f32.mrf.mxu0
      %v2806 = vadd.f32 %v2666, %v2805
      %v2807 = vpop.f32.mrf.mxu0
      %v2808 = vadd.f32 %v2668, %v2807
      %2809 = vmatmul.bf16.gmra.mxu0 %v2749
      %v2810 = vpop.f32.mrf.mxu0
      %v2811 = vadd.f32 %v2671, %v2810
      %v2812 = vpop.f32.mrf.mxu0
      %v2813 = vadd.f32 %v2673, %v2812
      %2814 = vmatmul.bf16.gmra.mxu0 %v2752
      %v2815 = vpop.f32.mrf.mxu0
      %v2816 = vadd.f32 %v2676, %v2815
      %v2817 = vpop.f32.mrf.mxu0
      %v2818 = vadd.f32 %v2678, %v2817
      %2819 = vmatmul.bf16.gmra.mxu0 %v2755
      %v2820 = vpop.f32.mrf.mxu0
      %v2821 = vadd.f32 %v2681, %v2820
      %v2822 = vpop.f32.mrf.mxu0
      %v2823 = vadd.f32 %v2683, %v2822
      %2824 = vmatmul.bf16.gmra.mxu0 %v2758
      %v2825 = vpop.f32.mrf.mxu0
      %v2826 = vadd.f32 %v2686, %v2825
      %v2827 = vpop.f32.mrf.mxu0
      %v2828 = vadd.f32 %v2688, %v2827
      %2829 = vmatmul.bf16.gmra.mxu0 %v2761
      %v2830 = vpop.f32.mrf.mxu0
      %v2831 = vadd.f32 %v2691, %v2830
      %v2832 = vpop.f32.mrf.mxu0
      %v2833 = vadd.f32 %v2693, %v2832
      %2834 = vmatmul.bf16.gmra.mxu0 %v2764
      %v2835 = vpop.f32.mrf.mxu0
      %v2836 = vadd.f32 %v2696, %v2835
      %v2837 = vpop.f32.mrf.mxu0
      %v2838 = vadd.f32 %v2698, %v2837
      %2839 = vmatmul.bf16.gmra.mxu0 %v2767
      %v2840 = vpop.f32.mrf.mxu0
      %v2841 = vadd.f32 %v2701, %v2840
      %v2842 = vpop.f32.mrf.mxu0
      %v2843 = vadd.f32 %v2703, %v2842
      %2844 = vmatmul.bf16.gmra.mxu0 %v2770
      %v2845 = vpop.f32.mrf.mxu0
      %v2846 = vadd.f32 %v2706, %v2845
      %v2847 = vpop.f32.mrf.mxu0
      %v2848 = vadd.f32 %v2708, %v2847
      %2849 = vmatmul.bf16.gmra.mxu0 %v2773
      %v2850 = vpop.f32.mrf.mxu0
      %v2851 = vadd.f32 %v2711, %v2850
      %v2852 = vpop.f32.mrf.mxu0
      %v2853 = vadd.f32 %v2713, %v2852
      %2854 = vmatmul.bf16.gmra.mxu0 %v2776
      %v2855 = vpop.f32.mrf.mxu0
      %v2856 = vadd.f32 %v2716, %v2855
      %v2857 = vpop.f32.mrf.mxu0
      %v2858 = vadd.f32 %v2718, %v2857
      %2859 = vmatmul.bf16.gmra.mxu0 %v2779
      %v2860 = vpop.f32.mrf.mxu0
      %v2861 = vadd.f32 %v2721, %v2860
      %v2862 = vpop.f32.mrf.mxu0
      %v2863 = vadd.f32 %v2723, %v2862
      %2864 = vmatmul.bf16.gmra.mxu0 %v2782
      %v2865 = vpop.f32.mrf.mxu0
      %v2866 = vadd.f32 %v2726, %v2865
      %v2867 = vpop.f32.mrf.mxu0
      %v2868 = vadd.f32 %v2728, %v2867
      %2869 = vmatmul.bf16.gmra.mxu0 %v2785
      %v2870 = vpop.f32.mrf.mxu0
      %v2871 = vadd.f32 %v2731, %v2870
      %v2872 = vpop.f32.mrf.mxu0
      %v2873 = vadd.f32 %v2733, %v2872
      %2874 = vmatmul.bf16.gmra.mxu0 %v2788
      %v2875 = vpop.f32.mrf.mxu0
      %v2876 = vadd.f32 %v2736, %v2875
      %v2877 = vpop.f32.mrf.mxu0
      %v2878 = vadd.f32 %v2738, %v2877
      %2879 = vmatmul.bf16.gmra.mxu0 %v2791
      %v2880 = vpop.f32.mrf.mxu0
      %v2881 = vadd.f32 %v2741, %v2880
      %v2882 = vpop.f32.mrf.mxu0
      %v2883 = vadd.f32 %v2743, %v2882
      %2884 = vdwg.mxu0
      %v2885 = vld [vmem:[#allocation3 + $0x2] sm:$0xff]
      %v2886 = vld [vmem:[#allocation3 + $0xa] sm:$0xff]
      %v2887 = vld [vmem:[#allocation3 + $0x1a] sm:$0xff]
      %v2888 = vld [vmem:[#allocation3 + $0x22] sm:$0xff]
      %v2889 = vld [vmem:[#allocation3 + $0x32] sm:$0xff]
      %v2890 = vld [vmem:[#allocation3 + $0x3a] sm:$0xff]
      %v2891 = vld [vmem:[#allocation3 + $0x4a] sm:$0xff]
      %v2892 = vld [vmem:[#allocation3 + $0x52] sm:$0xff]
      %v2893 = vld [vmem:[#allocation3 + $0x62] sm:$0xff]
      %v2894 = vld [vmem:[#allocation3 + $0x6a] sm:$0xff]
      %v2895 = vld [vmem:[#allocation3 + $0x7a] sm:$0xff]
      %v2896 = vld [vmem:[#allocation3 + $0x82] sm:$0xff]
      %v2897 = vld [vmem:[#allocation3 + $0x92] sm:$0xff]
      %v2898 = vld [vmem:[#allocation3 + $0x9a] sm:$0xff]
      %v2899 = vld [vmem:[#allocation3 + $0xaa] sm:$0xff]
      %v2900 = vld [vmem:[#allocation3 + $0xb2] sm:$0xff]
      %v2901 = vld [vmem:[#allocation3 + $0xc2] sm:$0xff]
      %v2902 = vld [vmem:[#allocation3 + $0xca] sm:$0xff]
      %v2903 = vld [vmem:[#allocation3 + $0xda] sm:$0xff]
      %v2904 = vld [vmem:[#allocation3 + $0xe2] sm:$0xff]
      %v2905 = vld [vmem:[#allocation3 + $0xf2] sm:$0xff]
      %v2906 = vld [vmem:[#allocation3 + $0xfa] sm:$0xff]
      %v2907 = vld [vmem:[#allocation3 + $0x10a] sm:$0xff]
      %v2908 = vld [vmem:[#allocation3 + $0x112] sm:$0xff]
      %v2909 = vld [vmem:[#allocation3 + $0x122] sm:$0xff]
      %v2910 = vld [vmem:[#allocation3 + $0x12a] sm:$0xff]
      %v2911 = vld [vmem:[#allocation3 + $0x13a] sm:$0xff]
      %v2912 = vld [vmem:[#allocation3 + $0x142] sm:$0xff]
      %v2913 = vld [vmem:[#allocation3 + $0x152] sm:$0xff]
      %v2914 = vld [vmem:[#allocation3 + $0x15a] sm:$0xff]
      %v2915 = vld [vmem:[#allocation3 + $0x16a] sm:$0xff]
      %v2916 = vld [vmem:[#allocation3 + $0x172] sm:$0xff]
      %v2917 = vpack.c.bf16 %v2886, %v2885
      %v2918 = vpack.c.bf16 %v2888, %v2887
      %v2919 = vpack.c.bf16 %v2890, %v2889
      %v2920 = vpack.c.bf16 %v2892, %v2891
      %v2921 = vpack.c.bf16 %v2894, %v2893
      %v2922 = vpack.c.bf16 %v2896, %v2895
      %v2923 = vpack.c.bf16 %v2898, %v2897
      %v2924 = vpack.c.bf16 %v2900, %v2899
      %v2925 = vpack.c.bf16 %v2902, %v2901
      %v2926 = vpack.c.bf16 %v2904, %v2903
      %v2927 = vpack.c.bf16 %v2906, %v2905
      %v2928 = vpack.c.bf16 %v2908, %v2907
      %v2929 = vpack.c.bf16 %v2910, %v2909
      %v2930 = vpack.c.bf16 %v2912, %v2911
      %v2931 = vpack.c.bf16 %v2914, %v2913
      %v2932 = vpack.c.bf16 %v2916, %v2915
      %s2933 = scalar_lea.vmem %s4, 8
      %v2934 = vld [vmem:[%s2933] sm:$0xf]
      %v2936 = vsel %vm280, %v2917, 0
      %v2939 = vsel %vm280, %v2918, 0
      %v2942 = vsel %vm280, %v2919, 0
      %v2945 = vsel %vm280, %v2920, 0
      %v2948 = vsel %vm280, %v2921, 0
      %v2951 = vsel %vm280, %v2922, 0
      %v2954 = vsel %vm280, %v2923, 0
      %v2957 = vsel %vm280, %v2924, 0
      %v2960 = vsel %vm280, %v2925, 0
      %v2963 = vsel %vm280, %v2926, 0
      %v2966 = vsel %vm280, %v2927, 0
      %v2969 = vsel %vm280, %v2928, 0
      %v2972 = vsel %vm280, %v2929, 0
      %v2975 = vsel %vm280, %v2930, 0
      %v2978 = vsel %vm280, %v2931, 0
      %v2981 = vsel %vm280, %v2932, 0
      %v2984 = vsel %vm581, %v2934, 0
      %2986 = vmatpush.bf16.msra.mxu0 0
      %2987 = vmatpush.bf16.msra.mxu0 0
      %2988 = vmatpush.bf16.msra.mxu0 0
      %2989 = vmatpush.bf16.msra.mxu0 0
      %2990 = vmatpush.bf16.msra.mxu0 0
      %2991 = vmatpush.bf16.msra.mxu0 0
      %2992 = vmatpush.bf16.msra.mxu0 0
      %2993 = vmatpush.bf16.msra.mxu0 %v2984
      %2994 = vmatmul.bf16.gmra.mxu0 %v2936
      %v2995 = vpop.f32.mrf.mxu0
      %v2996 = vadd.f32 0.0, %v2995
      %v2997 = vpop.f32.mrf.mxu0
      %v2998 = vadd.f32 0.0, %v2997
      %2999 = vmatmul.bf16.gmra.mxu0 %v2939
      %v3000 = vpop.f32.mrf.mxu0
      %v3001 = vadd.f32 0.0, %v3000
      %v3002 = vpop.f32.mrf.mxu0
      %v3003 = vadd.f32 0.0, %v3002
      %3004 = vmatmul.bf16.gmra.mxu0 %v2942
      %v3005 = vpop.f32.mrf.mxu0
      %v3006 = vadd.f32 0.0, %v3005
      %v3007 = vpop.f32.mrf.mxu0
      %v3008 = vadd.f32 0.0, %v3007
      %3009 = vmatmul.bf16.gmra.mxu0 %v2945
      %v3010 = vpop.f32.mrf.mxu0
      %v3011 = vadd.f32 0.0, %v3010
      %v3012 = vpop.f32.mrf.mxu0
      %v3013 = vadd.f32 0.0, %v3012
      %3014 = vmatmul.bf16.gmra.mxu0 %v2948
      %v3015 = vpop.f32.mrf.mxu0
      %v3016 = vadd.f32 0.0, %v3015
      %v3017 = vpop.f32.mrf.mxu0
      %v3018 = vadd.f32 0.0, %v3017
      %3019 = vmatmul.bf16.gmra.mxu0 %v2951
      %v3020 = vpop.f32.mrf.mxu0
      %v3021 = vadd.f32 0.0, %v3020
      %v3022 = vpop.f32.mrf.mxu0
      %v3023 = vadd.f32 0.0, %v3022
      %3024 = vmatmul.bf16.gmra.mxu0 %v2954
      %v3025 = vpop.f32.mrf.mxu0
      %v3026 = vadd.f32 0.0, %v3025
      %v3027 = vpop.f32.mrf.mxu0
      %v3028 = vadd.f32 0.0, %v3027
      %3029 = vmatmul.bf16.gmra.mxu0 %v2957
      %v3030 = vpop.f32.mrf.mxu0
      %v3031 = vadd.f32 0.0, %v3030
      %v3032 = vpop.f32.mrf.mxu0
      %v3033 = vadd.f32 0.0, %v3032
      %3034 = vmatmul.bf16.gmra.mxu0 %v2960
      %v3035 = vpop.f32.mrf.mxu0
      %v3036 = vadd.f32 0.0, %v3035
      %v3037 = vpop.f32.mrf.mxu0
      %v3038 = vadd.f32 0.0, %v3037
      %3039 = vmatmul.bf16.gmra.mxu0 %v2963
      %v3040 = vpop.f32.mrf.mxu0
      %v3041 = vadd.f32 0.0, %v3040
      %v3042 = vpop.f32.mrf.mxu0
      %v3043 = vadd.f32 0.0, %v3042
      %3044 = vmatmul.bf16.gmra.mxu0 %v2966
      %v3045 = vpop.f32.mrf.mxu0
      %v3046 = vadd.f32 0.0, %v3045
      %v3047 = vpop.f32.mrf.mxu0
      %v3048 = vadd.f32 0.0, %v3047
      %3049 = vmatmul.bf16.gmra.mxu0 %v2969
      %v3050 = vpop.f32.mrf.mxu0
      %v3051 = vadd.f32 0.0, %v3050
      %v3052 = vpop.f32.mrf.mxu0
      %v3053 = vadd.f32 0.0, %v3052
      %3054 = vmatmul.bf16.gmra.mxu0 %v2972
      %v3055 = vpop.f32.mrf.mxu0
      %v3056 = vadd.f32 0.0, %v3055
      %v3057 = vpop.f32.mrf.mxu0
      %v3058 = vadd.f32 0.0, %v3057
      %3059 = vmatmul.bf16.gmra.mxu0 %v2975
      %v3060 = vpop.f32.mrf.mxu0
      %v3061 = vadd.f32 0.0, %v3060
      %v3062 = vpop.f32.mrf.mxu0
      %v3063 = vadd.f32 0.0, %v3062
      %3064 = vmatmul.bf16.gmra.mxu0 %v2978
      %v3065 = vpop.f32.mrf.mxu0
      %v3066 = vadd.f32 0.0, %v3065
      %v3067 = vpop.f32.mrf.mxu0
      %v3068 = vadd.f32 0.0, %v3067
      %3069 = vmatmul.bf16.gmra.mxu0 %v2981
      %v3070 = vpop.f32.mrf.mxu0
      %v3071 = vadd.f32 0.0, %v3070
      %v3072 = vpop.f32.mrf.mxu0
      %v3073 = vadd.f32 0.0, %v3072
      %3074 = vdwg.mxu0
      %v3075 = vadd.f32 %v2806, %v2996
      %v3076 = vadd.f32 %v2808, %v2998
      %v3077 = vadd.f32 %v2811, %v3001
      %v3078 = vadd.f32 %v2813, %v3003
      %v3079 = vadd.f32 %v2816, %v3006
      %v3080 = vadd.f32 %v2818, %v3008
      %v3081 = vadd.f32 %v2821, %v3011
      %v3082 = vadd.f32 %v2823, %v3013
      %v3083 = vadd.f32 %v2826, %v3016
      %v3084 = vadd.f32 %v2828, %v3018
      %v3085 = vadd.f32 %v2831, %v3021
      %v3086 = vadd.f32 %v2833, %v3023
      %v3087 = vadd.f32 %v2836, %v3026
      %v3088 = vadd.f32 %v2838, %v3028
      %v3089 = vadd.f32 %v2841, %v3031
      %v3090 = vadd.f32 %v2843, %v3033
      %v3091 = vadd.f32 %v2846, %v3036
      %v3092 = vadd.f32 %v2848, %v3038
      %v3093 = vadd.f32 %v2851, %v3041
      %v3094 = vadd.f32 %v2853, %v3043
      %v3095 = vadd.f32 %v2856, %v3046
      %v3096 = vadd.f32 %v2858, %v3048
      %v3097 = vadd.f32 %v2861, %v3051
      %v3098 = vadd.f32 %v2863, %v3053
      %v3099 = vadd.f32 %v2866, %v3056
      %v3100 = vadd.f32 %v2868, %v3058
      %v3101 = vadd.f32 %v2871, %v3061
      %v3102 = vadd.f32 %v2873, %v3063
      %v3103 = vadd.f32 %v2876, %v3066
      %v3104 = vadd.f32 %v2878, %v3068
      %v3105 = vadd.f32 %v2881, %v3071
      %v3106 = vadd.f32 %v2883, %v3073
      %v3107 = vld [vmem:[%s2473] sm:$0xff]
      %v3108 = vld [vmem:[%s2473 + $0x8] sm:$0xff]
      %v3109 = vld [vmem:[%s2473 + $0x18] sm:$0xff]
      %v3110 = vld [vmem:[%s2473 + $0x20] sm:$0xff]
      %v3111 = vld [vmem:[%s2473 + $0x30] sm:$0xff]
      %v3112 = vld [vmem:[%s2473 + $0x38] sm:$0xff]
      %v3113 = vld [vmem:[%s2473 + $0x48] sm:$0xff]
      %v3114 = vld [vmem:[%s2473 + $0x50] sm:$0xff]
      %v3115 = vld [vmem:[%s2473 + $0x60] sm:$0xff]
      %v3116 = vld [vmem:[%s2473 + $0x68] sm:$0xff]
      %v3117 = vld [vmem:[%s2473 + $0x78] sm:$0xff]
      %v3118 = vld [vmem:[%s2473 + $0x80] sm:$0xff]
      %v3119 = vld [vmem:[%s2473 + $0x90] sm:$0xff]
      %v3120 = vld [vmem:[%s2473 + $0x98] sm:$0xff]
      %v3121 = vld [vmem:[%s2473 + $0xa8] sm:$0xff]
      %v3122 = vld [vmem:[%s2473 + $0xb0] sm:$0xff]
      %v3123 = vld [vmem:[%s2473 + $0xc0] sm:$0xff]
      %v3124 = vld [vmem:[%s2473 + $0xc8] sm:$0xff]
      %v3125 = vld [vmem:[%s2473 + $0xd8] sm:$0xff]
      %v3126 = vld [vmem:[%s2473 + $0xe0] sm:$0xff]
      %v3127 = vld [vmem:[%s2473 + $0xf0] sm:$0xff]
      %v3128 = vld [vmem:[%s2473 + $0xf8] sm:$0xff]
      %v3129 = vld [vmem:[%s2473 + $0x108] sm:$0xff]
      %v3130 = vld [vmem:[%s2473 + $0x110] sm:$0xff]
      %v3131 = vld [vmem:[%s2473 + $0x120] sm:$0xff]
      %v3132 = vld [vmem:[%s2473 + $0x128] sm:$0xff]
      %v3133 = vld [vmem:[%s2473 + $0x138] sm:$0xff]
      %v3134 = vld [vmem:[%s2473 + $0x140] sm:$0xff]
      %v3135 = vld [vmem:[%s2473 + $0x150] sm:$0xff]
      %v3136 = vld [vmem:[%s2473 + $0x158] sm:$0xff]
      %v3137 = vld [vmem:[%s2473 + $0x168] sm:$0xff]
      %v3138 = vld [vmem:[%s2473 + $0x170] sm:$0xff]
      %v3139 = vpack.c.bf16 %v3108, %v3107
      %v3140 = vpack.c.bf16 %v3110, %v3109
      %v3141 = vpack.c.bf16 %v3112, %v3111
      %v3142 = vpack.c.bf16 %v3114, %v3113
      %v3143 = vpack.c.bf16 %v3116, %v3115
      %v3144 = vpack.c.bf16 %v3118, %v3117
      %v3145 = vpack.c.bf16 %v3120, %v3119
      %v3146 = vpack.c.bf16 %v3122, %v3121
      %v3147 = vpack.c.bf16 %v3124, %v3123
      %v3148 = vpack.c.bf16 %v3126, %v3125
      %v3149 = vpack.c.bf16 %v3128, %v3127
      %v3150 = vpack.c.bf16 %v3130, %v3129
      %v3151 = vpack.c.bf16 %v3132, %v3131
      %v3152 = vpack.c.bf16 %v3134, %v3133
      %v3153 = vpack.c.bf16 %v3136, %v3135
      %v3154 = vpack.c.bf16 %v3138, %v3137
      %s3155 = scalar_lea.vmem %s4, 12
      %v3156 = vld [vmem:[%s3155] sm:$0xf]
      %v3158 = vsel %vm280, %v3139, 0
      %v3161 = vsel %vm280, %v3140, 0
      %v3164 = vsel %vm280, %v3141, 0
      %v3167 = vsel %vm280, %v3142, 0
      %v3170 = vsel %vm280, %v3143, 0
      %v3173 = vsel %vm280, %v3144, 0
      %v3176 = vsel %vm280, %v3145, 0
      %v3179 = vsel %vm280, %v3146, 0
      %v3182 = vsel %vm280, %v3147, 0
      %v3185 = vsel %vm280, %v3148, 0
      %v3188 = vsel %vm280, %v3149, 0
      %v3191 = vsel %vm280, %v3150, 0
      %v3194 = vsel %vm280, %v3151, 0
      %v3197 = vsel %vm280, %v3152, 0
      %v3200 = vsel %vm280, %v3153, 0
      %v3203 = vsel %vm280, %v3154, 0
      %v3206 = vsel %vm581, %v3156, 0
      %3208 = vmatpush.bf16.msra.mxu0 0
      %3209 = vmatpush.bf16.msra.mxu0 0
      %3210 = vmatpush.bf16.msra.mxu0 0
      %3211 = vmatpush.bf16.msra.mxu0 0
      %3212 = vmatpush.bf16.msra.mxu0 0
      %3213 = vmatpush.bf16.msra.mxu0 0
      %3214 = vmatpush.bf16.msra.mxu0 0
      %3215 = vmatpush.bf16.msra.mxu0 %v3206
      %3216 = vmatmul.bf16.gmra.mxu0 %v3158
      %v3217 = vpop.f32.mrf.mxu0
      %v3218 = vadd.f32 0.0, %v3217
      %v3219 = vpop.f32.mrf.mxu0
      %v3220 = vadd.f32 0.0, %v3219
      %3221 = vmatmul.bf16.gmra.mxu0 %v3161
      %v3222 = vpop.f32.mrf.mxu0
      %v3223 = vadd.f32 0.0, %v3222
      %v3224 = vpop.f32.mrf.mxu0
      %v3225 = vadd.f32 0.0, %v3224
      %3226 = vmatmul.bf16.gmra.mxu0 %v3164
      %v3227 = vpop.f32.mrf.mxu0
      %v3228 = vadd.f32 0.0, %v3227
      %v3229 = vpop.f32.mrf.mxu0
      %v3230 = vadd.f32 0.0, %v3229
      %3231 = vmatmul.bf16.gmra.mxu0 %v3167
      %v3232 = vpop.f32.mrf.mxu0
      %v3233 = vadd.f32 0.0, %v3232
      %v3234 = vpop.f32.mrf.mxu0
      %v3235 = vadd.f32 0.0, %v3234
      %3236 = vmatmul.bf16.gmra.mxu0 %v3170
      %v3237 = vpop.f32.mrf.mxu0
      %v3238 = vadd.f32 0.0, %v3237
      %v3239 = vpop.f32.mrf.mxu0
      %v3240 = vadd.f32 0.0, %v3239
      %3241 = vmatmul.bf16.gmra.mxu0 %v3173
      %v3242 = vpop.f32.mrf.mxu0
      %v3243 = vadd.f32 0.0, %v3242
      %v3244 = vpop.f32.mrf.mxu0
      %v3245 = vadd.f32 0.0, %v3244
      %3246 = vmatmul.bf16.gmra.mxu0 %v3176
      %v3247 = vpop.f32.mrf.mxu0
      %v3248 = vadd.f32 0.0, %v3247
      %v3249 = vpop.f32.mrf.mxu0
      %v3250 = vadd.f32 0.0, %v3249
      %3251 = vmatmul.bf16.gmra.mxu0 %v3179
      %v3252 = vpop.f32.mrf.mxu0
      %v3253 = vadd.f32 0.0, %v3252
      %v3254 = vpop.f32.mrf.mxu0
      %v3255 = vadd.f32 0.0, %v3254
      %3256 = vmatmul.bf16.gmra.mxu0 %v3182
      %v3257 = vpop.f32.mrf.mxu0
      %v3258 = vadd.f32 0.0, %v3257
      %v3259 = vpop.f32.mrf.mxu0
      %v3260 = vadd.f32 0.0, %v3259
      %3261 = vmatmul.bf16.gmra.mxu0 %v3185
      %v3262 = vpop.f32.mrf.mxu0
      %v3263 = vadd.f32 0.0, %v3262
      %v3264 = vpop.f32.mrf.mxu0
      %v3265 = vadd.f32 0.0, %v3264
      %3266 = vmatmul.bf16.gmra.mxu0 %v3188
      %v3267 = vpop.f32.mrf.mxu0
      %v3268 = vadd.f32 0.0, %v3267
      %v3269 = vpop.f32.mrf.mxu0
      %v3270 = vadd.f32 0.0, %v3269
      %3271 = vmatmul.bf16.gmra.mxu0 %v3191
      %v3272 = vpop.f32.mrf.mxu0
      %v3273 = vadd.f32 0.0, %v3272
      %v3274 = vpop.f32.mrf.mxu0
      %v3275 = vadd.f32 0.0, %v3274
      %3276 = vmatmul.bf16.gmra.mxu0 %v3194
      %v3277 = vpop.f32.mrf.mxu0
      %v3278 = vadd.f32 0.0, %v3277
      %v3279 = vpop.f32.mrf.mxu0
      %v3280 = vadd.f32 0.0, %v3279
      %3281 = vmatmul.bf16.gmra.mxu0 %v3197
      %v3282 = vpop.f32.mrf.mxu0
      %v3283 = vadd.f32 0.0, %v3282
      %v3284 = vpop.f32.mrf.mxu0
      %v3285 = vadd.f32 0.0, %v3284
      %3286 = vmatmul.bf16.gmra.mxu0 %v3200
      %v3287 = vpop.f32.mrf.mxu0
      %v3288 = vadd.f32 0.0, %v3287
      %v3289 = vpop.f32.mrf.mxu0
      %v3290 = vadd.f32 0.0, %v3289
      %3291 = vmatmul.bf16.gmra.mxu0 %v3203
      %v3292 = vpop.f32.mrf.mxu0
      %v3293 = vadd.f32 0.0, %v3292
      %v3294 = vpop.f32.mrf.mxu0
      %v3295 = vadd.f32 0.0, %v3294
      %3296 = vdwg.mxu0
      %v3297 = vadd.f32 %v3075, %v3218
      %v3298 = vadd.f32 %v3076, %v3220
      %v3299 = vadd.f32 %v3077, %v3223
      %v3300 = vadd.f32 %v3078, %v3225
      %v3301 = vadd.f32 %v3079, %v3228
      %v3302 = vadd.f32 %v3080, %v3230
      %v3303 = vadd.f32 %v3081, %v3233
      %v3304 = vadd.f32 %v3082, %v3235
      %v3305 = vadd.f32 %v3083, %v3238
      %v3306 = vadd.f32 %v3084, %v3240
      %v3307 = vadd.f32 %v3085, %v3243
      %v3308 = vadd.f32 %v3086, %v3245
      %v3309 = vadd.f32 %v3087, %v3248
      %v3310 = vadd.f32 %v3088, %v3250
      %v3311 = vadd.f32 %v3089, %v3253
      %v3312 = vadd.f32 %v3090, %v3255
      %v3313 = vadd.f32 %v3091, %v3258
      %v3314 = vadd.f32 %v3092, %v3260
      %v3315 = vadd.f32 %v3093, %v3263
      %v3316 = vadd.f32 %v3094, %v3265
      %v3317 = vadd.f32 %v3095, %v3268
      %v3318 = vadd.f32 %v3096, %v3270
      %v3319 = vadd.f32 %v3097, %v3273
      %v3320 = vadd.f32 %v3098, %v3275
      %v3321 = vadd.f32 %v3099, %v3278
      %v3322 = vadd.f32 %v3100, %v3280
      %v3323 = vadd.f32 %v3101, %v3283
      %v3324 = vadd.f32 %v3102, %v3285
      %v3325 = vadd.f32 %v3103, %v3288
      %v3326 = vadd.f32 %v3104, %v3290
      %v3327 = vadd.f32 %v3105, %v3293
      %v3328 = vadd.f32 %v3106, %v3295
      %v3329 = vld [vmem:[%s2473 + $0x1] sm:$0xff]
      %v3330 = vld [vmem:[%s2473 + $0x9] sm:$0xff]
      %v3331 = vld [vmem:[%s2473 + $0x19] sm:$0xff]
      %v3332 = vld [vmem:[%s2473 + $0x21] sm:$0xff]
      %v3333 = vld [vmem:[%s2473 + $0x31] sm:$0xff]
      %v3334 = vld [vmem:[%s2473 + $0x39] sm:$0xff]
      %v3335 = vld [vmem:[%s2473 + $0x49] sm:$0xff]
      %v3336 = vld [vmem:[%s2473 + $0x51] sm:$0xff]
      %v3337 = vld [vmem:[%s2473 + $0x61] sm:$0xff]
      %v3338 = vld [vmem:[%s2473 + $0x69] sm:$0xff]
      %v3339 = vld [vmem:[%s2473 + $0x79] sm:$0xff]
      %v3340 = vld [vmem:[%s2473 + $0x81] sm:$0xff]
      %v3341 = vld [vmem:[%s2473 + $0x91] sm:$0xff]
      %v3342 = vld [vmem:[%s2473 + $0x99] sm:$0xff]
      %v3343 = vld [vmem:[%s2473 + $0xa9] sm:$0xff]
      %v3344 = vld [vmem:[%s2473 + $0xb1] sm:$0xff]
      %v3345 = vld [vmem:[%s2473 + $0xc1] sm:$0xff]
      %v3346 = vld [vmem:[%s2473 + $0xc9] sm:$0xff]
      %v3347 = vld [vmem:[%s2473 + $0xd9] sm:$0xff]
      %v3348 = vld [vmem:[%s2473 + $0xe1] sm:$0xff]
      %v3349 = vld [vmem:[%s2473 + $0xf1] sm:$0xff]
      %v3350 = vld [vmem:[%s2473 + $0xf9] sm:$0xff]
      %v3351 = vld [vmem:[%s2473 + $0x109] sm:$0xff]
      %v3352 = vld [vmem:[%s2473 + $0x111] sm:$0xff]
      %v3353 = vld [vmem:[%s2473 + $0x121] sm:$0xff]
      %v3354 = vld [vmem:[%s2473 + $0x129] sm:$0xff]
      %v3355 = vld [vmem:[%s2473 + $0x139] sm:$0xff]
      %v3356 = vld [vmem:[%s2473 + $0x141] sm:$0xff]
      %v3357 = vld [vmem:[%s2473 + $0x151] sm:$0xff]
      %v3358 = vld [vmem:[%s2473 + $0x159] sm:$0xff]
      %v3359 = vld [vmem:[%s2473 + $0x169] sm:$0xff]
      %v3360 = vld [vmem:[%s2473 + $0x171] sm:$0xff]
      %v3361 = vpack.c.bf16 %v3330, %v3329
      %v3362 = vpack.c.bf16 %v3332, %v3331
      %v3363 = vpack.c.bf16 %v3334, %v3333
      %v3364 = vpack.c.bf16 %v3336, %v3335
      %v3365 = vpack.c.bf16 %v3338, %v3337
      %v3366 = vpack.c.bf16 %v3340, %v3339
      %v3367 = vpack.c.bf16 %v3342, %v3341
      %v3368 = vpack.c.bf16 %v3344, %v3343
      %v3369 = vpack.c.bf16 %v3346, %v3345
      %v3370 = vpack.c.bf16 %v3348, %v3347
      %v3371 = vpack.c.bf16 %v3350, %v3349
      %v3372 = vpack.c.bf16 %v3352, %v3351
      %v3373 = vpack.c.bf16 %v3354, %v3353
      %v3374 = vpack.c.bf16 %v3356, %v3355
      %v3375 = vpack.c.bf16 %v3358, %v3357
      %v3376 = vpack.c.bf16 %v3360, %v3359
      %s3377 = scalar_lea.vmem %s4, 16
      %v3378 = vld [vmem:[%s3377] sm:$0xf]
      %v3380 = vsel %vm280, %v3361, 0
      %v3383 = vsel %vm280, %v3362, 0
      %v3386 = vsel %vm280, %v3363, 0
      %v3389 = vsel %vm280, %v3364, 0
      %v3392 = vsel %vm280, %v3365, 0
      %v3395 = vsel %vm280, %v3366, 0
      %v3398 = vsel %vm280, %v3367, 0
      %v3401 = vsel %vm280, %v3368, 0
      %v3404 = vsel %vm280, %v3369, 0
      %v3407 = vsel %vm280, %v3370, 0
      %v3410 = vsel %vm280, %v3371, 0
      %v3413 = vsel %vm280, %v3372, 0
      %v3416 = vsel %vm280, %v3373, 0
      %v3419 = vsel %vm280, %v3374, 0
      %v3422 = vsel %vm280, %v3375, 0
      %v3425 = vsel %vm280, %v3376, 0
      %v3428 = vsel %vm581, %v3378, 0
      %3430 = vmatpush.bf16.msra.mxu0 0
      %3431 = vmatpush.bf16.msra.mxu0 0
      %3432 = vmatpush.bf16.msra.mxu0 0
      %3433 = vmatpush.bf16.msra.mxu0 0
      %3434 = vmatpush.bf16.msra.mxu0 0
      %3435 = vmatpush.bf16.msra.mxu0 0
      %3436 = vmatpush.bf16.msra.mxu0 0
      %3437 = vmatpush.bf16.msra.mxu0 %v3428
      %3438 = vmatmul.bf16.gmra.mxu0 %v3380
      %v3439 = vpop.f32.mrf.mxu0
      %v3440 = vadd.f32 0.0, %v3439
      %v3441 = vpop.f32.mrf.mxu0
      %v3442 = vadd.f32 0.0, %v3441
      %3443 = vmatmul.bf16.gmra.mxu0 %v3383
      %v3444 = vpop.f32.mrf.mxu0
      %v3445 = vadd.f32 0.0, %v3444
      %v3446 = vpop.f32.mrf.mxu0
      %v3447 = vadd.f32 0.0, %v3446
      %3448 = vmatmul.bf16.gmra.mxu0 %v3386
      %v3449 = vpop.f32.mrf.mxu0
      %v3450 = vadd.f32 0.0, %v3449
      %v3451 = vpop.f32.mrf.mxu0
      %v3452 = vadd.f32 0.0, %v3451
      %3453 = vmatmul.bf16.gmra.mxu0 %v3389
      %v3454 = vpop.f32.mrf.mxu0
      %v3455 = vadd.f32 0.0, %v3454
      %v3456 = vpop.f32.mrf.mxu0
      %v3457 = vadd.f32 0.0, %v3456
      %3458 = vmatmul.bf16.gmra.mxu0 %v3392
      %v3459 = vpop.f32.mrf.mxu0
      %v3460 = vadd.f32 0.0, %v3459
      %v3461 = vpop.f32.mrf.mxu0
      %v3462 = vadd.f32 0.0, %v3461
      %3463 = vmatmul.bf16.gmra.mxu0 %v3395
      %v3464 = vpop.f32.mrf.mxu0
      %v3465 = vadd.f32 0.0, %v3464
      %v3466 = vpop.f32.mrf.mxu0
      %v3467 = vadd.f32 0.0, %v3466
      %3468 = vmatmul.bf16.gmra.mxu0 %v3398
      %v3469 = vpop.f32.mrf.mxu0
      %v3470 = vadd.f32 0.0, %v3469
      %v3471 = vpop.f32.mrf.mxu0
      %v3472 = vadd.f32 0.0, %v3471
      %3473 = vmatmul.bf16.gmra.mxu0 %v3401
      %v3474 = vpop.f32.mrf.mxu0
      %v3475 = vadd.f32 0.0, %v3474
      %v3476 = vpop.f32.mrf.mxu0
      %v3477 = vadd.f32 0.0, %v3476
      %3478 = vmatmul.bf16.gmra.mxu0 %v3404
      %v3479 = vpop.f32.mrf.mxu0
      %v3480 = vadd.f32 0.0, %v3479
      %v3481 = vpop.f32.mrf.mxu0
      %v3482 = vadd.f32 0.0, %v3481
      %3483 = vmatmul.bf16.gmra.mxu0 %v3407
      %v3484 = vpop.f32.mrf.mxu0
      %v3485 = vadd.f32 0.0, %v3484
      %v3486 = vpop.f32.mrf.mxu0
      %v3487 = vadd.f32 0.0, %v3486
      %3488 = vmatmul.bf16.gmra.mxu0 %v3410
      %v3489 = vpop.f32.mrf.mxu0
      %v3490 = vadd.f32 0.0, %v3489
      %v3491 = vpop.f32.mrf.mxu0
      %v3492 = vadd.f32 0.0, %v3491
      %3493 = vmatmul.bf16.gmra.mxu0 %v3413
      %v3494 = vpop.f32.mrf.mxu0
      %v3495 = vadd.f32 0.0, %v3494
      %v3496 = vpop.f32.mrf.mxu0
      %v3497 = vadd.f32 0.0, %v3496
      %3498 = vmatmul.bf16.gmra.mxu0 %v3416
      %v3499 = vpop.f32.mrf.mxu0
      %v3500 = vadd.f32 0.0, %v3499
      %v3501 = vpop.f32.mrf.mxu0
      %v3502 = vadd.f32 0.0, %v3501
      %3503 = vmatmul.bf16.gmra.mxu0 %v3419
      %v3504 = vpop.f32.mrf.mxu0
      %v3505 = vadd.f32 0.0, %v3504
      %v3506 = vpop.f32.mrf.mxu0
      %v3507 = vadd.f32 0.0, %v3506
      %3508 = vmatmul.bf16.gmra.mxu0 %v3422
      %v3509 = vpop.f32.mrf.mxu0
      %v3510 = vadd.f32 0.0, %v3509
      %v3511 = vpop.f32.mrf.mxu0
      %v3512 = vadd.f32 0.0, %v3511
      %3513 = vmatmul.bf16.gmra.mxu0 %v3425
      %v3514 = vpop.f32.mrf.mxu0
      %v3515 = vadd.f32 0.0, %v3514
      %v3516 = vpop.f32.mrf.mxu0
      %v3517 = vadd.f32 0.0, %v3516
      %3518 = vdwg.mxu0
      %v3519 = vadd.f32 %v3297, %v3440
      %v3520 = vadd.f32 %v3298, %v3442
      %v3521 = vadd.f32 %v3299, %v3445
      %v3522 = vadd.f32 %v3300, %v3447
      %v3523 = vadd.f32 %v3301, %v3450
      %v3524 = vadd.f32 %v3302, %v3452
      %v3525 = vadd.f32 %v3303, %v3455
      %v3526 = vadd.f32 %v3304, %v3457
      %v3527 = vadd.f32 %v3305, %v3460
      %v3528 = vadd.f32 %v3306, %v3462
      %v3529 = vadd.f32 %v3307, %v3465
      %v3530 = vadd.f32 %v3308, %v3467
      %v3531 = vadd.f32 %v3309, %v3470
      %v3532 = vadd.f32 %v3310, %v3472
      %v3533 = vadd.f32 %v3311, %v3475
      %v3534 = vadd.f32 %v3312, %v3477
      %v3535 = vadd.f32 %v3313, %v3480
      %v3536 = vadd.f32 %v3314, %v3482
      %v3537 = vadd.f32 %v3315, %v3485
      %v3538 = vadd.f32 %v3316, %v3487
      %v3539 = vadd.f32 %v3317, %v3490
      %v3540 = vadd.f32 %v3318, %v3492
      %v3541 = vadd.f32 %v3319, %v3495
      %v3542 = vadd.f32 %v3320, %v3497
      %v3543 = vadd.f32 %v3321, %v3500
      %v3544 = vadd.f32 %v3322, %v3502
      %v3545 = vadd.f32 %v3323, %v3505
      %v3546 = vadd.f32 %v3324, %v3507
      %v3547 = vadd.f32 %v3325, %v3510
      %v3548 = vadd.f32 %v3326, %v3512
      %v3549 = vadd.f32 %v3327, %v3515
      %v3550 = vadd.f32 %v3328, %v3517
      %v3551 = vld [vmem:[%s2473 + $0x2] sm:$0xff]
      %v3552 = vld [vmem:[%s2473 + $0xa] sm:$0xff]
      %v3553 = vld [vmem:[%s2473 + $0x1a] sm:$0xff]
      %v3554 = vld [vmem:[%s2473 + $0x22] sm:$0xff]
      %v3555 = vld [vmem:[%s2473 + $0x32] sm:$0xff]
      %v3556 = vld [vmem:[%s2473 + $0x3a] sm:$0xff]
      %v3557 = vld [vmem:[%s2473 + $0x4a] sm:$0xff]
      %v3558 = vld [vmem:[%s2473 + $0x52] sm:$0xff]
      %v3559 = vld [vmem:[%s2473 + $0x62] sm:$0xff]
      %v3560 = vld [vmem:[%s2473 + $0x6a] sm:$0xff]
      %v3561 = vld [vmem:[%s2473 + $0x7a] sm:$0xff]
      %v3562 = vld [vmem:[%s2473 + $0x82] sm:$0xff]
      %v3563 = vld [vmem:[%s2473 + $0x92] sm:$0xff]
      %v3564 = vld [vmem:[%s2473 + $0x9a] sm:$0xff]
      %v3565 = vld [vmem:[%s2473 + $0xaa] sm:$0xff]
      %v3566 = vld [vmem:[%s2473 + $0xb2] sm:$0xff]
      %v3567 = vld [vmem:[%s2473 + $0xc2] sm:$0xff]
      %v3568 = vld [vmem:[%s2473 + $0xca] sm:$0xff]
      %v3569 = vld [vmem:[%s2473 + $0xda] sm:$0xff]
      %v3570 = vld [vmem:[%s2473 + $0xe2] sm:$0xff]
      %v3571 = vld [vmem:[%s2473 + $0xf2] sm:$0xff]
      %v3572 = vld [vmem:[%s2473 + $0xfa] sm:$0xff]
      %v3573 = vld [vmem:[%s2473 + $0x10a] sm:$0xff]
      %v3574 = vld [vmem:[%s2473 + $0x112] sm:$0xff]
      %v3575 = vld [vmem:[%s2473 + $0x122] sm:$0xff]
      %v3576 = vld [vmem:[%s2473 + $0x12a] sm:$0xff]
      %v3577 = vld [vmem:[%s2473 + $0x13a] sm:$0xff]
      %v3578 = vld [vmem:[%s2473 + $0x142] sm:$0xff]
      %v3579 = vld [vmem:[%s2473 + $0x152] sm:$0xff]
      %v3580 = vld [vmem:[%s2473 + $0x15a] sm:$0xff]
      %v3581 = vld [vmem:[%s2473 + $0x16a] sm:$0xff]
      %v3582 = vld [vmem:[%s2473 + $0x172] sm:$0xff]
      %v3583 = vpack.c.bf16 %v3552, %v3551
      %v3584 = vpack.c.bf16 %v3554, %v3553
      %v3585 = vpack.c.bf16 %v3556, %v3555
      %v3586 = vpack.c.bf16 %v3558, %v3557
      %v3587 = vpack.c.bf16 %v3560, %v3559
      %v3588 = vpack.c.bf16 %v3562, %v3561
      %v3589 = vpack.c.bf16 %v3564, %v3563
      %v3590 = vpack.c.bf16 %v3566, %v3565
      %v3591 = vpack.c.bf16 %v3568, %v3567
      %v3592 = vpack.c.bf16 %v3570, %v3569
      %v3593 = vpack.c.bf16 %v3572, %v3571
      %v3594 = vpack.c.bf16 %v3574, %v3573
      %v3595 = vpack.c.bf16 %v3576, %v3575
      %v3596 = vpack.c.bf16 %v3578, %v3577
      %v3597 = vpack.c.bf16 %v3580, %v3579
      %v3598 = vpack.c.bf16 %v3582, %v3581
      %s3599 = scalar_lea.vmem %s4, 20
      %v3600 = vld [vmem:[%s3599] sm:$0xf]
      %v3602 = vsel %vm280, %v3583, 0
      %v3605 = vsel %vm280, %v3584, 0
      %v3608 = vsel %vm280, %v3585, 0
      %v3611 = vsel %vm280, %v3586, 0
      %v3614 = vsel %vm280, %v3587, 0
      %v3617 = vsel %vm280, %v3588, 0
      %v3620 = vsel %vm280, %v3589, 0
      %v3623 = vsel %vm280, %v3590, 0
      %v3626 = vsel %vm280, %v3591, 0
      %v3629 = vsel %vm280, %v3592, 0
      %v3632 = vsel %vm280, %v3593, 0
      %v3635 = vsel %vm280, %v3594, 0
      %v3638 = vsel %vm280, %v3595, 0
      %v3641 = vsel %vm280, %v3596, 0
      %v3644 = vsel %vm280, %v3597, 0
      %v3647 = vsel %vm280, %v3598, 0
      %v3650 = vsel %vm581, %v3600, 0
      %3652 = vmatpush.bf16.msra.mxu0 0
      %3653 = vmatpush.bf16.msra.mxu0 0
      %3654 = vmatpush.bf16.msra.mxu0 0
      %3655 = vmatpush.bf16.msra.mxu0 0
      %3656 = vmatpush.bf16.msra.mxu0 0
      %3657 = vmatpush.bf16.msra.mxu0 0
      %3658 = vmatpush.bf16.msra.mxu0 0
      %3659 = vmatpush.bf16.msra.mxu0 %v3650
      %3660 = vmatmul.bf16.gmra.mxu0 %v3602
      %v3661 = vpop.f32.mrf.mxu0
      %v3662 = vadd.f32 0.0, %v3661
      %v3663 = vpop.f32.mrf.mxu0
      %v3664 = vadd.f32 0.0, %v3663
      %3665 = vmatmul.bf16.gmra.mxu0 %v3605
      %v3666 = vpop.f32.mrf.mxu0
      %v3667 = vadd.f32 0.0, %v3666
      %v3668 = vpop.f32.mrf.mxu0
      %v3669 = vadd.f32 0.0, %v3668
      %3670 = vmatmul.bf16.gmra.mxu0 %v3608
      %v3671 = vpop.f32.mrf.mxu0
      %v3672 = vadd.f32 0.0, %v3671
      %v3673 = vpop.f32.mrf.mxu0
      %v3674 = vadd.f32 0.0, %v3673
      %3675 = vmatmul.bf16.gmra.mxu0 %v3611
      %v3676 = vpop.f32.mrf.mxu0
      %v3677 = vadd.f32 0.0, %v3676
      %v3678 = vpop.f32.mrf.mxu0
      %v3679 = vadd.f32 0.0, %v3678
      %3680 = vmatmul.bf16.gmra.mxu0 %v3614
      %v3681 = vpop.f32.mrf.mxu0
      %v3682 = vadd.f32 0.0, %v3681
      %v3683 = vpop.f32.mrf.mxu0
      %v3684 = vadd.f32 0.0, %v3683
      %3685 = vmatmul.bf16.gmra.mxu0 %v3617
      %v3686 = vpop.f32.mrf.mxu0
      %v3687 = vadd.f32 0.0, %v3686
      %v3688 = vpop.f32.mrf.mxu0
      %v3689 = vadd.f32 0.0, %v3688
      %3690 = vmatmul.bf16.gmra.mxu0 %v3620
      %v3691 = vpop.f32.mrf.mxu0
      %v3692 = vadd.f32 0.0, %v3691
      %v3693 = vpop.f32.mrf.mxu0
      %v3694 = vadd.f32 0.0, %v3693
      %3695 = vmatmul.bf16.gmra.mxu0 %v3623
      %v3696 = vpop.f32.mrf.mxu0
      %v3697 = vadd.f32 0.0, %v3696
      %v3698 = vpop.f32.mrf.mxu0
      %v3699 = vadd.f32 0.0, %v3698
      %3700 = vmatmul.bf16.gmra.mxu0 %v3626
      %v3701 = vpop.f32.mrf.mxu0
      %v3702 = vadd.f32 0.0, %v3701
      %v3703 = vpop.f32.mrf.mxu0
      %v3704 = vadd.f32 0.0, %v3703
      %3705 = vmatmul.bf16.gmra.mxu0 %v3629
      %v3706 = vpop.f32.mrf.mxu0
      %v3707 = vadd.f32 0.0, %v3706
      %v3708 = vpop.f32.mrf.mxu0
      %v3709 = vadd.f32 0.0, %v3708
      %3710 = vmatmul.bf16.gmra.mxu0 %v3632
      %v3711 = vpop.f32.mrf.mxu0
      %v3712 = vadd.f32 0.0, %v3711
      %v3713 = vpop.f32.mrf.mxu0
      %v3714 = vadd.f32 0.0, %v3713
      %3715 = vmatmul.bf16.gmra.mxu0 %v3635
      %v3716 = vpop.f32.mrf.mxu0
      %v3717 = vadd.f32 0.0, %v3716
      %v3718 = vpop.f32.mrf.mxu0
      %v3719 = vadd.f32 0.0, %v3718
      %3720 = vmatmul.bf16.gmra.mxu0 %v3638
      %v3721 = vpop.f32.mrf.mxu0
      %v3722 = vadd.f32 0.0, %v3721
      %v3723 = vpop.f32.mrf.mxu0
      %v3724 = vadd.f32 0.0, %v3723
      %3725 = vmatmul.bf16.gmra.mxu0 %v3641
      %v3726 = vpop.f32.mrf.mxu0
      %v3727 = vadd.f32 0.0, %v3726
      %v3728 = vpop.f32.mrf.mxu0
      %v3729 = vadd.f32 0.0, %v3728
      %3730 = vmatmul.bf16.gmra.mxu0 %v3644
      %v3731 = vpop.f32.mrf.mxu0
      %v3732 = vadd.f32 0.0, %v3731
      %v3733 = vpop.f32.mrf.mxu0
      %v3734 = vadd.f32 0.0, %v3733
      %3735 = vmatmul.bf16.gmra.mxu0 %v3647
      %v3736 = vpop.f32.mrf.mxu0
      %v3737 = vadd.f32 0.0, %v3736
      %v3738 = vpop.f32.mrf.mxu0
      %v3739 = vadd.f32 0.0, %v3738
      %3740 = vdwg.mxu0
      %v3741 = vadd.f32 %v3519, %v3662
      %v3742 = vadd.f32 %v3520, %v3664
      %v3743 = vadd.f32 %v3521, %v3667
      %v3744 = vadd.f32 %v3522, %v3669
      %v3745 = vadd.f32 %v3523, %v3672
      %v3746 = vadd.f32 %v3524, %v3674
      %v3747 = vadd.f32 %v3525, %v3677
      %v3748 = vadd.f32 %v3526, %v3679
      %v3749 = vadd.f32 %v3527, %v3682
      %v3750 = vadd.f32 %v3528, %v3684
      %v3751 = vadd.f32 %v3529, %v3687
      %v3752 = vadd.f32 %v3530, %v3689
      %v3753 = vadd.f32 %v3531, %v3692
      %v3754 = vadd.f32 %v3532, %v3694
      %v3755 = vadd.f32 %v3533, %v3697
      %v3756 = vadd.f32 %v3534, %v3699
      %v3757 = vadd.f32 %v3535, %v3702
      %v3758 = vadd.f32 %v3536, %v3704
      %v3759 = vadd.f32 %v3537, %v3707
      %v3760 = vadd.f32 %v3538, %v3709
      %v3761 = vadd.f32 %v3539, %v3712
      %v3762 = vadd.f32 %v3540, %v3714
      %v3763 = vadd.f32 %v3541, %v3717
      %v3764 = vadd.f32 %v3542, %v3719
      %v3765 = vadd.f32 %v3543, %v3722
      %v3766 = vadd.f32 %v3544, %v3724
      %v3767 = vadd.f32 %v3545, %v3727
      %v3768 = vadd.f32 %v3546, %v3729
      %v3769 = vadd.f32 %v3547, %v3732
      %v3770 = vadd.f32 %v3548, %v3734
      %v3771 = vadd.f32 %v3549, %v3737
      %v3772 = vadd.f32 %v3550, %v3739
      %s3773 = scalar_lea.vmem [#allocation3], 48
      %v3774 = vld [vmem:[%s3773] sm:$0xff]
      %v3775 = vld [vmem:[%s3773 + $0x8] sm:$0xff]
      %v3776 = vld [vmem:[%s3773 + $0x18] sm:$0xff]
      %v3777 = vld [vmem:[%s3773 + $0x20] sm:$0xff]
      %v3778 = vld [vmem:[%s3773 + $0x30] sm:$0xff]
      %v3779 = vld [vmem:[%s3773 + $0x38] sm:$0xff]
      %v3780 = vld [vmem:[%s3773 + $0x48] sm:$0xff]
      %v3781 = vld [vmem:[%s3773 + $0x50] sm:$0xff]
      %v3782 = vld [vmem:[%s3773 + $0x60] sm:$0xff]
      %v3783 = vld [vmem:[%s3773 + $0x68] sm:$0xff]
      %v3784 = vld [vmem:[%s3773 + $0x78] sm:$0xff]
      %v3785 = vld [vmem:[%s3773 + $0x80] sm:$0xff]
      %v3786 = vld [vmem:[%s3773 + $0x90] sm:$0xff]
      %v3787 = vld [vmem:[%s3773 + $0x98] sm:$0xff]
      %v3788 = vld [vmem:[%s3773 + $0xa8] sm:$0xff]
      %v3789 = vld [vmem:[%s3773 + $0xb0] sm:$0xff]
      %v3790 = vld [vmem:[%s3773 + $0xc0] sm:$0xff]
      %v3791 = vld [vmem:[%s3773 + $0xc8] sm:$0xff]
      %v3792 = vld [vmem:[%s3773 + $0xd8] sm:$0xff]
      %v3793 = vld [vmem:[%s3773 + $0xe0] sm:$0xff]
      %v3794 = vld [vmem:[%s3773 + $0xf0] sm:$0xff]
      %v3795 = vld [vmem:[%s3773 + $0xf8] sm:$0xff]
      %v3796 = vld [vmem:[%s3773 + $0x108] sm:$0xff]
      %v3797 = vld [vmem:[%s3773 + $0x110] sm:$0xff]
      %v3798 = vld [vmem:[%s3773 + $0x120] sm:$0xff]
      %v3799 = vld [vmem:[%s3773 + $0x128] sm:$0xff]
      %v3800 = vld [vmem:[%s3773 + $0x138] sm:$0xff]
      %v3801 = vld [vmem:[%s3773 + $0x140] sm:$0xff]
      %v3802 = vld [vmem:[%s3773 + $0x150] sm:$0xff]
      %v3803 = vld [vmem:[%s3773 + $0x158] sm:$0xff]
      %v3804 = vld [vmem:[%s3773 + $0x168] sm:$0xff]
      %v3805 = vld [vmem:[%s3773 + $0x170] sm:$0xff]
      %v3806 = vpack.c.bf16 %v3775, %v3774
      %v3807 = vpack.c.bf16 %v3777, %v3776
      %v3808 = vpack.c.bf16 %v3779, %v3778
      %v3809 = vpack.c.bf16 %v3781, %v3780
      %v3810 = vpack.c.bf16 %v3783, %v3782
      %v3811 = vpack.c.bf16 %v3785, %v3784
      %v3812 = vpack.c.bf16 %v3787, %v3786
      %v3813 = vpack.c.bf16 %v3789, %v3788
      %v3814 = vpack.c.bf16 %v3791, %v3790
      %v3815 = vpack.c.bf16 %v3793, %v3792
      %v3816 = vpack.c.bf16 %v3795, %v3794
      %v3817 = vpack.c.bf16 %v3797, %v3796
      %v3818 = vpack.c.bf16 %v3799, %v3798
      %v3819 = vpack.c.bf16 %v3801, %v3800
      %v3820 = vpack.c.bf16 %v3803, %v3802
      %v3821 = vpack.c.bf16 %v3805, %v3804
      %s3822 = scalar_lea.vmem %s4, 24
      %v3823 = vld [vmem:[%s3822] sm:$0xf]
      %v3825 = vsel %vm280, %v3806, 0
      %v3828 = vsel %vm280, %v3807, 0
      %v3831 = vsel %vm280, %v3808, 0
      %v3834 = vsel %vm280, %v3809, 0
      %v3837 = vsel %vm280, %v3810, 0
      %v3840 = vsel %vm280, %v3811, 0
      %v3843 = vsel %vm280, %v3812, 0
      %v3846 = vsel %vm280, %v3813, 0
      %v3849 = vsel %vm280, %v3814, 0
      %v3852 = vsel %vm280, %v3815, 0
      %v3855 = vsel %vm280, %v3816, 0
      %v3858 = vsel %vm280, %v3817, 0
      %v3861 = vsel %vm280, %v3818, 0
      %v3864 = vsel %vm280, %v3819, 0
      %v3867 = vsel %vm280, %v3820, 0
      %v3870 = vsel %vm280, %v3821, 0
      %v3873 = vsel %vm581, %v3823, 0
      %3875 = vmatpush.bf16.msra.mxu0 0
      %3876 = vmatpush.bf16.msra.mxu0 0
      %3877 = vmatpush.bf16.msra.mxu0 0
      %3878 = vmatpush.bf16.msra.mxu0 0
      %3879 = vmatpush.bf16.msra.mxu0 0
      %3880 = vmatpush.bf16.msra.mxu0 0
      %3881 = vmatpush.bf16.msra.mxu0 0
      %3882 = vmatpush.bf16.msra.mxu0 %v3873
      %3883 = vmatmul.bf16.gmra.mxu0 %v3825
      %v3884 = vpop.f32.mrf.mxu0
      %v3885 = vadd.f32 0.0, %v3884
      %v3886 = vpop.f32.mrf.mxu0
      %v3887 = vadd.f32 0.0, %v3886
      %3888 = vmatmul.bf16.gmra.mxu0 %v3828
      %v3889 = vpop.f32.mrf.mxu0
      %v3890 = vadd.f32 0.0, %v3889
      %v3891 = vpop.f32.mrf.mxu0
      %v3892 = vadd.f32 0.0, %v3891
      %3893 = vmatmul.bf16.gmra.mxu0 %v3831
      %v3894 = vpop.f32.mrf.mxu0
      %v3895 = vadd.f32 0.0, %v3894
      %v3896 = vpop.f32.mrf.mxu0
      %v3897 = vadd.f32 0.0, %v3896
      %3898 = vmatmul.bf16.gmra.mxu0 %v3834
      %v3899 = vpop.f32.mrf.mxu0
      %v3900 = vadd.f32 0.0, %v3899
      %v3901 = vpop.f32.mrf.mxu0
      %v3902 = vadd.f32 0.0, %v3901
      %3903 = vmatmul.bf16.gmra.mxu0 %v3837
      %v3904 = vpop.f32.mrf.mxu0
      %v3905 = vadd.f32 0.0, %v3904
      %v3906 = vpop.f32.mrf.mxu0
      %v3907 = vadd.f32 0.0, %v3906
      %3908 = vmatmul.bf16.gmra.mxu0 %v3840
      %v3909 = vpop.f32.mrf.mxu0
      %v3910 = vadd.f32 0.0, %v3909
      %v3911 = vpop.f32.mrf.mxu0
      %v3912 = vadd.f32 0.0, %v3911
      %3913 = vmatmul.bf16.gmra.mxu0 %v3843
      %v3914 = vpop.f32.mrf.mxu0
      %v3915 = vadd.f32 0.0, %v3914
      %v3916 = vpop.f32.mrf.mxu0
      %v3917 = vadd.f32 0.0, %v3916
      %3918 = vmatmul.bf16.gmra.mxu0 %v3846
      %v3919 = vpop.f32.mrf.mxu0
      %v3920 = vadd.f32 0.0, %v3919
      %v3921 = vpop.f32.mrf.mxu0
      %v3922 = vadd.f32 0.0, %v3921
      %3923 = vmatmul.bf16.gmra.mxu0 %v3849
      %v3924 = vpop.f32.mrf.mxu0
      %v3925 = vadd.f32 0.0, %v3924
      %v3926 = vpop.f32.mrf.mxu0
      %v3927 = vadd.f32 0.0, %v3926
      %3928 = vmatmul.bf16.gmra.mxu0 %v3852
      %v3929 = vpop.f32.mrf.mxu0
      %v3930 = vadd.f32 0.0, %v3929
      %v3931 = vpop.f32.mrf.mxu0
      %v3932 = vadd.f32 0.0, %v3931
      %3933 = vmatmul.bf16.gmra.mxu0 %v3855
      %v3934 = vpop.f32.mrf.mxu0
      %v3935 = vadd.f32 0.0, %v3934
      %v3936 = vpop.f32.mrf.mxu0
      %v3937 = vadd.f32 0.0, %v3936
      %3938 = vmatmul.bf16.gmra.mxu0 %v3858
      %v3939 = vpop.f32.mrf.mxu0
      %v3940 = vadd.f32 0.0, %v3939
      %v3941 = vpop.f32.mrf.mxu0
      %v3942 = vadd.f32 0.0, %v3941
      %3943 = vmatmul.bf16.gmra.mxu0 %v3861
      %v3944 = vpop.f32.mrf.mxu0
      %v3945 = vadd.f32 0.0, %v3944
      %v3946 = vpop.f32.mrf.mxu0
      %v3947 = vadd.f32 0.0, %v3946
      %3948 = vmatmul.bf16.gmra.mxu0 %v3864
      %v3949 = vpop.f32.mrf.mxu0
      %v3950 = vadd.f32 0.0, %v3949
      %v3951 = vpop.f32.mrf.mxu0
      %v3952 = vadd.f32 0.0, %v3951
      %3953 = vmatmul.bf16.gmra.mxu0 %v3867
      %v3954 = vpop.f32.mrf.mxu0
      %v3955 = vadd.f32 0.0, %v3954
      %v3956 = vpop.f32.mrf.mxu0
      %v3957 = vadd.f32 0.0, %v3956
      %3958 = vmatmul.bf16.gmra.mxu0 %v3870
      %v3959 = vpop.f32.mrf.mxu0
      %v3960 = vadd.f32 0.0, %v3959
      %v3961 = vpop.f32.mrf.mxu0
      %v3962 = vadd.f32 0.0, %v3961
      %3963 = vdwg.mxu0
      %v3964 = vadd.f32 %v3741, %v3885
      %v3965 = vadd.f32 %v3742, %v3887
      %v3966 = vadd.f32 %v3743, %v3890
      %v3967 = vadd.f32 %v3744, %v3892
      %v3968 = vadd.f32 %v3745, %v3895
      %v3969 = vadd.f32 %v3746, %v3897
      %v3970 = vadd.f32 %v3747, %v3900
      %v3971 = vadd.f32 %v3748, %v3902
      %v3972 = vadd.f32 %v3749, %v3905
      %v3973 = vadd.f32 %v3750, %v3907
      %v3974 = vadd.f32 %v3751, %v3910
      %v3975 = vadd.f32 %v3752, %v3912
      %v3976 = vadd.f32 %v3753, %v3915
      %v3977 = vadd.f32 %v3754, %v3917
      %v3978 = vadd.f32 %v3755, %v3920
      %v3979 = vadd.f32 %v3756, %v3922
      %v3980 = vadd.f32 %v3757, %v3925
      %v3981 = vadd.f32 %v3758, %v3927
      %v3982 = vadd.f32 %v3759, %v3930
      %v3983 = vadd.f32 %v3760, %v3932
      %v3984 = vadd.f32 %v3761, %v3935
      %v3985 = vadd.f32 %v3762, %v3937
      %v3986 = vadd.f32 %v3763, %v3940
      %v3987 = vadd.f32 %v3764, %v3942
      %v3988 = vadd.f32 %v3765, %v3945
      %v3989 = vadd.f32 %v3766, %v3947
      %v3990 = vadd.f32 %v3767, %v3950
      %v3991 = vadd.f32 %v3768, %v3952
      %v3992 = vadd.f32 %v3769, %v3955
      %v3993 = vadd.f32 %v3770, %v3957
      %v3994 = vadd.f32 %v3771, %v3960
      %v3995 = vadd.f32 %v3772, %v3962
      %v3996 = vld [vmem:[%s3773 + $0x1] sm:$0xff]
      %v3997 = vld [vmem:[%s3773 + $0x9] sm:$0xff]
      %v3998 = vld [vmem:[%s3773 + $0x19] sm:$0xff]
      %v3999 = vld [vmem:[%s3773 + $0x21] sm:$0xff]
      %v4000 = vld [vmem:[%s3773 + $0x31] sm:$0xff]
      %v4001 = vld [vmem:[%s3773 + $0x39] sm:$0xff]
      %v4002 = vld [vmem:[%s3773 + $0x49] sm:$0xff]
      %v4003 = vld [vmem:[%s3773 + $0x51] sm:$0xff]
      %v4004 = vld [vmem:[%s3773 + $0x61] sm:$0xff]
      %v4005 = vld [vmem:[%s3773 + $0x69] sm:$0xff]
      %v4006 = vld [vmem:[%s3773 + $0x79] sm:$0xff]
      %v4007 = vld [vmem:[%s3773 + $0x81] sm:$0xff]
      %v4008 = vld [vmem:[%s3773 + $0x91] sm:$0xff]
      %v4009 = vld [vmem:[%s3773 + $0x99] sm:$0xff]
      %v4010 = vld [vmem:[%s3773 + $0xa9] sm:$0xff]
      %v4011 = vld [vmem:[%s3773 + $0xb1] sm:$0xff]
      %v4012 = vld [vmem:[%s3773 + $0xc1] sm:$0xff]
      %v4013 = vld [vmem:[%s3773 + $0xc9] sm:$0xff]
      %v4014 = vld [vmem:[%s3773 + $0xd9] sm:$0xff]
      %v4015 = vld [vmem:[%s3773 + $0xe1] sm:$0xff]
      %v4016 = vld [vmem:[%s3773 + $0xf1] sm:$0xff]
      %v4017 = vld [vmem:[%s3773 + $0xf9] sm:$0xff]
      %v4018 = vld [vmem:[%s3773 + $0x109] sm:$0xff]
      %v4019 = vld [vmem:[%s3773 + $0x111] sm:$0xff]
      %v4020 = vld [vmem:[%s3773 + $0x121] sm:$0xff]
      %v4021 = vld [vmem:[%s3773 + $0x129] sm:$0xff]
      %v4022 = vld [vmem:[%s3773 + $0x139] sm:$0xff]
      %v4023 = vld [vmem:[%s3773 + $0x141] sm:$0xff]
      %v4024 = vld [vmem:[%s3773 + $0x151] sm:$0xff]
      %v4025 = vld [vmem:[%s3773 + $0x159] sm:$0xff]
      %v4026 = vld [vmem:[%s3773 + $0x169] sm:$0xff]
      %v4027 = vld [vmem:[%s3773 + $0x171] sm:$0xff]
      %v4028 = vpack.c.bf16 %v3997, %v3996
      %v4029 = vpack.c.bf16 %v3999, %v3998
      %v4030 = vpack.c.bf16 %v4001, %v4000
      %v4031 = vpack.c.bf16 %v4003, %v4002
      %v4032 = vpack.c.bf16 %v4005, %v4004
      %v4033 = vpack.c.bf16 %v4007, %v4006
      %v4034 = vpack.c.bf16 %v4009, %v4008
      %v4035 = vpack.c.bf16 %v4011, %v4010
      %v4036 = vpack.c.bf16 %v4013, %v4012
      %v4037 = vpack.c.bf16 %v4015, %v4014
      %v4038 = vpack.c.bf16 %v4017, %v4016
      %v4039 = vpack.c.bf16 %v4019, %v4018
      %v4040 = vpack.c.bf16 %v4021, %v4020
      %v4041 = vpack.c.bf16 %v4023, %v4022
      %v4042 = vpack.c.bf16 %v4025, %v4024
      %v4043 = vpack.c.bf16 %v4027, %v4026
      %s4044 = scalar_lea.vmem %s4, 28
      %v4045 = vld [vmem:[%s4044] sm:$0xf]
      %v4047 = vsel %vm280, %v4028, 0
      %v4050 = vsel %vm280, %v4029, 0
      %v4053 = vsel %vm280, %v4030, 0
      %v4056 = vsel %vm280, %v4031, 0
      %v4059 = vsel %vm280, %v4032, 0
      %v4062 = vsel %vm280, %v4033, 0
      %v4065 = vsel %vm280, %v4034, 0
      %v4068 = vsel %vm280, %v4035, 0
      %v4071 = vsel %vm280, %v4036, 0
      %v4074 = vsel %vm280, %v4037, 0
      %v4077 = vsel %vm280, %v4038, 0
      %v4080 = vsel %vm280, %v4039, 0
      %v4083 = vsel %vm280, %v4040, 0
      %v4086 = vsel %vm280, %v4041, 0
      %v4089 = vsel %vm280, %v4042, 0
      %v4092 = vsel %vm280, %v4043, 0
      %v4095 = vsel %vm581, %v4045, 0
      %4097 = vmatpush.bf16.msra.mxu0 0
      %4098 = vmatpush.bf16.msra.mxu0 0
      %4099 = vmatpush.bf16.msra.mxu0 0
      %4100 = vmatpush.bf16.msra.mxu0 0
      %4101 = vmatpush.bf16.msra.mxu0 0
      %4102 = vmatpush.bf16.msra.mxu0 0
      %4103 = vmatpush.bf16.msra.mxu0 0
      %4104 = vmatpush.bf16.msra.mxu0 %v4095
      %4105 = vmatmul.bf16.gmra.mxu0 %v4047
      %v4106 = vpop.f32.mrf.mxu0
      %v4107 = vadd.f32 0.0, %v4106
      %v4108 = vpop.f32.mrf.mxu0
      %v4109 = vadd.f32 0.0, %v4108
      %4110 = vmatmul.bf16.gmra.mxu0 %v4050
      %v4111 = vpop.f32.mrf.mxu0
      %v4112 = vadd.f32 0.0, %v4111
      %v4113 = vpop.f32.mrf.mxu0
      %v4114 = vadd.f32 0.0, %v4113
      %4115 = vmatmul.bf16.gmra.mxu0 %v4053
      %v4116 = vpop.f32.mrf.mxu0
      %v4117 = vadd.f32 0.0, %v4116
      %v4118 = vpop.f32.mrf.mxu0
      %v4119 = vadd.f32 0.0, %v4118
      %4120 = vmatmul.bf16.gmra.mxu0 %v4056
      %v4121 = vpop.f32.mrf.mxu0
      %v4122 = vadd.f32 0.0, %v4121
      %v4123 = vpop.f32.mrf.mxu0
      %v4124 = vadd.f32 0.0, %v4123
      %4125 = vmatmul.bf16.gmra.mxu0 %v4059
      %v4126 = vpop.f32.mrf.mxu0
      %v4127 = vadd.f32 0.0, %v4126
      %v4128 = vpop.f32.mrf.mxu0
      %v4129 = vadd.f32 0.0, %v4128
      %4130 = vmatmul.bf16.gmra.mxu0 %v4062
      %v4131 = vpop.f32.mrf.mxu0
      %v4132 = vadd.f32 0.0, %v4131
      %v4133 = vpop.f32.mrf.mxu0
      %v4134 = vadd.f32 0.0, %v4133
      %4135 = vmatmul.bf16.gmra.mxu0 %v4065
      %v4136 = vpop.f32.mrf.mxu0
      %v4137 = vadd.f32 0.0, %v4136
      %v4138 = vpop.f32.mrf.mxu0
      %v4139 = vadd.f32 0.0, %v4138
      %4140 = vmatmul.bf16.gmra.mxu0 %v4068
      %v4141 = vpop.f32.mrf.mxu0
      %v4142 = vadd.f32 0.0, %v4141
      %v4143 = vpop.f32.mrf.mxu0
      %v4144 = vadd.f32 0.0, %v4143
      %4145 = vmatmul.bf16.gmra.mxu0 %v4071
      %v4146 = vpop.f32.mrf.mxu0
      %v4147 = vadd.f32 0.0, %v4146
      %v4148 = vpop.f32.mrf.mxu0
      %v4149 = vadd.f32 0.0, %v4148
      %4150 = vmatmul.bf16.gmra.mxu0 %v4074
      %v4151 = vpop.f32.mrf.mxu0
      %v4152 = vadd.f32 0.0, %v4151
      %v4153 = vpop.f32.mrf.mxu0
      %v4154 = vadd.f32 0.0, %v4153
      %4155 = vmatmul.bf16.gmra.mxu0 %v4077
      %v4156 = vpop.f32.mrf.mxu0
      %v4157 = vadd.f32 0.0, %v4156
      %v4158 = vpop.f32.mrf.mxu0
      %v4159 = vadd.f32 0.0, %v4158
      %4160 = vmatmul.bf16.gmra.mxu0 %v4080
      %v4161 = vpop.f32.mrf.mxu0
      %v4162 = vadd.f32 0.0, %v4161
      %v4163 = vpop.f32.mrf.mxu0
      %v4164 = vadd.f32 0.0, %v4163
      %4165 = vmatmul.bf16.gmra.mxu0 %v4083
      %v4166 = vpop.f32.mrf.mxu0
      %v4167 = vadd.f32 0.0, %v4166
      %v4168 = vpop.f32.mrf.mxu0
      %v4169 = vadd.f32 0.0, %v4168
      %4170 = vmatmul.bf16.gmra.mxu0 %v4086
      %v4171 = vpop.f32.mrf.mxu0
      %v4172 = vadd.f32 0.0, %v4171
      %v4173 = vpop.f32.mrf.mxu0
      %v4174 = vadd.f32 0.0, %v4173
      %4175 = vmatmul.bf16.gmra.mxu0 %v4089
      %v4176 = vpop.f32.mrf.mxu0
      %v4177 = vadd.f32 0.0, %v4176
      %v4178 = vpop.f32.mrf.mxu0
      %v4179 = vadd.f32 0.0, %v4178
      %4180 = vmatmul.bf16.gmra.mxu0 %v4092
      %v4181 = vpop.f32.mrf.mxu0
      %v4182 = vadd.f32 0.0, %v4181
      %v4183 = vpop.f32.mrf.mxu0
      %v4184 = vadd.f32 0.0, %v4183
      %4185 = vdwg.mxu0
      %v4186 = vadd.f32 %v3964, %v4107
      %v4187 = vadd.f32 %v3965, %v4109
      %v4188 = vadd.f32 %v3966, %v4112
      %v4189 = vadd.f32 %v3967, %v4114
      %v4190 = vadd.f32 %v3968, %v4117
      %v4191 = vadd.f32 %v3969, %v4119
      %v4192 = vadd.f32 %v3970, %v4122
      %v4193 = vadd.f32 %v3971, %v4124
      %v4194 = vadd.f32 %v3972, %v4127
      %v4195 = vadd.f32 %v3973, %v4129
      %v4196 = vadd.f32 %v3974, %v4132
      %v4197 = vadd.f32 %v3975, %v4134
      %v4198 = vadd.f32 %v3976, %v4137
      %v4199 = vadd.f32 %v3977, %v4139
      %v4200 = vadd.f32 %v3978, %v4142
      %v4201 = vadd.f32 %v3979, %v4144
      %v4202 = vadd.f32 %v3980, %v4147
      %v4203 = vadd.f32 %v3981, %v4149
      %v4204 = vadd.f32 %v3982, %v4152
      %v4205 = vadd.f32 %v3983, %v4154
      %v4206 = vadd.f32 %v3984, %v4157
      %v4207 = vadd.f32 %v3985, %v4159
      %v4208 = vadd.f32 %v3986, %v4162
      %v4209 = vadd.f32 %v3987, %v4164
      %v4210 = vadd.f32 %v3988, %v4167
      %v4211 = vadd.f32 %v3989, %v4169
      %v4212 = vadd.f32 %v3990, %v4172
      %v4213 = vadd.f32 %v3991, %v4174
      %v4214 = vadd.f32 %v3992, %v4177
      %v4215 = vadd.f32 %v3993, %v4179
      %v4216 = vadd.f32 %v3994, %v4182
      %v4217 = vadd.f32 %v3995, %v4184
      %v4218 = vld [vmem:[%s3773 + $0x2] sm:$0xff]
      %v4219 = vld [vmem:[%s3773 + $0xa] sm:$0xff]
      %v4220 = vld [vmem:[%s3773 + $0x1a] sm:$0xff]
      %v4221 = vld [vmem:[%s3773 + $0x22] sm:$0xff]
      %v4222 = vld [vmem:[%s3773 + $0x32] sm:$0xff]
      %v4223 = vld [vmem:[%s3773 + $0x3a] sm:$0xff]
      %v4224 = vld [vmem:[%s3773 + $0x4a] sm:$0xff]
      %v4225 = vld [vmem:[%s3773 + $0x52] sm:$0xff]
      %v4226 = vld [vmem:[%s3773 + $0x62] sm:$0xff]
      %v4227 = vld [vmem:[%s3773 + $0x6a] sm:$0xff]
      %v4228 = vld [vmem:[%s3773 + $0x7a] sm:$0xff]
      %v4229 = vld [vmem:[%s3773 + $0x82] sm:$0xff]
      %v4230 = vld [vmem:[%s3773 + $0x92] sm:$0xff]
      %v4231 = vld [vmem:[%s3773 + $0x9a] sm:$0xff]
      %v4232 = vld [vmem:[%s3773 + $0xaa] sm:$0xff]
      %v4233 = vld [vmem:[%s3773 + $0xb2] sm:$0xff]
      %v4234 = vld [vmem:[%s3773 + $0xc2] sm:$0xff]
      %v4235 = vld [vmem:[%s3773 + $0xca] sm:$0xff]
      %v4236 = vld [vmem:[%s3773 + $0xda] sm:$0xff]
      %v4237 = vld [vmem:[%s3773 + $0xe2] sm:$0xff]
      %v4238 = vld [vmem:[%s3773 + $0xf2] sm:$0xff]
      %v4239 = vld [vmem:[%s3773 + $0xfa] sm:$0xff]
      %v4240 = vld [vmem:[%s3773 + $0x10a] sm:$0xff]
      %v4241 = vld [vmem:[%s3773 + $0x112] sm:$0xff]
      %v4242 = vld [vmem:[%s3773 + $0x122] sm:$0xff]
      %v4243 = vld [vmem:[%s3773 + $0x12a] sm:$0xff]
      %v4244 = vld [vmem:[%s3773 + $0x13a] sm:$0xff]
      %v4245 = vld [vmem:[%s3773 + $0x142] sm:$0xff]
      %v4246 = vld [vmem:[%s3773 + $0x152] sm:$0xff]
      %v4247 = vld [vmem:[%s3773 + $0x15a] sm:$0xff]
      %v4248 = vld [vmem:[%s3773 + $0x16a] sm:$0xff]
      %v4249 = vld [vmem:[%s3773 + $0x172] sm:$0xff]
      %v4250 = vpack.c.bf16 %v4219, %v4218
      %v4251 = vpack.c.bf16 %v4221, %v4220
      %v4252 = vpack.c.bf16 %v4223, %v4222
      %v4253 = vpack.c.bf16 %v4225, %v4224
      %v4254 = vpack.c.bf16 %v4227, %v4226
      %v4255 = vpack.c.bf16 %v4229, %v4228
      %v4256 = vpack.c.bf16 %v4231, %v4230
      %v4257 = vpack.c.bf16 %v4233, %v4232
      %v4258 = vpack.c.bf16 %v4235, %v4234
      %v4259 = vpack.c.bf16 %v4237, %v4236
      %v4260 = vpack.c.bf16 %v4239, %v4238
      %v4261 = vpack.c.bf16 %v4241, %v4240
      %v4262 = vpack.c.bf16 %v4243, %v4242
      %v4263 = vpack.c.bf16 %v4245, %v4244
      %v4264 = vpack.c.bf16 %v4247, %v4246
      %v4265 = vpack.c.bf16 %v4249, %v4248
      %s4266 = scalar_lea.vmem %s4, 32
      %v4267 = vld [vmem:[%s4266] sm:$0xf]
      %v4269 = vsel %vm280, %v4250, 0
      %v4272 = vsel %vm280, %v4251, 0
      %v4275 = vsel %vm280, %v4252, 0
      %v4278 = vsel %vm280, %v4253, 0
      %v4281 = vsel %vm280, %v4254, 0
      %v4284 = vsel %vm280, %v4255, 0
      %v4287 = vsel %vm280, %v4256, 0
      %v4290 = vsel %vm280, %v4257, 0
      %v4293 = vsel %vm280, %v4258, 0
      %v4296 = vsel %vm280, %v4259, 0
      %v4299 = vsel %vm280, %v4260, 0
      %v4302 = vsel %vm280, %v4261, 0
      %v4305 = vsel %vm280, %v4262, 0
      %v4308 = vsel %vm280, %v4263, 0
      %v4311 = vsel %vm280, %v4264, 0
      %v4314 = vsel %vm280, %v4265, 0
      %v4317 = vsel %vm581, %v4267, 0
      %4319 = vmatpush.bf16.msra.mxu0 0
      %4320 = vmatpush.bf16.msra.mxu0 0
      %4321 = vmatpush.bf16.msra.mxu0 0
      %4322 = vmatpush.bf16.msra.mxu0 0
      %4323 = vmatpush.bf16.msra.mxu0 0
      %4324 = vmatpush.bf16.msra.mxu0 0
      %4325 = vmatpush.bf16.msra.mxu0 0
      %4326 = vmatpush.bf16.msra.mxu0 %v4317
      %4327 = vmatmul.bf16.gmra.mxu0 %v4269
      %v4328 = vpop.f32.mrf.mxu0
      %v4329 = vadd.f32 0.0, %v4328
      %v4330 = vpop.f32.mrf.mxu0
      %v4331 = vadd.f32 0.0, %v4330
      %4332 = vmatmul.bf16.gmra.mxu0 %v4272
      %v4333 = vpop.f32.mrf.mxu0
      %v4334 = vadd.f32 0.0, %v4333
      %v4335 = vpop.f32.mrf.mxu0
      %v4336 = vadd.f32 0.0, %v4335
      %4337 = vmatmul.bf16.gmra.mxu0 %v4275
      %v4338 = vpop.f32.mrf.mxu0
      %v4339 = vadd.f32 0.0, %v4338
      %v4340 = vpop.f32.mrf.mxu0
      %v4341 = vadd.f32 0.0, %v4340
      %4342 = vmatmul.bf16.gmra.mxu0 %v4278
      %v4343 = vpop.f32.mrf.mxu0
      %v4344 = vadd.f32 0.0, %v4343
      %v4345 = vpop.f32.mrf.mxu0
      %v4346 = vadd.f32 0.0, %v4345
      %4347 = vmatmul.bf16.gmra.mxu0 %v4281
      %v4348 = vpop.f32.mrf.mxu0
      %v4349 = vadd.f32 0.0, %v4348
      %v4350 = vpop.f32.mrf.mxu0
      %v4351 = vadd.f32 0.0, %v4350
      %4352 = vmatmul.bf16.gmra.mxu0 %v4284
      %v4353 = vpop.f32.mrf.mxu0
      %v4354 = vadd.f32 0.0, %v4353
      %v4355 = vpop.f32.mrf.mxu0
      %v4356 = vadd.f32 0.0, %v4355
      %4357 = vmatmul.bf16.gmra.mxu0 %v4287
      %v4358 = vpop.f32.mrf.mxu0
      %v4359 = vadd.f32 0.0, %v4358
      %v4360 = vpop.f32.mrf.mxu0
      %v4361 = vadd.f32 0.0, %v4360
      %4362 = vmatmul.bf16.gmra.mxu0 %v4290
      %v4363 = vpop.f32.mrf.mxu0
      %v4364 = vadd.f32 0.0, %v4363
      %v4365 = vpop.f32.mrf.mxu0
      %v4366 = vadd.f32 0.0, %v4365
      %4367 = vmatmul.bf16.gmra.mxu0 %v4293
      %v4368 = vpop.f32.mrf.mxu0
      %v4369 = vadd.f32 0.0, %v4368
      %v4370 = vpop.f32.mrf.mxu0
      %v4371 = vadd.f32 0.0, %v4370
      %4372 = vmatmul.bf16.gmra.mxu0 %v4296
      %v4373 = vpop.f32.mrf.mxu0
      %v4374 = vadd.f32 0.0, %v4373
      %v4375 = vpop.f32.mrf.mxu0
      %v4376 = vadd.f32 0.0, %v4375
      %4377 = vmatmul.bf16.gmra.mxu0 %v4299
      %v4378 = vpop.f32.mrf.mxu0
      %v4379 = vadd.f32 0.0, %v4378
      %v4380 = vpop.f32.mrf.mxu0
      %v4381 = vadd.f32 0.0, %v4380
      %4382 = vmatmul.bf16.gmra.mxu0 %v4302
      %v4383 = vpop.f32.mrf.mxu0
      %v4384 = vadd.f32 0.0, %v4383
      %v4385 = vpop.f32.mrf.mxu0
      %v4386 = vadd.f32 0.0, %v4385
      %4387 = vmatmul.bf16.gmra.mxu0 %v4305
      %v4388 = vpop.f32.mrf.mxu0
      %v4389 = vadd.f32 0.0, %v4388
      %v4390 = vpop.f32.mrf.mxu0
      %v4391 = vadd.f32 0.0, %v4390
      %4392 = vmatmul.bf16.gmra.mxu0 %v4308
      %v4393 = vpop.f32.mrf.mxu0
      %v4394 = vadd.f32 0.0, %v4393
      %v4395 = vpop.f32.mrf.mxu0
      %v4396 = vadd.f32 0.0, %v4395
      %4397 = vmatmul.bf16.gmra.mxu0 %v4311
      %v4398 = vpop.f32.mrf.mxu0
      %v4399 = vadd.f32 0.0, %v4398
      %v4400 = vpop.f32.mrf.mxu0
      %v4401 = vadd.f32 0.0, %v4400
      %4402 = vmatmul.bf16.gmra.mxu0 %v4314
      %v4403 = vpop.f32.mrf.mxu0
      %v4404 = vadd.f32 0.0, %v4403
      %v4405 = vpop.f32.mrf.mxu0
      %v4406 = vadd.f32 0.0, %v4405
      %4407 = vdwg.mxu0
      %v4408 = vadd.f32 %v4186, %v4329
      %v4409 = vadd.f32 %v4187, %v4331
      %v4410 = vadd.f32 %v4188, %v4334
      %v4411 = vadd.f32 %v4189, %v4336
      %v4412 = vadd.f32 %v4190, %v4339
      %v4413 = vadd.f32 %v4191, %v4341
      %v4414 = vadd.f32 %v4192, %v4344
      %v4415 = vadd.f32 %v4193, %v4346
      %v4416 = vadd.f32 %v4194, %v4349
      %v4417 = vadd.f32 %v4195, %v4351
      %v4418 = vadd.f32 %v4196, %v4354
      %v4419 = vadd.f32 %v4197, %v4356
      %v4420 = vadd.f32 %v4198, %v4359
      %v4421 = vadd.f32 %v4199, %v4361
      %v4422 = vadd.f32 %v4200, %v4364
      %v4423 = vadd.f32 %v4201, %v4366
      %v4424 = vadd.f32 %v4202, %v4369
      %v4425 = vadd.f32 %v4203, %v4371
      %v4426 = vadd.f32 %v4204, %v4374
      %v4427 = vadd.f32 %v4205, %v4376
      %v4428 = vadd.f32 %v4206, %v4379
      %v4429 = vadd.f32 %v4207, %v4381
      %v4430 = vadd.f32 %v4208, %v4384
      %v4431 = vadd.f32 %v4209, %v4386
      %v4432 = vadd.f32 %v4210, %v4389
      %v4433 = vadd.f32 %v4211, %v4391
      %v4434 = vadd.f32 %v4212, %v4394
      %v4435 = vadd.f32 %v4213, %v4396
      %v4436 = vadd.f32 %v4214, %v4399
      %v4437 = vadd.f32 %v4215, %v4401
      %v4438 = vadd.f32 %v4216, %v4404
      %v4439 = vadd.f32 %v4217, %v4406
      %v4440 = vld [vmem:[%s5] sm:$0x1]
      %v4442 = vperm.slane %v4440, 0
      %v4444 = vmul.f32 %v4408, %v4442
      %v4445 = vmul.f32 %v4409, %v4442
      %v4446 = vmul.f32 %v4410, %v4442
      %v4447 = vmul.f32 %v4411, %v4442
      %v4448 = vmul.f32 %v4412, %v4442
      %v4449 = vmul.f32 %v4413, %v4442
      %v4450 = vmul.f32 %v4414, %v4442
      %v4451 = vmul.f32 %v4415, %v4442
      %v4452 = vmul.f32 %v4416, %v4442
      %v4453 = vmul.f32 %v4417, %v4442
      %v4454 = vmul.f32 %v4418, %v4442
      %v4455 = vmul.f32 %v4419, %v4442
      %v4456 = vmul.f32 %v4420, %v4442
      %v4457 = vmul.f32 %v4421, %v4442
      %v4458 = vmul.f32 %v4422, %v4442
      %v4459 = vmul.f32 %v4423, %v4442
      %v4460 = vmul.f32 %v4424, %v4442
      %v4461 = vmul.f32 %v4425, %v4442
      %v4462 = vmul.f32 %v4426, %v4442
      %v4463 = vmul.f32 %v4427, %v4442
      %v4464 = vmul.f32 %v4428, %v4442
      %v4465 = vmul.f32 %v4429, %v4442
      %v4466 = vmul.f32 %v4430, %v4442
      %v4467 = vmul.f32 %v4431, %v4442
      %v4468 = vmul.f32 %v4432, %v4442
      %v4469 = vmul.f32 %v4433, %v4442
      %v4470 = vmul.f32 %v4434, %v4442
      %v4471 = vmul.f32 %v4435, %v4442
      %v4472 = vmul.f32 %v4436, %v4442
      %v4473 = vmul.f32 %v4437, %v4442
      %v4474 = vmul.f32 %v4438, %v4442
      %v4475 = vmul.f32 %v4439, %v4442
      %v4476 = vld [vmem:[%s6] sm:$0x1]
      %v4478 = vperm.slane %v4476, 0
      %v4480 = vadd.f32 %v4444, %v4478
      %v4481 = vadd.f32 %v4445, %v4478
      %v4482 = vadd.f32 %v4446, %v4478
      %v4483 = vadd.f32 %v4447, %v4478
      %v4484 = vadd.f32 %v4448, %v4478
      %v4485 = vadd.f32 %v4449, %v4478
      %v4486 = vadd.f32 %v4450, %v4478
      %v4487 = vadd.f32 %v4451, %v4478
      %v4488 = vadd.f32 %v4452, %v4478
      %v4489 = vadd.f32 %v4453, %v4478
      %v4490 = vadd.f32 %v4454, %v4478
      %v4491 = vadd.f32 %v4455, %v4478
      %v4492 = vadd.f32 %v4456, %v4478
      %v4493 = vadd.f32 %v4457, %v4478
      %v4494 = vadd.f32 %v4458, %v4478
      %v4495 = vadd.f32 %v4459, %v4478
      %v4496 = vadd.f32 %v4460, %v4478
      %v4497 = vadd.f32 %v4461, %v4478
      %v4498 = vadd.f32 %v4462, %v4478
      %v4499 = vadd.f32 %v4463, %v4478
      %v4500 = vadd.f32 %v4464, %v4478
      %v4501 = vadd.f32 %v4465, %v4478
      %v4502 = vadd.f32 %v4466, %v4478
      %v4503 = vadd.f32 %v4467, %v4478
      %v4504 = vadd.f32 %v4468, %v4478
      %v4505 = vadd.f32 %v4469, %v4478
      %v4506 = vadd.f32 %v4470, %v4478
      %v4507 = vadd.f32 %v4471, %v4478
      %v4508 = vadd.f32 %v4472, %v4478
      %v4509 = vadd.f32 %v4473, %v4478
      %v4510 = vadd.f32 %v4474, %v4478
      %v4511 = vadd.f32 %v4475, %v4478
      %v4512 = vld [vmem:[%s273] sm:$0xff]
      %v4513 = vld [vmem:[%s273 + $0x8] sm:$0xff]
      %v4514 = vld [vmem:[%s273 + $0x10] sm:$0xff]
      %v4515 = vld [vmem:[%s273 + $0x18] sm:$0xff]
      %v4516 = vld [vmem:[%s273 + $0x20] sm:$0xff]
      %v4517 = vld [vmem:[%s273 + $0x28] sm:$0xff]
      %v4518 = vld [vmem:[%s273 + $0x30] sm:$0xff]
      %v4519 = vld [vmem:[%s273 + $0x38] sm:$0xff]
      %v4520 = vld [vmem:[%s273 + $0x40] sm:$0xff]
      %v4521 = vld [vmem:[%s273 + $0x48] sm:$0xff]
      %v4522 = vld [vmem:[%s273 + $0x50] sm:$0xff]
      %v4523 = vld [vmem:[%s273 + $0x58] sm:$0xff]
      %v4524 = vld [vmem:[%s273 + $0x60] sm:$0xff]
      %v4525 = vld [vmem:[%s273 + $0x68] sm:$0xff]
      %v4526 = vld [vmem:[%s273 + $0x70] sm:$0xff]
      %v4527 = vld [vmem:[%s273 + $0x78] sm:$0xff]
      %v4528 = vld [vmem:[%s273 + $0x80] sm:$0xff]
      %v4529 = vld [vmem:[%s273 + $0x88] sm:$0xff]
      %v4530 = vld [vmem:[%s273 + $0x90] sm:$0xff]
      %v4531 = vld [vmem:[%s273 + $0x98] sm:$0xff]
      %v4532 = vld [vmem:[%s273 + $0xa0] sm:$0xff]
      %v4533 = vld [vmem:[%s273 + $0xa8] sm:$0xff]
      %v4534 = vld [vmem:[%s273 + $0xb0] sm:$0xff]
      %v4535 = vld [vmem:[%s273 + $0xb8] sm:$0xff]
      %v4536 = vld [vmem:[%s273 + $0xc0] sm:$0xff]
      %v4537 = vld [vmem:[%s273 + $0xc8] sm:$0xff]
      %v4538 = vld [vmem:[%s273 + $0xd0] sm:$0xff]
      %v4539 = vld [vmem:[%s273 + $0xd8] sm:$0xff]
      %v4540 = vld [vmem:[%s273 + $0xe0] sm:$0xff]
      %v4541 = vld [vmem:[%s273 + $0xe8] sm:$0xff]
      %v4542 = vld [vmem:[%s273 + $0xf0] sm:$0xff]
      %v4543 = vld [vmem:[%s273 + $0xf8] sm:$0xff]
      %v4544 = vadd.f32 %v4480, %v4512
      %v4545 = vadd.f32 %v4481, %v4513
      %v4546 = vadd.f32 %v4482, %v4514
      %v4547 = vadd.f32 %v4483, %v4515
      %v4548 = vadd.f32 %v4484, %v4516
      %v4549 = vadd.f32 %v4485, %v4517
      %v4550 = vadd.f32 %v4486, %v4518
      %v4551 = vadd.f32 %v4487, %v4519
      %v4552 = vadd.f32 %v4488, %v4520
      %v4553 = vadd.f32 %v4489, %v4521
      %v4554 = vadd.f32 %v4490, %v4522
      %v4555 = vadd.f32 %v4491, %v4523
      %v4556 = vadd.f32 %v4492, %v4524
      %v4557 = vadd.f32 %v4493, %v4525
      %v4558 = vadd.f32 %v4494, %v4526
      %v4559 = vadd.f32 %v4495, %v4527
      %v4560 = vadd.f32 %v4496, %v4528
      %v4561 = vadd.f32 %v4497, %v4529
      %v4562 = vadd.f32 %v4498, %v4530
      %v4563 = vadd.f32 %v4499, %v4531
      %v4564 = vadd.f32 %v4500, %v4532
      %v4565 = vadd.f32 %v4501, %v4533
      %v4566 = vadd.f32 %v4502, %v4534
      %v4567 = vadd.f32 %v4503, %v4535
      %v4568 = vadd.f32 %v4504, %v4536
      %v4569 = vadd.f32 %v4505, %v4537
      %v4570 = vadd.f32 %v4506, %v4538
      %v4571 = vadd.f32 %v4507, %v4539
      %v4572 = vadd.f32 %v4508, %v4540
      %v4573 = vadd.f32 %v4509, %v4541
      %v4574 = vadd.f32 %v4510, %v4542
      %v4575 = vadd.f32 %v4511, %v4543
      %v4576 = vmax.f32 %v4544, 0.0
      %v4577 = vmax.f32 %v4545, 0.0
      %v4578 = vmax.f32 %v4546, 0.0
      %v4579 = vmax.f32 %v4547, 0.0
      %v4580 = vmax.f32 %v4548, 0.0
      %v4581 = vmax.f32 %v4549, 0.0
      %v4582 = vmax.f32 %v4550, 0.0
      %v4583 = vmax.f32 %v4551, 0.0
      %v4584 = vmax.f32 %v4552, 0.0
      %v4585 = vmax.f32 %v4553, 0.0
      %v4586 = vmax.f32 %v4554, 0.0
      %v4587 = vmax.f32 %v4555, 0.0
      %v4588 = vmax.f32 %v4556, 0.0
      %v4589 = vmax.f32 %v4557, 0.0
      %v4590 = vmax.f32 %v4558, 0.0
      %v4591 = vmax.f32 %v4559, 0.0
      %v4592 = vmax.f32 %v4560, 0.0
      %v4593 = vmax.f32 %v4561, 0.0
      %v4594 = vmax.f32 %v4562, 0.0
      %v4595 = vmax.f32 %v4563, 0.0
      %v4596 = vmax.f32 %v4564, 0.0
      %v4597 = vmax.f32 %v4565, 0.0
      %v4598 = vmax.f32 %v4566, 0.0
      %v4599 = vmax.f32 %v4567, 0.0
      %v4600 = vmax.f32 %v4568, 0.0
      %v4601 = vmax.f32 %v4569, 0.0
      %v4602 = vmax.f32 %v4570, 0.0
      %v4603 = vmax.f32 %v4571, 0.0
      %v4604 = vmax.f32 %v4572, 0.0
      %v4605 = vmax.f32 %v4573, 0.0
      %v4606 = vmax.f32 %v4574, 0.0
      %v4607 = vmax.f32 %v4575, 0.0
      %4608 = vst.msk [vmem:[%s278] sm:$0xff] %vm280, %v4576
      %4609 = vst.msk [vmem:[%s278 + $0x8] sm:$0xff] %vm280, %v4577
      %4610 = vst.msk [vmem:[%s278 + $0x10] sm:$0xff] %vm280, %v4578
      %4611 = vst.msk [vmem:[%s278 + $0x18] sm:$0xff] %vm280, %v4579
      %4612 = vst.msk [vmem:[%s278 + $0x20] sm:$0xff] %vm280, %v4580
      %4613 = vst.msk [vmem:[%s278 + $0x28] sm:$0xff] %vm280, %v4581
      %4614 = vst.msk [vmem:[%s278 + $0x30] sm:$0xff] %vm280, %v4582
      %4615 = vst.msk [vmem:[%s278 + $0x38] sm:$0xff] %vm280, %v4583
      %4616 = vst.msk [vmem:[%s278 + $0x40] sm:$0xff] %vm280, %v4584
      %4617 = vst.msk [vmem:[%s278 + $0x48] sm:$0xff] %vm280, %v4585
      %4618 = vst.msk [vmem:[%s278 + $0x50] sm:$0xff] %vm280, %v4586
      %4619 = vst.msk [vmem:[%s278 + $0x58] sm:$0xff] %vm280, %v4587
      %4620 = vst.msk [vmem:[%s278 + $0x60] sm:$0xff] %vm280, %v4588
      %4621 = vst.msk [vmem:[%s278 + $0x68] sm:$0xff] %vm280, %v4589
      %4622 = vst.msk [vmem:[%s278 + $0x70] sm:$0xff] %vm280, %v4590
      %4623 = vst.msk [vmem:[%s278 + $0x78] sm:$0xff] %vm280, %v4591
      %4624 = vst.msk [vmem:[%s278 + $0x80] sm:$0xff] %vm280, %v4592
      %4625 = vst.msk [vmem:[%s278 + $0x88] sm:$0xff] %vm280, %v4593
      %4626 = vst.msk [vmem:[%s278 + $0x90] sm:$0xff] %vm280, %v4594
      %4627 = vst.msk [vmem:[%s278 + $0x98] sm:$0xff] %vm280, %v4595
      %4628 = vst.msk [vmem:[%s278 + $0xa0] sm:$0xff] %vm280, %v4596
      %4629 = vst.msk [vmem:[%s278 + $0xa8] sm:$0xff] %vm280, %v4597
      %4630 = vst.msk [vmem:[%s278 + $0xb0] sm:$0xff] %vm280, %v4598
      %4631 = vst.msk [vmem:[%s278 + $0xb8] sm:$0xff] %vm280, %v4599
      %4632 = vst.msk [vmem:[%s278 + $0xc0] sm:$0xff] %vm280, %v4600
      %4633 = vst.msk [vmem:[%s278 + $0xc8] sm:$0xff] %vm280, %v4601
      %4634 = vst.msk [vmem:[%s278 + $0xd0] sm:$0xff] %vm280, %v4602
      %4635 = vst.msk [vmem:[%s278 + $0xd8] sm:$0xff] %vm280, %v4603
      %4636 = vst.msk [vmem:[%s278 + $0xe0] sm:$0xff] %vm280, %v4604
      %4637 = vst.msk [vmem:[%s278 + $0xe8] sm:$0xff] %vm280, %v4605
      %4638 = vst.msk [vmem:[%s278 + $0xf0] sm:$0xff] %vm280, %v4606
      %4639 = vst.msk [vmem:[%s278 + $0xf8] sm:$0xff] %vm280, %v4607
      %p4640 = scmp.lt.s32.totalorder %s18, 1
      %s4641 = scalar_select %p4640, %s18, 1
      %s4642 = smul.addr %s4641, 32
      %s4643 = smul.addr %s4642, 8
      %s4644 = scalar_lea.vmem %s7, %s4643
      // Predicated region
      $region49: #{tpu_custom_call.1} parent=47 // pred_check
        %p4645 = pneg %p188
      $region50: #{tpu_custom_call.1} parent=47 // pred_check_branch
        %4647 = sbr.rel (%p4645) target = $region52
      $region51: #{tpu_custom_call.1} parent=47 // pred_region
        _
      $region52: #{tpu_custom_call.1} parent=47 // pred_fallthru
        _
    $region48: #{tpu_custom_call.1} parent=5 // pred_fallthru
      _
    %p4648 = scmp.le.s32.totalorder 2, %s13
    // Predicated region
    $region53: #{tpu_custom_call.1} parent=5 // pred_check
      %p4649 = pneg %p4648
    $region54: #{tpu_custom_call.1} parent=5 // pred_check_branch
      %4651 = sbr.rel (%p4649) target = $region56
    $region55: #{tpu_custom_call.1} parent=5 // pred_region
      %s4652 = ssub.s32 %s13, 2
      // Predicated region
      $region57: #{tpu_custom_call.1} parent=55 // pred_check
        %p4653 = pneg %p194
      $region58: #{tpu_custom_call.1} parent=55 // pred_check_branch
        %4655 = sbr.rel (%p4653) target = $region60
      $region59: #{tpu_custom_call.1} parent=55 // pred_region
        %p4656 = scmp.lt.s32.totalorder %s19, 1
        %s4657 = scalar_select %p4656, %s19, 1
        %s4658 = smul.addr %s4657, 32
        %s4659 = smul.addr %s4658, 8
        %s4660 = scalar_lea.vmem %s7, %s4659
      $region60: #{tpu_custom_call.1} parent=55 // pred_fallthru
        _
    $region56: #{tpu_custom_call.1} parent=5 // pred_fallthru
      _
  $region6: #{tpu_custom_call.1} parent=0 // loop_footer
    %s17 = sadd.s32 1, %s13
  $region7: #{tpu_custom_call.1} parent=0 // loop_footer_branch
    %12 = sbr.rel target = $region3
  $region8: #{tpu_custom_call.1} parent=0 // loop_exit
    _

</llo_original>
